<compile_context>
chip_gen: v7x
topology: tpu7x:2x2x1
jax: 0.10.0
libtpu: 0.0.40
codegen_flags: <defaults>
</compile_context>

<pallas_src>
import functools

import jax
import jax.numpy as jnp
from jax import lax
from jax.experimental import pallas as pl
from jax.experimental.pallas import tpu as pltpu


# --------------------------------------------------------------------------
# Fused, batched CBAM channel-attention kernel
# --------------------------------------------------------------------------
#
# Grid = (pairs, N tiles, HW steps).  When the whole HW axis fits in one tile
# the HW axis has a single step (pool + attend + multiply on the resident
# block).  Otherwise it runs 2*hw_tiles steps: a pooling sweep over HW
# followed by an application sweep; x tiles are re-fetched by the pipeline for
# the second sweep and output tiles are written only during it.


def _cbam_pair_kernel(x_ref, w1t_ref, w2t_ref, o_ref,
                      sum_acc, max_acc, att_acc, *,
                      hw_total, hw_tile, lane_w, hw_tiles, n_tile, strip_c):
    """One grid step for one (pair, N-tile) window.

    x_ref   : (2, n_tile, C, hw_tile)   activation tile, both subbands of pair
    w1t_ref : (2, C, Cr)                fc1 weights, pre-transposed
    w2t_ref : (2, Cr, C)                fc2 weights, pre-transposed
    o_ref   : (2, n_tile, C, hw_tile)   x * (partner's channel attention)
    sum_acc : (2, n_tile, C, lane_w)    running sum        (VMEM, f32)
    max_acc : (2, n_tile, C, lane_w)    running max        (VMEM, f32)
    att_acc : (2, n_tile, C, lane_w)    partner attention, lane-broadcast (f32)
    """
    t = pl.program_id(2)
    c = x_ref.shape[2]
    n_chunks = hw_tile // lane_w          # exact by construction
    single_sweep = hw_tiles == 1

    # Chunks that may overhang the logical end of HW (only possible on the
    # last HW tile).  Masking is applied only to these static chunk indices.
    last_tile_base = (hw_tiles - 1) * hw_tile
    oob_chunks = tuple(j for j in range(n_chunks)
                       if last_tile_base + (j + 1) * lane_w > hw_total)
    lane = lax.broadcasted_iota(jnp.int32, (1, lane_w), 1)

    def _init():
        sum_acc[...] = jnp.zeros_like(sum_acc)
        max_acc[...] = jnp.full_like(max_acc, -jnp.inf)

    def _accumulate(hw_id):
        # Strip-mined over (subband, n, C-strip): only one strip's running
        # sum/max plus one x chunk is register-resident; the scratch
        # accumulators are read/written once per strip per grid step.
        base = hw_id * hw_tile
        for a in range(2):
            for n in range(n_tile):
                for c0 in range(0, c, strip_c):
                    cs = slice(c0, c0 + strip_c)
                    s = sum_acc[a, n, cs, :]
                    m = max_acc[a, n, cs, :]
                    for j in range(n_chunks):
                        chunk = x_ref[a, n, cs,
                                      pl.ds(j * lane_w, lane_w)
                                      ].astype(jnp.float32)
                        if j in oob_chunks:
                            valid = (base + j * lane_w + lane) < hw_total
                            s = s + jnp.where(valid, chunk, 0.0)
                            m = jnp.maximum(m, jnp.where(valid, chunk,
                                                         -jnp.inf))
                        else:
                            s = s + chunk
                            m = jnp.maximum(m, chunk)
                    sum_acc[a, n, cs, :] = s
                    max_acc[a, n, cs, :] = m

    def _finalize():
        # One cross-lane reduce + tiny MLP + sigmoid, once per window.
        inv_hw = jnp.float32(1.0 / hw_total)
        for a in range(2):
            avg_p = jnp.sum(sum_acc[a], axis=-1) * inv_hw     # (n_tile, C)
            max_p = jnp.max(max_acc[a], axis=-1)              # (n_tile, C)
            w1t = w1t_ref[a].astype(jnp.float32)              # (C, Cr)
            w2t = w2t_ref[a].astype(jnp.float32)              # (Cr, C)

            def mlp(p):
                h = jnp.dot(p, w1t, preferred_element_type=jnp.float32)
                return jnp.dot(jnp.maximum(h, 0.0), w2t,
                               preferred_element_type=jnp.float32)

            att = jax.nn.sigmoid(mlp(avg_p) + mlp(max_p))     # (n_tile, C)
            # CBAM applies a subband's attention to its PARTNER: store swapped
            # and lane-broadcast once here (never in the apply hot loop).
            att_acc[1 - a] = jnp.broadcast_to(att[:, :, None],
                                              (n_tile, c, lane_w))

    def _apply():
        # Multiply the resident x tile by the partner attention, write out.
        for a in range(2):
            for n in range(n_tile):
                for c0 in range(0, c, strip_c):
                    cs = slice(c0, c0 + strip_c)
                    att = att_acc[a, n, cs, :]                # (strip_c, lane_w)
                    for j in range(n_chunks):
                        sl = pl.ds(j * lane_w, lane_w)
                        chunk = x_ref[a, n, cs, sl].astype(jnp.float32)
                        o_ref[a, n, cs, sl] = (chunk * att).astype(o_ref.dtype)

    if single_sweep:
        # Whole HW axis resident: pool, attend and apply in a single pass.
        _init()
        _accumulate(0)
        _finalize()
        _apply()
    else:
        is_pool = t < hw_tiles

        @pl.when(is_pool)
        def _pool_phase():
            @pl.when(t == 0)
            def _():
                _init()

            _accumulate(t)

            @pl.when(t == hw_tiles - 1)
            def _():
                _finalize()

        @pl.when(jnp.logical_not(is_pool))
        def _apply_phase():
            _apply()


def _choose_tiles(n, c, hw, itemsize, max_block_bytes):
    """N tile <= 8; HW tile = full axis if small, else a multiple of 128 sized
    against the per-block budget (2 MiB+ keeps >=85% of HBM roofline)."""
    n_tile = min(n, 8)
    bytes_per_lane = 2 * n_tile * c * itemsize
    max_lanes = max(max_block_bytes // bytes_per_lane, 128)
    if hw <= 128:
        hw_tile = hw                              # full axis; no alignment needed
    else:
        hw_pad = ((hw + 127) // 128) * 128
        hw_tile = int(min(hw_pad, (max_lanes // 128) * 128))
    lane_w = min(hw_tile, 128)
    strip_c = next((s for s in (32, 16, 8) if c % s == 0), c)
    return n_tile, hw_tile, lane_w, strip_c


@functools.partial(jax.jit, static_argnames=("max_block_bytes",))
def fused_cbam_pairs(x_stack, w1_stack, w2_stack,
                     max_block_bytes=4 * 1024 * 1024):
    """Batched, fused CBAM channel attention for subband pairs.

    x_stack  : (S, N, C, H, W), S = 2 * n_pairs; subbands (2k, 2k+1) are pair k
    w1_stack : (S, Cr, C)  == fc1.weight[:, :, 0, 0] per subband
    w2_stack : (S, C, Cr)  == fc2.weight[:, :, 0, 0] per subband
    returns  : (S, N, C, H, W) with
               out[2k]   = x[2k]   * att(x[2k+1]; w[2k+1])
               out[2k+1] = x[2k+1] * att(x[2k];   w[2k])
    """
    s, n, c, h, w = x_stack.shape
    assert s % 2 == 0, "subbands must come in pairs"
    n_pairs = s // 2
    cr = w1_stack.shape[1]
    hw = h * w
    x_flat = x_stack.reshape(s, n, c, hw)

    # Pre-transpose the tiny weights in the wrapper (no XLU transpose in-kernel).
    w1t = jnp.swapaxes(w1_stack, 1, 2)             # (S, C, Cr)
    w2t = jnp.swapaxes(w2_stack, 1, 2)             # (S, Cr, C)

    itemsize = x_stack.dtype.itemsize
    n_tile, hw_tile, lane_w, strip_c = _choose_tiles(
        n, c, hw, itemsize, max_block_bytes)
    hw_tiles = pl.cdiv(hw, hw_tile)
    hw_steps = 1 if hw_tiles == 1 else 2 * hw_tiles
    grid = (n_pairs, pl.cdiv(n, n_tile), hw_steps)

    kernel = functools.partial(
        _cbam_pair_kernel, hw_total=hw, hw_tile=hw_tile, lane_w=lane_w,
        hw_tiles=hw_tiles, n_tile=n_tile, strip_c=strip_c)

    sweeps = 1 if hw_tiles == 1 else 2
    x_bytes = x_flat.size * itemsize
    cost = pl.CostEstimate(
        flops=3 * x_flat.size + 8 * s * n * c * cr,
        transcendentals=s * n * c,
        bytes_accessed=(sweeps + 1) * x_bytes
        + (w1_stack.size + w2_stack.size) * w1_stack.dtype.itemsize)

    # Double-buffered x + out blocks, weights, 3 f32 scratch accumulators.
    block_bytes = 2 * n_tile * c * hw_tile * itemsize
    scratch_bytes = 3 * 2 * n_tile * c * max(lane_w, 128) * 4
    need = 4 * block_bytes + scratch_bytes + (2 << 20)
    vmem_limit = int(min(max(need, 32 << 20), 48 << 20))

    out = pl.pallas_call(
        kernel,
        grid=grid,
        in_specs=[
            pl.BlockSpec((2, n_tile, c, hw_tile),
                         lambda p, ni, t: (p, ni, 0, t % hw_tiles)),
            pl.BlockSpec((2, c, cr), lambda p, ni, t: (p, 0, 0)),
            pl.BlockSpec((2, cr, c), lambda p, ni, t: (p, 0, 0)),
        ],
        out_specs=pl.BlockSpec(
            (2, n_tile, c, hw_tile),
            lambda p, ni, t: (p, ni, 0, jnp.maximum(t - hw_tiles, 0))),
        out_shape=jax.ShapeDtypeStruct((s, n, c, hw), x_stack.dtype),
        scratch_shapes=[
            pltpu.VMEM((2, n_tile, c, lane_w), jnp.float32),   # running sum
            pltpu.VMEM((2, n_tile, c, lane_w), jnp.float32),   # running max
            pltpu.VMEM((2, n_tile, c, lane_w), jnp.float32),   # partner attention
        ],
        compiler_params=pltpu.CompilerParams(
            dimension_semantics=("parallel", "parallel", "arbitrary"),
            vmem_limit_bytes=vmem_limit,
        ),
        cost_estimate=cost,
    )(x_flat, w1t, w2t)

    return out.reshape(s, n, c, h, w)


# --------------------------- pure-JAX reference -----------------------------


def _reference_channel_attention(x_nchw, w1, w2):
    avg_p = jnp.mean(x_nchw, axis=(2, 3))
    max_p = jnp.max(x_nchw, axis=(2, 3))

    def mlp(p):
        return jnp.maximum(p @ w1.T, 0.0) @ w2.T

    att = jax.nn.sigmoid(mlp(avg_p) + mlp(max_p))
    return att[:, :, None, None].astype(x_nchw.dtype)


def fused_cbam_pairs_reference(x_stack, w1_stack, w2_stack):
    outs = []
    for k in range(0, x_stack.shape[0], 2):
        a, b = x_stack[k], x_stack[k + 1]
        att_a = _reference_channel_attention(a, w1_stack[k], w2_stack[k])
        att_b = _reference_channel_attention(b, w1_stack[k + 1], w2_stack[k + 1])
        outs.append(a * att_b)
        outs.append(b * att_a)
    return jnp.stack(outs, axis=0)


# --------------------- Haar DWT / IDWT + full forward -----------------------


def haar_dwt2(x):
    """Level-1 orthonormal Haar DWT (mode='zero'; H, W even)."""
    x00 = x[:, :, 0::2, 0::2]
    x01 = x[:, :, 0::2, 1::2]
    x10 = x[:, :, 1::2, 0::2]
    x11 = x[:, :, 1::2, 1::2]
    ll = (x00 + x01 + x10 + x11) * 0.5
    lh = (x10 + x11 - x00 - x01) * 0.5
    hl = (x01 + x11 - x00 - x10) * 0.5
    hh = (x00 - x01 - x10 + x11) * 0.5
    return ll, lh, hl, hh


def haar_idwt2(ll, lh, hl, hh):
    """Exact inverse of haar_dwt2."""
    x00 = (ll - lh - hl + hh) * 0.5
    x01 = (ll - lh + hl - hh) * 0.5
    x10 = (ll + lh - hl - hh) * 0.5
    x11 = (ll + lh + hl + hh) * 0.5
    n, c, h2, w2 = ll.shape
    out = jnp.zeros((n, c, 2 * h2, 2 * w2), ll.dtype)
    out = out.at[:, :, 0::2, 0::2].set(x00)
    out = out.at[:, :, 0::2, 1::2].set(x01)
    out = out.at[:, :, 1::2, 0::2].set(x10)
    out = out.at[:, :, 1::2, 1::2].set(x11)
    return out


_PAIR_NAMES = ("trans_LL_HH", "trans_HH_LL", "trans_LH_HL", "trans_HL_LH")


def _stack_cbam_weights(params):
    w1 = jnp.stack([params[nm][k] for nm in _PAIR_NAMES
                    for k in ("ca1_w1", "ca2_w1")], axis=0)   # (8, Cr, C)
    w2 = jnp.stack([params[nm][k] for nm in _PAIR_NAMES
                    for k in ("ca1_w2", "ca2_w2")], axis=0)   # (8, C, Cr)
    return w1, w2


def _dwt_forward(x_vis, x_ir, params, cbam_pairs_fn):
    """JAX port of DWTTransformerattentionlayer.forward (Haar, J=1).
    # TODO(synk): subband sign/order follows an orthonormal, self-consistent
    # Haar DWT/IDWT pair; pytorch_wavelets' filter-flip convention may differ
    # in subband signs."""
    ll_v, lh_v, hl_v, hh_v = haar_dwt2(x_vis)
    ll_i, lh_i, hl_i, hh_i = haar_dwt2(x_ir)
    # adjust_shape() in the reference is a no-op for equal even-sized inputs.
    x_stack = jnp.stack(
        (ll_v, hh_i, hh_v, ll_i, lh_v, hl_i, hl_v, lh_i), axis=0)
    w1_stack, w2_stack = _stack_cbam_weights(params)

    y_stack = cbam_pairs_fn(x_stack, w1_stack, w2_stack)
    y_stack = y_stack + x_stack                   # residual connections

    ll_v, hh_i, hh_v, ll_i, lh_v, hl_i, hl_v, lh_i = (
        y_stack[i] for i in range(8))
    feat_vis = haar_idwt2(ll_v, lh_v, hl_v, hh_v)
    feat_ir = haar_idwt2(ll_i, lh_i, hl_i, hh_i)
    return (feat_vis + feat_ir) * 0.5 + (x_vis + x_ir) * 0.5


@jax.jit
def dwt_transformer_attention_forward(x_vis, x_ir, params):
    return _dwt_forward(x_vis, x_ir, params, fused_cbam_pairs)


@jax.jit
def dwt_transformer_attention_reference(x_vis, x_ir, params):
    return _dwt_forward(x_vis, x_ir, params, fused_cbam_pairs_reference)


def init_params(key, channels, reduction=16):
    cr = channels // reduction
    b1 = 1.0 / (channels ** 0.5)
    b2 = 1.0 / (cr ** 0.5)
    params = {}
    for name in _PAIR_NAMES:
        key, k1, k2, k3, k4 = jax.random.split(key, 5)
        params[name] = {
            "ca1_w1": jax.random.uniform(k1, (cr, channels), jnp.float32, -b1, b1),
            "ca1_w2": jax.random.uniform(k2, (channels, cr), jnp.float32, -b2, b2),
            "ca2_w1": jax.random.uniform(k3, (cr, channels), jnp.float32, -b1, b1),
            "ca2_w2": jax.random.uniform(k4, (channels, cr), jnp.float32, -b2, b2),
        }
    return params


if __name__ == "__main__":
    key = jax.random.PRNGKey(0)
    k_vis, k_ir, k_par, k_t2 = jax.random.split(key, 4)

    # ---- 1) full DWTTransformerattentionlayer forward (Pallas vs reference) -
    N, C, H, W = 2, 64, 16, 16
    reduction = 16
    x_vis = jax.random.normal(k_vis, (N, C, H, W), dtype=jnp.float32)
    x_ir = jax.random.normal(k_ir, (N, C, H, W), dtype=jnp.float32)
    params = init_params(k_par, C, reduction)

    y = jax.block_until_ready(
        dwt_transformer_attention_forward(x_vis, x_ir, params))
    y_ref = jax.block_until_ready(
        dwt_transformer_attention_reference(x_vis, x_ir, params))
    assert y.shape == x_vis.shape, y.shape
    assert jnp.allclose(y, y_ref, atol=1e-4, rtol=1e-4), \
        float(jnp.max(jnp.abs(y - y_ref)))

    # ---- 2) standalone fused CBAM: ragged HW + two-sweep multi-tile path ----
    C2, Cr2 = 32, 2
    xs = jax.random.normal(k_t2, (2, 2, C2, 10, 20), dtype=jnp.float32)  # HW=200
    kw1, kw2 = jax.random.split(jax.random.fold_in(k_t2, 1))
    w1s = jax.random.uniform(kw1, (2, Cr2, C2), jnp.float32, -0.2, 0.2)
    w2s = jax.random.uniform(kw2, (2, C2, Cr2), jnp.float32, -0.5, 0.5)
    out2 = jax.block_until_ready(
        fused_cbam_pairs(xs, w1s, w2s, max_block_bytes=64 * 1024))
    ref2 = fused_cbam_pairs_reference(xs, w1s, w2s)
    assert out2.shape == xs.shape, out2.shape
    assert jnp.allclose(out2, ref2, atol=1e-4, rtol=1e-4), \
        float(jnp.max(jnp.abs(out2 - ref2)))

    print("KERNEL_OK")
</pallas_src>

<mosaic_0001>
module attributes {stable_mosaic.version = 11 : i64} {
  func.func @_cbam_pair_kernel(%arg0: i32, %arg1: i32, %arg2: i32, %arg3: memref<2x2x64x64xf32, #tpu.memory_space<vmem>>, %arg4: memref<2x64x4xf32, #tpu.memory_space<vmem>>, %arg5: memref<2x4x64xf32, #tpu.memory_space<vmem>>, %arg6: memref<2x2x64x64xf32, #tpu.memory_space<vmem>>, %arg7: memref<2x2x64x64xf32, #tpu.memory_space<vmem>>, %arg8: memref<2x2x64x64xf32, #tpu.memory_space<vmem>>, %arg9: memref<2x2x64x64xf32, #tpu.memory_space<vmem>>) attributes {dimension_semantics = [#tpu.dimension_semantics<parallel>, #tpu.dimension_semantics<parallel>, #tpu.dimension_semantics<arbitrary>], iteration_bounds = array<i64: 4, 1, 1>, scalar_prefetch = 0 : i64, scratch_operands = 3 : i64, tpu.core_type = #tpu.core_type<tc>, window_params = [{transform_indices = @transform_0, window_bounds = array<i64: 2, 2, 64, 64>}, {transform_indices = @transform_1, window_bounds = array<i64: 2, 64, 4>}, {transform_indices = @transform_2, window_bounds = array<i64: 2, 4, 64>}, {transform_indices = @transform_3, window_bounds = array<i64: 2, 2, 64, 64>}]} {
    %cst = arith.constant 0.000000e+00 : f32
    %0 = vector.broadcast %cst : f32 to vector<2x2x64x64xf32>
    %c0 = arith.constant 0 : index
    %c0_0 = arith.constant 0 : index
    %c0_1 = arith.constant 0 : index
    %c0_2 = arith.constant 0 : index
    %1 = vector.load %arg7[%c0, %c0_0, %c0_1, %c0_2] : memref<2x2x64x64xf32, #tpu.memory_space<vmem>>, vector<2x2x64x64xf32>
    tpu.vector_store %arg7[%c0, %c0_0, %c0_1, %c0_2], %0 {strides = array<i32>} : memref<2x2x64x64xf32, #tpu.memory_space<vmem>>, vector<2x2x64x64xf32>,
    %cst_3 = arith.constant 0xFF800000 : f32
    %2 = vector.broadcast %cst_3 : f32 to vector<2x2x64x64xf32>
    %c0_4 = arith.constant 0 : index
    %c0_5 = arith.constant 0 : index
    %c0_6 = arith.constant 0 : index
    %c0_7 = arith.constant 0 : index
    %3 = vector.load %arg8[%c0_4, %c0_5, %c0_6, %c0_7] : memref<2x2x64x64xf32, #tpu.memory_space<vmem>>, vector<2x2x64x64xf32>
    tpu.vector_store %arg8[%c0_4, %c0_5, %c0_6, %c0_7], %2 {strides = array<i32>} : memref<2x2x64x64xf32, #tpu.memory_space<vmem>>, vector<2x2x64x64xf32>,
    %c0_8 = arith.constant 0 : index
    %c0_9 = arith.constant 0 : index
    %c0_10 = arith.constant 0 : index
    %c0_11 = arith.constant 0 : index
    %4 = vector.load %arg7[%c0_8, %c0_9, %c0_10, %c0_11] : memref<2x2x64x64xf32, #tpu.memory_space<vmem>>, vector<1x1x32x64xf32>
    %5 = vector.shape_cast %4 : vector<1x1x32x64xf32> to vector<32x64xf32>
    %c0_12 = arith.constant 0 : index
    %c0_13 = arith.constant 0 : index
    %c0_14 = arith.constant 0 : index
    %c0_15 = arith.constant 0 : index
    %6 = vector.load %arg8[%c0_12, %c0_13, %c0_14, %c0_15] : memref<2x2x64x64xf32, #tpu.memory_space<vmem>>, vector<1x1x32x64xf32>
    %7 = vector.shape_cast %6 : vector<1x1x32x64xf32> to vector<32x64xf32>
    %c0_16 = arith.constant 0 : index
    %c0_17 = arith.constant 0 : index
    %c0_18 = arith.constant 0 : index
    %c0_19 = arith.constant 0 : index
    %8 = vector.load %arg3[%c0_16, %c0_17, %c0_18, %c0_19] : memref<2x2x64x64xf32, #tpu.memory_space<vmem>>, vector<1x1x32x64xf32>
    %9 = vector.shape_cast %8 : vector<1x1x32x64xf32> to vector<32x64xf32>
    %10 = arith.addf %5, %9 : vector<32x64xf32>
    %11 = arith.maximumf %7, %9 : vector<32x64xf32>
    %c0_20 = arith.constant 0 : index
    %c0_21 = arith.constant 0 : index
    %c0_22 = arith.constant 0 : index
    %c0_23 = arith.constant 0 : index
    %12 = vector.load %arg7[%c0_20, %c0_21, %c0_22, %c0_23] : memref<2x2x64x64xf32, #tpu.memory_space<vmem>>, vector<1x1x32x64xf32>
    %13 = vector.shape_cast %12 : vector<1x1x32x64xf32> to vector<32x64xf32>
    %14 = vector.shape_cast %10 : vector<32x64xf32> to vector<1x1x32x64xf32>
    tpu.vector_store %arg7[%c0_20, %c0_21, %c0_22, %c0_23], %14 {strides = array<i32>} : memref<2x2x64x64xf32, #tpu.memory_space<vmem>>, vector<1x1x32x64xf32>,
    %c0_24 = arith.constant 0 : index
    %c0_25 = arith.constant 0 : index
    %c0_26 = arith.constant 0 : index
    %c0_27 = arith.constant 0 : index
    %15 = vector.load %arg8[%c0_24, %c0_25, %c0_26, %c0_27] : memref<2x2x64x64xf32, #tpu.memory_space<vmem>>, vector<1x1x32x64xf32>
    %16 = vector.shape_cast %15 : vector<1x1x32x64xf32> to vector<32x64xf32>
    %17 = vector.shape_cast %11 : vector<32x64xf32> to vector<1x1x32x64xf32>
    tpu.vector_store %arg8[%c0_24, %c0_25, %c0_26, %c0_27], %17 {strides = array<i32>} : memref<2x2x64x64xf32, #tpu.memory_space<vmem>>, vector<1x1x32x64xf32>,
    %c0_28 = arith.constant 0 : index
    %c0_29 = arith.constant 0 : index
    %c32 = arith.constant 32 : index
    %c0_30 = arith.constant 0 : index
    %18 = vector.load %arg7[%c0_28, %c0_29, %c32, %c0_30] : memref<2x2x64x64xf32, #tpu.memory_space<vmem>>, vector<1x1x32x64xf32>
    %19 = vector.shape_cast %18 : vector<1x1x32x64xf32> to vector<32x64xf32>
    %c0_31 = arith.constant 0 : index
    %c0_32 = arith.constant 0 : index
    %c32_33 = arith.constant 32 : index
    %c0_34 = arith.constant 0 : index
    %20 = vector.load %arg8[%c0_31, %c0_32, %c32_33, %c0_34] : memref<2x2x64x64xf32, #tpu.memory_space<vmem>>, vector<1x1x32x64xf32>
    %21 = vector.shape_cast %20 : vector<1x1x32x64xf32> to vector<32x64xf32>
    %c0_35 = arith.constant 0 : index
    %c0_36 = arith.constant 0 : index
    %c32_37 = arith.constant 32 : index
    %c0_38 = arith.constant 0 : index
    %22 = vector.load %arg3[%c0_35, %c0_36, %c32_37, %c0_38] : memref<2x2x64x64xf32, #tpu.memory_space<vmem>>, vector<1x1x32x64xf32>
    %23 = vector.shape_cast %22 : vector<1x1x32x64xf32> to vector<32x64xf32>
    %24 = arith.addf %19, %23 : vector<32x64xf32>
    %25 = arith.maximumf %21, %23 : vector<32x64xf32>
    %c0_39 = arith.constant 0 : index
    %c0_40 = arith.constant 0 : index
    %c32_41 = arith.constant 32 : index
    %c0_42 = arith.constant 0 : index
    %26 = vector.load %arg7[%c0_39, %c0_40, %c32_41, %c0_42] : memref<2x2x64x64xf32, #tpu.memory_space<vmem>>, vector<1x1x32x64xf32>
    %27 = vector.shape_cast %26 : vector<1x1x32x64xf32> to vector<32x64xf32>
    %28 = vector.shape_cast %24 : vector<32x64xf32> to vector<1x1x32x64xf32>
    tpu.vector_store %arg7[%c0_39, %c0_40, %c32_41, %c0_42], %28 {strides = array<i32>} : memref<2x2x64x64xf32, #tpu.memory_space<vmem>>, vector<1x1x32x64xf32>,
    %c0_43 = arith.constant 0 : index
    %c0_44 = arith.constant 0 : index
    %c32_45 = arith.constant 32 : index
    %c0_46 = arith.constant 0 : index
    %29 = vector.load %arg8[%c0_43, %c0_44, %c32_45, %c0_46] : memref<2x2x64x64xf32, #tpu.memory_space<vmem>>, vector<1x1x32x64xf32>
    %30 = vector.shape_cast %29 : vector<1x1x32x64xf32> to vector<32x64xf32>
    %31 = vector.shape_cast %25 : vector<32x64xf32> to vector<1x1x32x64xf32>
    tpu.vector_store %arg8[%c0_43, %c0_44, %c32_45, %c0_46], %31 {strides = array<i32>} : memref<2x2x64x64xf32, #tpu.memory_space<vmem>>, vector<1x1x32x64xf32>,
    %c0_47 = arith.constant 0 : index
    %c1 = arith.constant 1 : index
    %c0_48 = arith.constant 0 : index
    %c0_49 = arith.constant 0 : index
    %32 = vector.load %arg7[%c0_47, %c1, %c0_48, %c0_49] : memref<2x2x64x64xf32, #tpu.memory_space<vmem>>, vector<1x1x32x64xf32>
    %33 = vector.shape_cast %32 : vector<1x1x32x64xf32> to vector<32x64xf32>
    %c0_50 = arith.constant 0 : index
    %c1_51 = arith.constant 1 : index
    %c0_52 = arith.constant 0 : index
    %c0_53 = arith.constant 0 : index
    %34 = vector.load %arg8[%c0_50, %c1_51, %c0_52, %c0_53] : memref<2x2x64x64xf32, #tpu.memory_space<vmem>>, vector<1x1x32x64xf32>
    %35 = vector.shape_cast %34 : vector<1x1x32x64xf32> to vector<32x64xf32>
    %c0_54 = arith.constant 0 : index
    %c1_55 = arith.constant 1 : index
    %c0_56 = arith.constant 0 : index
    %c0_57 = arith.constant 0 : index
    %36 = vector.load %arg3[%c0_54, %c1_55, %c0_56, %c0_57] : memref<2x2x64x64xf32, #tpu.memory_space<vmem>>, vector<1x1x32x64xf32>
    %37 = vector.shape_cast %36 : vector<1x1x32x64xf32> to vector<32x64xf32>
    %38 = arith.addf %33, %37 : vector<32x64xf32>
    %39 = arith.maximumf %35, %37 : vector<32x64xf32>
    %c0_58 = arith.constant 0 : index
    %c1_59 = arith.constant 1 : index
    %c0_60 = arith.constant 0 : index
    %c0_61 = arith.constant 0 : index
    %40 = vector.load %arg7[%c0_58, %c1_59, %c0_60, %c0_61] : memref<2x2x64x64xf32, #tpu.memory_space<vmem>>, vector<1x1x32x64xf32>
    %41 = vector.shape_cast %40 : vector<1x1x32x64xf32> to vector<32x64xf32>
    %42 = vector.shape_cast %38 : vector<32x64xf32> to vector<1x1x32x64xf32>
    tpu.vector_store %arg7[%c0_58, %c1_59, %c0_60, %c0_61], %42 {strides = array<i32>} : memref<2x2x64x64xf32, #tpu.memory_space<vmem>>, vector<1x1x32x64xf32>,
    %c0_62 = arith.constant 0 : index
    %c1_63 = arith.constant 1 : index
    %c0_64 = arith.constant 0 : index
    %c0_65 = arith.constant 0 : index
    %43 = vector.load %arg8[%c0_62, %c1_63, %c0_64, %c0_65] : memref<2x2x64x64xf32, #tpu.memory_space<vmem>>, vector<1x1x32x64xf32>
    %44 = vector.shape_cast %43 : vector<1x1x32x64xf32> to vector<32x64xf32>
    %45 = vector.shape_cast %39 : vector<32x64xf32> to vector<1x1x32x64xf32>
    tpu.vector_store %arg8[%c0_62, %c1_63, %c0_64, %c0_65], %45 {strides = array<i32>} : memref<2x2x64x64xf32, #tpu.memory_space<vmem>>, vector<1x1x32x64xf32>,
    %c0_66 = arith.constant 0 : index
    %c1_67 = arith.constant 1 : index
    %c32_68 = arith.constant 32 : index
    %c0_69 = arith.constant 0 : index
    %46 = vector.load %arg7[%c0_66, %c1_67, %c32_68, %c0_69] : memref<2x2x64x64xf32, #tpu.memory_space<vmem>>, vector<1x1x32x64xf32>
    %47 = vector.shape_cast %46 : vector<1x1x32x64xf32> to vector<32x64xf32>
    %c0_70 = arith.constant 0 : index
    %c1_71 = arith.constant 1 : index
    %c32_72 = arith.constant 32 : index
    %c0_73 = arith.constant 0 : index
    %48 = vector.load %arg8[%c0_70, %c1_71, %c32_72, %c0_73] : memref<2x2x64x64xf32, #tpu.memory_space<vmem>>, vector<1x1x32x64xf32>
    %49 = vector.shape_cast %48 : vector<1x1x32x64xf32> to vector<32x64xf32>
    %c0_74 = arith.constant 0 : index
    %c1_75 = arith.constant 1 : index
    %c32_76 = arith.constant 32 : index
    %c0_77 = arith.constant 0 : index
    %50 = vector.load %arg3[%c0_74, %c1_75, %c32_76, %c0_77] : memref<2x2x64x64xf32, #tpu.memory_space<vmem>>, vector<1x1x32x64xf32>
    %51 = vector.shape_cast %50 : vector<1x1x32x64xf32> to vector<32x64xf32>
    %52 = arith.addf %47, %51 : vector<32x64xf32>
    %53 = arith.maximumf %49, %51 : vector<32x64xf32>
    %c0_78 = arith.constant 0 : index
    %c1_79 = arith.constant 1 : index
    %c32_80 = arith.constant 32 : index
    %c0_81 = arith.constant 0 : index
    %54 = vector.load %arg7[%c0_78, %c1_79, %c32_80, %c0_81] : memref<2x2x64x64xf32, #tpu.memory_space<vmem>>, vector<1x1x32x64xf32>
    %55 = vector.shape_cast %54 : vector<1x1x32x64xf32> to vector<32x64xf32>
    %56 = vector.shape_cast %52 : vector<32x64xf32> to vector<1x1x32x64xf32>
    tpu.vector_store %arg7[%c0_78, %c1_79, %c32_80, %c0_81], %56 {strides = array<i32>} : memref<2x2x64x64xf32, #tpu.memory_space<vmem>>, vector<1x1x32x64xf32>,
    %c0_82 = arith.constant 0 : index
    %c1_83 = arith.constant 1 : index
    %c32_84 = arith.constant 32 : index
    %c0_85 = arith.constant 0 : index
    %57 = vector.load %arg8[%c0_82, %c1_83, %c32_84, %c0_85] : memref<2x2x64x64xf32, #tpu.memory_space<vmem>>, vector<1x1x32x64xf32>
    %58 = vector.shape_cast %57 : vector<1x1x32x64xf32> to vector<32x64xf32>
    %59 = vector.shape_cast %53 : vector<32x64xf32> to vector<1x1x32x64xf32>
    tpu.vector_store %arg8[%c0_82, %c1_83, %c32_84, %c0_85], %59 {strides = array<i32>} : memref<2x2x64x64xf32, #tpu.memory_space<vmem>>, vector<1x1x32x64xf32>,
    %c1_86 = arith.constant 1 : index
    %c0_87 = arith.constant 0 : index
    %c0_88 = arith.constant 0 : index
    %c0_89 = arith.constant 0 : index
    %60 = vector.load %arg7[%c1_86, %c0_87, %c0_88, %c0_89] : memref<2x2x64x64xf32, #tpu.memory_space<vmem>>, vector<1x1x32x64xf32>
    %61 = vector.shape_cast %60 : vector<1x1x32x64xf32> to vector<32x64xf32>
    %c1_90 = arith.constant 1 : index
    %c0_91 = arith.constant 0 : index
    %c0_92 = arith.constant 0 : index
    %c0_93 = arith.constant 0 : index
    %62 = vector.load %arg8[%c1_90, %c0_91, %c0_92, %c0_93] : memref<2x2x64x64xf32, #tpu.memory_space<vmem>>, vector<1x1x32x64xf32>
    %63 = vector.shape_cast %62 : vector<1x1x32x64xf32> to vector<32x64xf32>
    %c1_94 = arith.constant 1 : index
    %c0_95 = arith.constant 0 : index
    %c0_96 = arith.constant 0 : index
    %c0_97 = arith.constant 0 : index
    %64 = vector.load %arg3[%c1_94, %c0_95, %c0_96, %c0_97] : memref<2x2x64x64xf32, #tpu.memory_space<vmem>>, vector<1x1x32x64xf32>
    %65 = vector.shape_cast %64 : vector<1x1x32x64xf32> to vector<32x64xf32>
    %66 = arith.addf %61, %65 : vector<32x64xf32>
    %67 = arith.maximumf %63, %65 : vector<32x64xf32>
    %c1_98 = arith.constant 1 : index
    %c0_99 = arith.constant 0 : index
    %c0_100 = arith.constant 0 : index
    %c0_101 = arith.constant 0 : index
    %68 = vector.load %arg7[%c1_98, %c0_99, %c0_100, %c0_101] : memref<2x2x64x64xf32, #tpu.memory_space<vmem>>, vector<1x1x32x64xf32>
    %69 = vector.shape_cast %68 : vector<1x1x32x64xf32> to vector<32x64xf32>
    %70 = vector.shape_cast %66 : vector<32x64xf32> to vector<1x1x32x64xf32>
    tpu.vector_store %arg7[%c1_98, %c0_99, %c0_100, %c0_101], %70 {strides = array<i32>} : memref<2x2x64x64xf32, #tpu.memory_space<vmem>>, vector<1x1x32x64xf32>,
    %c1_102 = arith.constant 1 : index
    %c0_103 = arith.constant 0 : index
    %c0_104 = arith.constant 0 : index
    %c0_105 = arith.constant 0 : index
    %71 = vector.load %arg8[%c1_102, %c0_103, %c0_104, %c0_105] : memref<2x2x64x64xf32, #tpu.memory_space<vmem>>, vector<1x1x32x64xf32>
    %72 = vector.shape_cast %71 : vector<1x1x32x64xf32> to vector<32x64xf32>
    %73 = vector.shape_cast %67 : vector<32x64xf32> to vector<1x1x32x64xf32>
    tpu.vector_store %arg8[%c1_102, %c0_103, %c0_104, %c0_105], %73 {strides = array<i32>} : memref<2x2x64x64xf32, #tpu.memory_space<vmem>>, vector<1x1x32x64xf32>,
    %c1_106 = arith.constant 1 : index
    %c0_107 = arith.constant 0 : index
    %c32_108 = arith.constant 32 : index
    %c0_109 = arith.constant 0 : index
    %74 = vector.load %arg7[%c1_106, %c0_107, %c32_108, %c0_109] : memref<2x2x64x64xf32, #tpu.memory_space<vmem>>, vector<1x1x32x64xf32>
    %75 = vector.shape_cast %74 : vector<1x1x32x64xf32> to vector<32x64xf32>
    %c1_110 = arith.constant 1 : index
    %c0_111 = arith.constant 0 : index
    %c32_112 = arith.constant 32 : index
    %c0_113 = arith.constant 0 : index
    %76 = vector.load %arg8[%c1_110, %c0_111, %c32_112, %c0_113] : memref<2x2x64x64xf32, #tpu.memory_space<vmem>>, vector<1x1x32x64xf32>
    %77 = vector.shape_cast %76 : vector<1x1x32x64xf32> to vector<32x64xf32>
    %c1_114 = arith.constant 1 : index
    %c0_115 = arith.constant 0 : index
    %c32_116 = arith.constant 32 : index
    %c0_117 = arith.constant 0 : index
    %78 = vector.load %arg3[%c1_114, %c0_115, %c32_116, %c0_117] : memref<2x2x64x64xf32, #tpu.memory_space<vmem>>, vector<1x1x32x64xf32>
    %79 = vector.shape_cast %78 : vector<1x1x32x64xf32> to vector<32x64xf32>
    %80 = arith.addf %75, %79 : vector<32x64xf32>
    %81 = arith.maximumf %77, %79 : vector<32x64xf32>
    %c1_118 = arith.constant 1 : index
    %c0_119 = arith.constant 0 : index
    %c32_120 = arith.constant 32 : index
    %c0_121 = arith.constant 0 : index
    %82 = vector.load %arg7[%c1_118, %c0_119, %c32_120, %c0_121] : memref<2x2x64x64xf32, #tpu.memory_space<vmem>>, vector<1x1x32x64xf32>
    %83 = vector.shape_cast %82 : vector<1x1x32x64xf32> to vector<32x64xf32>
    %84 = vector.shape_cast %80 : vector<32x64xf32> to vector<1x1x32x64xf32>
    tpu.vector_store %arg7[%c1_118, %c0_119, %c32_120, %c0_121], %84 {strides = array<i32>} : memref<2x2x64x64xf32, #tpu.memory_space<vmem>>, vector<1x1x32x64xf32>,
    %c1_122 = arith.constant 1 : index
    %c0_123 = arith.constant 0 : index
    %c32_124 = arith.constant 32 : index
    %c0_125 = arith.constant 0 : index
    %85 = vector.load %arg8[%c1_122, %c0_123, %c32_124, %c0_125] : memref<2x2x64x64xf32, #tpu.memory_space<vmem>>, vector<1x1x32x64xf32>
    %86 = vector.shape_cast %85 : vector<1x1x32x64xf32> to vector<32x64xf32>
    %87 = vector.shape_cast %81 : vector<32x64xf32> to vector<1x1x32x64xf32>
    tpu.vector_store %arg8[%c1_122, %c0_123, %c32_124, %c0_125], %87 {strides = array<i32>} : memref<2x2x64x64xf32, #tpu.memory_space<vmem>>, vector<1x1x32x64xf32>,
    %c1_126 = arith.constant 1 : index
    %c1_127 = arith.constant 1 : index
    %c0_128 = arith.constant 0 : index
    %c0_129 = arith.constant 0 : index
    %88 = vector.load %arg7[%c1_126, %c1_127, %c0_128, %c0_129] : memref<2x2x64x64xf32, #tpu.memory_space<vmem>>, vector<1x1x32x64xf32>
    %89 = vector.shape_cast %88 : vector<1x1x32x64xf32> to vector<32x64xf32>
    %c1_130 = arith.constant 1 : index
    %c1_131 = arith.constant 1 : index
    %c0_132 = arith.constant 0 : index
    %c0_133 = arith.constant 0 : index
    %90 = vector.load %arg8[%c1_130, %c1_131, %c0_132, %c0_133] : memref<2x2x64x64xf32, #tpu.memory_space<vmem>>, vector<1x1x32x64xf32>
    %91 = vector.shape_cast %90 : vector<1x1x32x64xf32> to vector<32x64xf32>
    %c1_134 = arith.constant 1 : index
    %c1_135 = arith.constant 1 : index
    %c0_136 = arith.constant 0 : index
    %c0_137 = arith.constant 0 : index
    %92 = vector.load %arg3[%c1_134, %c1_135, %c0_136, %c0_137] : memref<2x2x64x64xf32, #tpu.memory_space<vmem>>, vector<1x1x32x64xf32>
    %93 = vector.shape_cast %92 : vector<1x1x32x64xf32> to vector<32x64xf32>
    %94 = arith.addf %89, %93 : vector<32x64xf32>
    %95 = arith.maximumf %91, %93 : vector<32x64xf32>
    %c1_138 = arith.constant 1 : index
    %c1_139 = arith.constant 1 : index
    %c0_140 = arith.constant 0 : index
    %c0_141 = arith.constant 0 : index
    %96 = vector.load %arg7[%c1_138, %c1_139, %c0_140, %c0_141] : memref<2x2x64x64xf32, #tpu.memory_space<vmem>>, vector<1x1x32x64xf32>
    %97 = vector.shape_cast %96 : vector<1x1x32x64xf32> to vector<32x64xf32>
    %98 = vector.shape_cast %94 : vector<32x64xf32> to vector<1x1x32x64xf32>
    tpu.vector_store %arg7[%c1_138, %c1_139, %c0_140, %c0_141], %98 {strides = array<i32>} : memref<2x2x64x64xf32, #tpu.memory_space<vmem>>, vector<1x1x32x64xf32>,
    %c1_142 = arith.constant 1 : index
    %c1_143 = arith.constant 1 : index
    %c0_144 = arith.constant 0 : index
    %c0_145 = arith.constant 0 : index
    %99 = vector.load %arg8[%c1_142, %c1_143, %c0_144, %c0_145] : memref<2x2x64x64xf32, #tpu.memory_space<vmem>>, vector<1x1x32x64xf32>
    %100 = vector.shape_cast %99 : vector<1x1x32x64xf32> to vector<32x64xf32>
    %101 = vector.shape_cast %95 : vector<32x64xf32> to vector<1x1x32x64xf32>
    tpu.vector_store %arg8[%c1_142, %c1_143, %c0_144, %c0_145], %101 {strides = array<i32>} : memref<2x2x64x64xf32, #tpu.memory_space<vmem>>, vector<1x1x32x64xf32>,
    %c1_146 = arith.constant 1 : index
    %c1_147 = arith.constant 1 : index
    %c32_148 = arith.constant 32 : index
    %c0_149 = arith.constant 0 : index
    %102 = vector.load %arg7[%c1_146, %c1_147, %c32_148, %c0_149] : memref<2x2x64x64xf32, #tpu.memory_space<vmem>>, vector<1x1x32x64xf32>
    %103 = vector.shape_cast %102 : vector<1x1x32x64xf32> to vector<32x64xf32>
    %c1_150 = arith.constant 1 : index
    %c1_151 = arith.constant 1 : index
    %c32_152 = arith.constant 32 : index
    %c0_153 = arith.constant 0 : index
    %104 = vector.load %arg8[%c1_150, %c1_151, %c32_152, %c0_153] : memref<2x2x64x64xf32, #tpu.memory_space<vmem>>, vector<1x1x32x64xf32>
    %105 = vector.shape_cast %104 : vector<1x1x32x64xf32> to vector<32x64xf32>
    %c1_154 = arith.constant 1 : index
    %c1_155 = arith.constant 1 : index
    %c32_156 = arith.constant 32 : index
    %c0_157 = arith.constant 0 : index
    %106 = vector.load %arg3[%c1_154, %c1_155, %c32_156, %c0_157] : memref<2x2x64x64xf32, #tpu.memory_space<vmem>>, vector<1x1x32x64xf32>
    %107 = vector.shape_cast %106 : vector<1x1x32x64xf32> to vector<32x64xf32>
    %108 = arith.addf %103, %107 : vector<32x64xf32>
    %109 = arith.maximumf %105, %107 : vector<32x64xf32>
    %c1_158 = arith.constant 1 : index
    %c1_159 = arith.constant 1 : index
    %c32_160 = arith.constant 32 : index
    %c0_161 = arith.constant 0 : index
    %110 = vector.load %arg7[%c1_158, %c1_159, %c32_160, %c0_161] : memref<2x2x64x64xf32, #tpu.memory_space<vmem>>, vector<1x1x32x64xf32>
    %111 = vector.shape_cast %110 : vector<1x1x32x64xf32> to vector<32x64xf32>
    %112 = vector.shape_cast %108 : vector<32x64xf32> to vector<1x1x32x64xf32>
    tpu.vector_store %arg7[%c1_158, %c1_159, %c32_160, %c0_161], %112 {strides = array<i32>} : memref<2x2x64x64xf32, #tpu.memory_space<vmem>>, vector<1x1x32x64xf32>,
    %c1_162 = arith.constant 1 : index
    %c1_163 = arith.constant 1 : index
    %c32_164 = arith.constant 32 : index
    %c0_165 = arith.constant 0 : index
    %113 = vector.load %arg8[%c1_162, %c1_163, %c32_164, %c0_165] : memref<2x2x64x64xf32, #tpu.memory_space<vmem>>, vector<1x1x32x64xf32>
    %114 = vector.shape_cast %113 : vector<1x1x32x64xf32> to vector<32x64xf32>
    %115 = vector.shape_cast %109 : vector<32x64xf32> to vector<1x1x32x64xf32>
    tpu.vector_store %arg8[%c1_162, %c1_163, %c32_164, %c0_165], %115 {strides = array<i32>} : memref<2x2x64x64xf32, #tpu.memory_space<vmem>>, vector<1x1x32x64xf32>,
    %c0_166 = arith.constant 0 : index
    %c0_167 = arith.constant 0 : index
    %c0_168 = arith.constant 0 : index
    %c0_169 = arith.constant 0 : index
    %116 = vector.load %arg7[%c0_166, %c0_167, %c0_168, %c0_169] : memref<2x2x64x64xf32, #tpu.memory_space<vmem>>, vector<1x2x64x64xf32>
    %117 = vector.shape_cast %116 : vector<1x2x64x64xf32> to vector<2x64x64xf32>
    %cst_170 = arith.constant dense<0.000000e+00> : vector<2x64xf32>
    %118 = vector.multi_reduction <add>, %117, %cst_170 [2] : vector<2x64x64xf32> to vector<2x64xf32>
    %cst_171 = arith.constant 1.562500e-02 : f32
    %119 = vector.broadcast %cst_171 : f32 to vector<2x64xf32>
    %120 = arith.mulf %118, %119 : vector<2x64xf32>
    %c0_172 = arith.constant 0 : index
    %c0_173 = arith.constant 0 : index
    %c0_174 = arith.constant 0 : index
    %c0_175 = arith.constant 0 : index
    %121 = vector.load %arg8[%c0_172, %c0_173, %c0_174, %c0_175] : memref<2x2x64x64xf32, #tpu.memory_space<vmem>>, vector<1x2x64x64xf32>
    %122 = vector.shape_cast %121 : vector<1x2x64x64xf32> to vector<2x64x64xf32>
    %cst_176 = arith.constant dense<0xFF800000> : vector<2x64xf32>
    %123 = vector.multi_reduction <maximumf>, %122, %cst_176 [2] : vector<2x64x64xf32> to vector<2x64xf32>
    %c0_177 = arith.constant 0 : index
    %c0_178 = arith.constant 0 : index
    %c0_179 = arith.constant 0 : index
    %124 = vector.load %arg4[%c0_177, %c0_178, %c0_179] : memref<2x64x4xf32, #tpu.memory_space<vmem>>, vector<1x64x4xf32>
    %125 = vector.shape_cast %124 : vector<1x64x4xf32> to vector<64x4xf32>
    %c0_180 = arith.constant 0 : index
    %c0_181 = arith.constant 0 : index
    %c0_182 = arith.constant 0 : index
    %126 = vector.load %arg5[%c0_180, %c0_181, %c0_182] : memref<2x4x64xf32, #tpu.memory_space<vmem>>, vector<1x4x64xf32>
    %127 = vector.shape_cast %126 : vector<1x4x64xf32> to vector<4x64xf32>
    %cst_183 = arith.constant dense<0.000000e+00> : vector<2x4xf32>
    %128 = tpu.matmul %120, %125, %cst_183 {dimension_numbers = #tpu.dot_dimension_numbers<[1], [0], [0], [1], [0, 0, 1, 1], [], []>} : vector<2x64xf32>, vector<64x4xf32>, vector<2x4xf32> -> vector<2x4xf32>
    %cst_184 = arith.constant 0.000000e+00 : f32
    %129 = vector.broadcast %cst_184 : f32 to vector<2x4xf32>
    %130 = arith.maximumf %128, %129 : vector<2x4xf32>
    %cst_185 = arith.constant dense<0.000000e+00> : vector<2x64xf32>
    %131 = tpu.matmul %130, %127, %cst_185 {dimension_numbers = #tpu.dot_dimension_numbers<[1], [0], [0], [1], [0, 0, 1, 1], [], []>} : vector<2x4xf32>, vector<4x64xf32>, vector<2x64xf32> -> vector<2x64xf32>
    %cst_186 = arith.constant dense<0.000000e+00> : vector<2x4xf32>
    %132 = tpu.matmul %123, %125, %cst_186 {dimension_numbers = #tpu.dot_dimension_numbers<[1], [0], [0], [1], [0, 0, 1, 1], [], []>} : vector<2x64xf32>, vector<64x4xf32>, vector<2x4xf32> -> vector<2x4xf32>
    %cst_187 = arith.constant 0.000000e+00 : f32
    %133 = vector.broadcast %cst_187 : f32 to vector<2x4xf32>
    %134 = arith.maximumf %132, %133 : vector<2x4xf32>
    %cst_188 = arith.constant dense<0.000000e+00> : vector<2x64xf32>
    %135 = tpu.matmul %134, %127, %cst_188 {dimension_numbers = #tpu.dot_dimension_numbers<[1], [0], [0], [1], [0, 0, 1, 1], [], []>} : vector<2x4xf32>, vector<4x64xf32>, vector<2x64xf32> -> vector<2x64xf32>
    %136 = arith.addf %131, %135 : vector<2x64xf32>
    %137 = arith.negf %136 : vector<2x64xf32>
    %138 = math.exp %137 : vector<2x64xf32>
    %cst_189 = arith.constant 1.000000e+00 : f32
    %139 = vector.broadcast %cst_189 : f32 to vector<2x64xf32>
    %140 = arith.addf %139, %138 : vector<2x64xf32>
    %141 = arith.divf %139, %140 : vector<2x64xf32>
    %142 = vector.shape_cast %141 : vector<2x64xf32> to vector<2x64x1xf32>
    %143 = vector.shape_cast %142 : vector<2x64x1xf32> to vector<2x64x1xf32>
    %144 = vector.broadcast %143 : vector<2x64x1xf32> to vector<2x64x64xf32>
    %c1_190 = arith.constant 1 : index
    %c0_191 = arith.constant 0 : index
    %c0_192 = arith.constant 0 : index
    %c0_193 = arith.constant 0 : index
    %145 = vector.load %arg9[%c1_190, %c0_191, %c0_192, %c0_193] : memref<2x2x64x64xf32, #tpu.memory_space<vmem>>, vector<1x2x64x64xf32>
    %146 = vector.shape_cast %145 : vector<1x2x64x64xf32> to vector<2x64x64xf32>
    %147 = vector.shape_cast %144 : vector<2x64x64xf32> to vector<1x2x64x64xf32>
    tpu.vector_store %arg9[%c1_190, %c0_191, %c0_192, %c0_193], %147 {strides = array<i32>} : memref<2x2x64x64xf32, #tpu.memory_space<vmem>>, vector<1x2x64x64xf32>,
    %c1_194 = arith.constant 1 : index
    %c0_195 = arith.constant 0 : index
    %c0_196 = arith.constant 0 : index
    %c0_197 = arith.constant 0 : index
    %148 = vector.load %arg7[%c1_194, %c0_195, %c0_196, %c0_197] : memref<2x2x64x64xf32, #tpu.memory_space<vmem>>, vector<1x2x64x64xf32>
    %149 = vector.shape_cast %148 : vector<1x2x64x64xf32> to vector<2x64x64xf32>
    %cst_198 = arith.constant dense<0.000000e+00> : vector<2x64xf32>
    %150 = vector.multi_reduction <add>, %149, %cst_198 [2] : vector<2x64x64xf32> to vector<2x64xf32>
    %cst_199 = arith.constant 1.562500e-02 : f32
    %151 = vector.broadcast %cst_199 : f32 to vector<2x64xf32>
    %152 = arith.mulf %150, %151 : vector<2x64xf32>
    %c1_200 = arith.constant 1 : index
    %c0_201 = arith.constant 0 : index
    %c0_202 = arith.constant 0 : index
    %c0_203 = arith.constant 0 : index
    %153 = vector.load %arg8[%c1_200, %c0_201, %c0_202, %c0_203] : memref<2x2x64x64xf32, #tpu.memory_space<vmem>>, vector<1x2x64x64xf32>
    %154 = vector.shape_cast %153 : vector<1x2x64x64xf32> to vector<2x64x64xf32>
    %cst_204 = arith.constant dense<0xFF800000> : vector<2x64xf32>
    %155 = vector.multi_reduction <maximumf>, %154, %cst_204 [2] : vector<2x64x64xf32> to vector<2x64xf32>
    %c1_205 = arith.constant 1 : index
    %c0_206 = arith.constant 0 : index
    %c0_207 = arith.constant 0 : index
    %156 = vector.load %arg4[%c1_205, %c0_206, %c0_207] : memref<2x64x4xf32, #tpu.memory_space<vmem>>, vector<1x64x4xf32>
    %157 = vector.shape_cast %156 : vector<1x64x4xf32> to vector<64x4xf32>
    %c1_208 = arith.constant 1 : index
    %c0_209 = arith.constant 0 : index
    %c0_210 = arith.constant 0 : index
    %158 = vector.load %arg5[%c1_208, %c0_209, %c0_210] : memref<2x4x64xf32, #tpu.memory_space<vmem>>, vector<1x4x64xf32>
    %159 = vector.shape_cast %158 : vector<1x4x64xf32> to vector<4x64xf32>
    %cst_211 = arith.constant dense<0.000000e+00> : vector<2x4xf32>
    %160 = tpu.matmul %152, %157, %cst_211 {dimension_numbers = #tpu.dot_dimension_numbers<[1], [0], [0], [1], [0, 0, 1, 1], [], []>} : vector<2x64xf32>, vector<64x4xf32>, vector<2x4xf32> -> vector<2x4xf32>
    %cst_212 = arith.constant 0.000000e+00 : f32
    %161 = vector.broadcast %cst_212 : f32 to vector<2x4xf32>
    %162 = arith.maximumf %160, %161 : vector<2x4xf32>
    %cst_213 = arith.constant dense<0.000000e+00> : vector<2x64xf32>
    %163 = tpu.matmul %162, %159, %cst_213 {dimension_numbers = #tpu.dot_dimension_numbers<[1], [0], [0], [1], [0, 0, 1, 1], [], []>} : vector<2x4xf32>, vector<4x64xf32>, vector<2x64xf32> -> vector<2x64xf32>
    %cst_214 = arith.constant dense<0.000000e+00> : vector<2x4xf32>
    %164 = tpu.matmul %155, %157, %cst_214 {dimension_numbers = #tpu.dot_dimension_numbers<[1], [0], [0], [1], [0, 0, 1, 1], [], []>} : vector<2x64xf32>, vector<64x4xf32>, vector<2x4xf32> -> vector<2x4xf32>
    %cst_215 = arith.constant 0.000000e+00 : f32
    %165 = vector.broadcast %cst_215 : f32 to vector<2x4xf32>
    %166 = arith.maximumf %164, %165 : vector<2x4xf32>
    %cst_216 = arith.constant dense<0.000000e+00> : vector<2x64xf32>
    %167 = tpu.matmul %166, %159, %cst_216 {dimension_numbers = #tpu.dot_dimension_numbers<[1], [0], [0], [1], [0, 0, 1, 1], [], []>} : vector<2x4xf32>, vector<4x64xf32>, vector<2x64xf32> -> vector<2x64xf32>
    %168 = arith.addf %163, %167 : vector<2x64xf32>
    %169 = arith.negf %168 : vector<2x64xf32>
    %170 = math.exp %169 : vector<2x64xf32>
    %cst_217 = arith.constant 1.000000e+00 : f32
    %171 = vector.broadcast %cst_217 : f32 to vector<2x64xf32>
    %172 = arith.addf %171, %170 : vector<2x64xf32>
    %173 = arith.divf %171, %172 : vector<2x64xf32>
    %174 = vector.shape_cast %173 : vector<2x64xf32> to vector<2x64x1xf32>
    %175 = vector.shape_cast %174 : vector<2x64x1xf32> to vector<2x64x1xf32>
    %176 = vector.broadcast %175 : vector<2x64x1xf32> to vector<2x64x64xf32>
    %c0_218 = arith.constant 0 : index
    %c0_219 = arith.constant 0 : index
    %c0_220 = arith.constant 0 : index
    %c0_221 = arith.constant 0 : index
    %177 = vector.load %arg9[%c0_218, %c0_219, %c0_220, %c0_221] : memref<2x2x64x64xf32, #tpu.memory_space<vmem>>, vector<1x2x64x64xf32>
    %178 = vector.shape_cast %177 : vector<1x2x64x64xf32> to vector<2x64x64xf32>
    %179 = vector.shape_cast %176 : vector<2x64x64xf32> to vector<1x2x64x64xf32>
    tpu.vector_store %arg9[%c0_218, %c0_219, %c0_220, %c0_221], %179 {strides = array<i32>} : memref<2x2x64x64xf32, #tpu.memory_space<vmem>>, vector<1x2x64x64xf32>,
    %c0_222 = arith.constant 0 : index
    %c0_223 = arith.constant 0 : index
    %c0_224 = arith.constant 0 : index
    %c0_225 = arith.constant 0 : index
    %180 = vector.load %arg9[%c0_222, %c0_223, %c0_224, %c0_225] : memref<2x2x64x64xf32, #tpu.memory_space<vmem>>, vector<1x1x32x64xf32>
    %181 = vector.shape_cast %180 : vector<1x1x32x64xf32> to vector<32x64xf32>
    %c0_226 = arith.constant 0 : index
    %c0_227 = arith.constant 0 : index
    %c0_228 = arith.constant 0 : index
    %c0_229 = arith.constant 0 : index
    %182 = vector.load %arg3[%c0_226, %c0_227, %c0_228, %c0_229] : memref<2x2x64x64xf32, #tpu.memory_space<vmem>>, vector<1x1x32x64xf32>
    %183 = vector.shape_cast %182 : vector<1x1x32x64xf32> to vector<32x64xf32>
    %184 = arith.mulf %183, %181 : vector<32x64xf32>
    %c0_230 = arith.constant 0 : index
    %c0_231 = arith.constant 0 : index
    %c0_232 = arith.constant 0 : index
    %c0_233 = arith.constant 0 : index
    %185 = vector.load %arg6[%c0_230, %c0_231, %c0_232, %c0_233] : memref<2x2x64x64xf32, #tpu.memory_space<vmem>>, vector<1x1x32x64xf32>
    %186 = vector.shape_cast %185 : vector<1x1x32x64xf32> to vector<32x64xf32>
    %187 = vector.shape_cast %184 : vector<32x64xf32> to vector<1x1x32x64xf32>
    tpu.vector_store %arg6[%c0_230, %c0_231, %c0_232, %c0_233], %187 {strides = array<i32>} : memref<2x2x64x64xf32, #tpu.memory_space<vmem>>, vector<1x1x32x64xf32>,
    %c0_234 = arith.constant 0 : index
    %c0_235 = arith.constant 0 : index
    %c32_236 = arith.constant 32 : index
    %c0_237 = arith.constant 0 : index
    %188 = vector.load %arg9[%c0_234, %c0_235, %c32_236, %c0_237] : memref<2x2x64x64xf32, #tpu.memory_space<vmem>>, vector<1x1x32x64xf32>
    %189 = vector.shape_cast %188 : vector<1x1x32x64xf32> to vector<32x64xf32>
    %c0_238 = arith.constant 0 : index
    %c0_239 = arith.constant 0 : index
    %c32_240 = arith.constant 32 : index
    %c0_241 = arith.constant 0 : index
    %190 = vector.load %arg3[%c0_238, %c0_239, %c32_240, %c0_241] : memref<2x2x64x64xf32, #tpu.memory_space<vmem>>, vector<1x1x32x64xf32>
    %191 = vector.shape_cast %190 : vector<1x1x32x64xf32> to vector<32x64xf32>
    %192 = arith.mulf %191, %189 : vector<32x64xf32>
    %c0_242 = arith.constant 0 : index
    %c0_243 = arith.constant 0 : index
    %c32_244 = arith.constant 32 : index
    %c0_245 = arith.constant 0 : index
    %193 = vector.load %arg6[%c0_242, %c0_243, %c32_244, %c0_245] : memref<2x2x64x64xf32, #tpu.memory_space<vmem>>, vector<1x1x32x64xf32>
    %194 = vector.shape_cast %193 : vector<1x1x32x64xf32> to vector<32x64xf32>
    %195 = vector.shape_cast %192 : vector<32x64xf32> to vector<1x1x32x64xf32>
    tpu.vector_store %arg6[%c0_242, %c0_243, %c32_244, %c0_245], %195 {strides = array<i32>} : memref<2x2x64x64xf32, #tpu.memory_space<vmem>>, vector<1x1x32x64xf32>,
    %c0_246 = arith.constant 0 : index
    %c1_247 = arith.constant 1 : index
    %c0_248 = arith.constant 0 : index
    %c0_249 = arith.constant 0 : index
    %196 = vector.load %arg9[%c0_246, %c1_247, %c0_248, %c0_249] : memref<2x2x64x64xf32, #tpu.memory_space<vmem>>, vector<1x1x32x64xf32>
    %197 = vector.shape_cast %196 : vector<1x1x32x64xf32> to vector<32x64xf32>
    %c0_250 = arith.constant 0 : index
    %c1_251 = arith.constant 1 : index
    %c0_252 = arith.constant 0 : index
    %c0_253 = arith.constant 0 : index
    %198 = vector.load %arg3[%c0_250, %c1_251, %c0_252, %c0_253] : memref<2x2x64x64xf32, #tpu.memory_space<vmem>>, vector<1x1x32x64xf32>
    %199 = vector.shape_cast %198 : vector<1x1x32x64xf32> to vector<32x64xf32>
    %200 = arith.mulf %199, %197 : vector<32x64xf32>
    %c0_254 = arith.constant 0 : index
    %c1_255 = arith.constant 1 : index
    %c0_256 = arith.constant 0 : index
    %c0_257 = arith.constant 0 : index
    %201 = vector.load %arg6[%c0_254, %c1_255, %c0_256, %c0_257] : memref<2x2x64x64xf32, #tpu.memory_space<vmem>>, vector<1x1x32x64xf32>
    %202 = vector.shape_cast %201 : vector<1x1x32x64xf32> to vector<32x64xf32>
    %203 = vector.shape_cast %200 : vector<32x64xf32> to vector<1x1x32x64xf32>
    tpu.vector_store %arg6[%c0_254, %c1_255, %c0_256, %c0_257], %203 {strides = array<i32>} : memref<2x2x64x64xf32, #tpu.memory_space<vmem>>, vector<1x1x32x64xf32>,
    %c0_258 = arith.constant 0 : index
    %c1_259 = arith.constant 1 : index
    %c32_260 = arith.constant 32 : index
    %c0_261 = arith.constant 0 : index
    %204 = vector.load %arg9[%c0_258, %c1_259, %c32_260, %c0_261] : memref<2x2x64x64xf32, #tpu.memory_space<vmem>>, vector<1x1x32x64xf32>
    %205 = vector.shape_cast %204 : vector<1x1x32x64xf32> to vector<32x64xf32>
    %c0_262 = arith.constant 0 : index
    %c1_263 = arith.constant 1 : index
    %c32_264 = arith.constant 32 : index
    %c0_265 = arith.constant 0 : index
    %206 = vector.load %arg3[%c0_262, %c1_263, %c32_264, %c0_265] : memref<2x2x64x64xf32, #tpu.memory_space<vmem>>, vector<1x1x32x64xf32>
    %207 = vector.shape_cast %206 : vector<1x1x32x64xf32> to vector<32x64xf32>
    %208 = arith.mulf %207, %205 : vector<32x64xf32>
    %c0_266 = arith.constant 0 : index
    %c1_267 = arith.constant 1 : index
    %c32_268 = arith.constant 32 : index
    %c0_269 = arith.constant 0 : index
    %209 = vector.load %arg6[%c0_266, %c1_267, %c32_268, %c0_269] : memref<2x2x64x64xf32, #tpu.memory_space<vmem>>, vector<1x1x32x64xf32>
    %210 = vector.shape_cast %209 : vector<1x1x32x64xf32> to vector<32x64xf32>
    %211 = vector.shape_cast %208 : vector<32x64xf32> to vector<1x1x32x64xf32>
    tpu.vector_store %arg6[%c0_266, %c1_267, %c32_268, %c0_269], %211 {strides = array<i32>} : memref<2x2x64x64xf32, #tpu.memory_space<vmem>>, vector<1x1x32x64xf32>,
    %c1_270 = arith.constant 1 : index
    %c0_271 = arith.constant 0 : index
    %c0_272 = arith.constant 0 : index
    %c0_273 = arith.constant 0 : index
    %212 = vector.load %arg9[%c1_270, %c0_271, %c0_272, %c0_273] : memref<2x2x64x64xf32, #tpu.memory_space<vmem>>, vector<1x1x32x64xf32>
    %213 = vector.shape_cast %212 : vector<1x1x32x64xf32> to vector<32x64xf32>
    %c1_274 = arith.constant 1 : index
    %c0_275 = arith.constant 0 : index
    %c0_276 = arith.constant 0 : index
    %c0_277 = arith.constant 0 : index
    %214 = vector.load %arg3[%c1_274, %c0_275, %c0_276, %c0_277] : memref<2x2x64x64xf32, #tpu.memory_space<vmem>>, vector<1x1x32x64xf32>
    %215 = vector.shape_cast %214 : vector<1x1x32x64xf32> to vector<32x64xf32>
    %216 = arith.mulf %215, %213 : vector<32x64xf32>
    %c1_278 = arith.constant 1 : index
    %c0_279 = arith.constant 0 : index
    %c0_280 = arith.constant 0 : index
    %c0_281 = arith.constant 0 : index
    %217 = vector.load %arg6[%c1_278, %c0_279, %c0_280, %c0_281] : memref<2x2x64x64xf32, #tpu.memory_space<vmem>>, vector<1x1x32x64xf32>
    %218 = vector.shape_cast %217 : vector<1x1x32x64xf32> to vector<32x64xf32>
    %219 = vector.shape_cast %216 : vector<32x64xf32> to vector<1x1x32x64xf32>
    tpu.vector_store %arg6[%c1_278, %c0_279, %c0_280, %c0_281], %219 {strides = array<i32>} : memref<2x2x64x64xf32, #tpu.memory_space<vmem>>, vector<1x1x32x64xf32>,
    %c1_282 = arith.constant 1 : index
    %c0_283 = arith.constant 0 : index
    %c32_284 = arith.constant 32 : index
    %c0_285 = arith.constant 0 : index
    %220 = vector.load %arg9[%c1_282, %c0_283, %c32_284, %c0_285] : memref<2x2x64x64xf32, #tpu.memory_space<vmem>>, vector<1x1x32x64xf32>
    %221 = vector.shape_cast %220 : vector<1x1x32x64xf32> to vector<32x64xf32>
    %c1_286 = arith.constant 1 : index
    %c0_287 = arith.constant 0 : index
    %c32_288 = arith.constant 32 : index
    %c0_289 = arith.constant 0 : index
    %222 = vector.load %arg3[%c1_286, %c0_287, %c32_288, %c0_289] : memref<2x2x64x64xf32, #tpu.memory_space<vmem>>, vector<1x1x32x64xf32>
    %223 = vector.shape_cast %222 : vector<1x1x32x64xf32> to vector<32x64xf32>
    %224 = arith.mulf %223, %221 : vector<32x64xf32>
    %c1_290 = arith.constant 1 : index
    %c0_291 = arith.constant 0 : index
    %c32_292 = arith.constant 32 : index
    %c0_293 = arith.constant 0 : index
    %225 = vector.load %arg6[%c1_290, %c0_291, %c32_292, %c0_293] : memref<2x2x64x64xf32, #tpu.memory_space<vmem>>, vector<1x1x32x64xf32>
    %226 = vector.shape_cast %225 : vector<1x1x32x64xf32> to vector<32x64xf32>
    %227 = vector.shape_cast %224 : vector<32x64xf32> to vector<1x1x32x64xf32>
    tpu.vector_store %arg6[%c1_290, %c0_291, %c32_292, %c0_293], %227 {strides = array<i32>} : memref<2x2x64x64xf32, #tpu.memory_space<vmem>>, vector<1x1x32x64xf32>,
    %c1_294 = arith.constant 1 : index
    %c1_295 = arith.constant 1 : index
    %c0_296 = arith.constant 0 : index
    %c0_297 = arith.constant 0 : index
    %228 = vector.load %arg9[%c1_294, %c1_295, %c0_296, %c0_297] : memref<2x2x64x64xf32, #tpu.memory_space<vmem>>, vector<1x1x32x64xf32>
    %229 = vector.shape_cast %228 : vector<1x1x32x64xf32> to vector<32x64xf32>
    %c1_298 = arith.constant 1 : index
    %c1_299 = arith.constant 1 : index
    %c0_300 = arith.constant 0 : index
    %c0_301 = arith.constant 0 : index
    %230 = vector.load %arg3[%c1_298, %c1_299, %c0_300, %c0_301] : memref<2x2x64x64xf32, #tpu.memory_space<vmem>>, vector<1x1x32x64xf32>
    %231 = vector.shape_cast %230 : vector<1x1x32x64xf32> to vector<32x64xf32>
    %232 = arith.mulf %231, %229 : vector<32x64xf32>
    %c1_302 = arith.constant 1 : index
    %c1_303 = arith.constant 1 : index
    %c0_304 = arith.constant 0 : index
    %c0_305 = arith.constant 0 : index
    %233 = vector.load %arg6[%c1_302, %c1_303, %c0_304, %c0_305] : memref<2x2x64x64xf32, #tpu.memory_space<vmem>>, vector<1x1x32x64xf32>
    %234 = vector.shape_cast %233 : vector<1x1x32x64xf32> to vector<32x64xf32>
    %235 = vector.shape_cast %232 : vector<32x64xf32> to vector<1x1x32x64xf32>
    tpu.vector_store %arg6[%c1_302, %c1_303, %c0_304, %c0_305], %235 {strides = array<i32>} : memref<2x2x64x64xf32, #tpu.memory_space<vmem>>, vector<1x1x32x64xf32>,
    %c1_306 = arith.constant 1 : index
    %c1_307 = arith.constant 1 : index
    %c32_308 = arith.constant 32 : index
    %c0_309 = arith.constant 0 : index
    %236 = vector.load %arg9[%c1_306, %c1_307, %c32_308, %c0_309] : memref<2x2x64x64xf32, #tpu.memory_space<vmem>>, vector<1x1x32x64xf32>
    %237 = vector.shape_cast %236 : vector<1x1x32x64xf32> to vector<32x64xf32>
    %c1_310 = arith.constant 1 : index
    %c1_311 = arith.constant 1 : index
    %c32_312 = arith.constant 32 : index
    %c0_313 = arith.constant 0 : index
    %238 = vector.load %arg3[%c1_310, %c1_311, %c32_312, %c0_313] : memref<2x2x64x64xf32, #tpu.memory_space<vmem>>, vector<1x1x32x64xf32>
    %239 = vector.shape_cast %238 : vector<1x1x32x64xf32> to vector<32x64xf32>
    %240 = arith.mulf %239, %237 : vector<32x64xf32>
    %c1_314 = arith.constant 1 : index
    %c1_315 = arith.constant 1 : index
    %c32_316 = arith.constant 32 : index
    %c0_317 = arith.constant 0 : index
    %241 = vector.load %arg6[%c1_314, %c1_315, %c32_316, %c0_317] : memref<2x2x64x64xf32, #tpu.memory_space<vmem>>, vector<1x1x32x64xf32>
    %242 = vector.shape_cast %241 : vector<1x1x32x64xf32> to vector<32x64xf32>
    %243 = vector.shape_cast %240 : vector<32x64xf32> to vector<1x1x32x64xf32>
    tpu.vector_store %arg6[%c1_314, %c1_315, %c32_316, %c0_317], %243 {strides = array<i32>} : memref<2x2x64x64xf32, #tpu.memory_space<vmem>>, vector<1x1x32x64xf32>,
    return
  }
  func.func @transform_0(%arg0: i32, %arg1: i32, %arg2: i32) -> (i32, i32, i32, i32) {
    %c1_i32 = arith.constant 1 : i32
    %c0_i32 = arith.constant 0 : i32
    %0 = arith.cmpi eq, %c1_i32, %c0_i32 : i32
    %c1_i32_0 = arith.constant 1 : i32
    %1 = arith.select %0, %c1_i32_0, %c1_i32 : i32
    %2 = arith.remsi %arg2, %1 : i32
    %c0_i32_1 = arith.constant 0 : i32
    %3 = arith.cmpi ne, %2, %c0_i32_1 : i32
    %c0_i32_2 = arith.constant 0 : i32
    %4 = arith.cmpi slt, %2, %c0_i32_2 : i32
    %c0_i32_3 = arith.constant 0 : i32
    %5 = arith.cmpi slt, %1, %c0_i32_3 : i32
    %6 = arith.xori %4, %5 : i1
    %7 = arith.andi %6, %3 : i1
    %8 = arith.addi %2, %1 : i32
    %9 = arith.select %7, %8, %2 : i32
    %c0_i32_4 = arith.constant 0 : i32
    %c0_i32_5 = arith.constant 0 : i32
    return %arg0, %arg1, %c0_i32_4, %9 : i32, i32, i32, i32
  }
  func.func @transform_1(%arg0: i32, %arg1: i32, %arg2: i32) -> (i32, i32, i32) {
    %c0_i32 = arith.constant 0 : i32
    %c0_i32_0 = arith.constant 0 : i32
    %c0_i32_1 = arith.constant 0 : i32
    return %arg0, %c0_i32, %c0_i32_0 : i32, i32, i32
  }
  func.func @transform_2(%arg0: i32, %arg1: i32, %arg2: i32) -> (i32, i32, i32) {
    %c0_i32 = arith.constant 0 : i32
    %c0_i32_0 = arith.constant 0 : i32
    %c0_i32_1 = arith.constant 0 : i32
    return %arg0, %c0_i32, %c0_i32_0 : i32, i32, i32
  }
  func.func @transform_3(%arg0: i32, %arg1: i32, %arg2: i32) -> (i32, i32, i32, i32) {
    %c1_i32 = arith.constant 1 : i32
    %0 = arith.subi %arg2, %c1_i32 : i32
    %c0_i32 = arith.constant 0 : i32
    %1 = arith.maxsi %0, %c0_i32 : i32
    %c0_i32_0 = arith.constant 0 : i32
    %c0_i32_1 = arith.constant 0 : i32
    return %arg0, %arg1, %c0_i32_0, %1 : i32, i32, i32, i32
  }
}

</mosaic_0001>

<llo_original>
// kernel: fused_cbam_pairs.1
$region0: #{fused_cbam_pairs.1}
  #allocation0 [shape = 'u32[]', space=smem, size = 0x4, offset = 0x4, fixed_abs, tag = 'smem constant byte address 0x4 - core index']
  #allocation1 [shape = 'u32[144,128]{1,0:T(1,128)}', space=vmem, size = 0x12000, scoped, tag = 'internal scratch']
  #allocation2 [shape = 'f32[2,2,64,64]{3,2,1,0:T(8,128)}', space=vmem, size = 0x20000, scoped, tag = 'scratch operand']
  #allocation3 [shape = 'f32[2,2,64,64]{3,2,1,0:T(8,128)}', space=vmem, size = 0x20000, scoped, tag = 'scratch operand']
  #allocation4 [shape = 'f32[2,2,64,64]{3,2,1,0:T(8,128)}', space=vmem, size = 0x20000, scoped, tag = 'scratch operand']
  %s0 = inlined_call_operand.vmem [shape: f32[8,2,64,64], index: 0, kind: input, shape index: {}]
  %s1 = inlined_call_operand.vmem [shape: f32[8,64,4], index: 1, kind: input, shape index: {}]
  %s2 = inlined_call_operand.vmem [shape: f32[8,4,64], index: 2, kind: input, shape index: {}]
  %s3 = inlined_call_operand.vmem [shape: f32[8,2,64,64], index: 3, kind: output, shape index: {}]
  %s4 = sld [smem:[#allocation0]]
  $region45: #{fused_cbam_pairs.1} parent=0
    _
  %s6 = ssub.s32 1, %s4
  %s7 = scalar_select 0, %s6, %s4
  loop: start=0, step=1, limit=6
  $region2: #{fused_cbam_pairs.1} parent=0 // loop_pre_header
    _
  $region3: #{fused_cbam_pairs.1} parent=0 // loop_header
    %s9 = sphi 0, %s13
    %p10 = scmp.ge.s32.totalorder %s9, 6
    %s16 = sphi 0, %s35
    %s17 = sphi 0, %s31
    %s18 = sphi 0, %s27
    %s19 = sphi 0, %s16
    %s20 = sphi 0, %s17
    %s21 = sphi 0, %s18
    %s22 = sphi 0, %s19
    %s23 = sphi 0, %s20
    %s24 = sphi 0, %s21
    %s40 = sphi 0, %s42
    %s43 = sphi 0, %s40
    %s44 = sphi 0, %s43
    %s60 = sphi 0, %s44
    %s66 = sphi 0, %s68
    %s69 = sphi 0, %s66
    %s70 = sphi 0, %s69
    %s86 = sphi 0, %s70
    %s92 = sphi 0, %s94
    %s95 = sphi 0, %s92
    %s96 = sphi 0, %s95
    %s112 = sphi 0, %s96
    %s128 = sphi 0, %s130
    %s131 = sphi 0, %s128
    %s132 = sphi 0, %s131
    %s148 = sphi 0, %s132
  $region4: #{fused_cbam_pairs.1} parent=0 // loop_header_branch
    %12 = sbr.rel (%p10) target = $region8
  $region5: #{fused_cbam_pairs.1} parent=0 // loop_body
    %s14 = ssub.s32 %s9, 1
    %s15 = ssub.s32 %s9, 2
    %s25 = sadd.s32 1, %s18
    %p26 = scmp.ge.s32.totalorder %s25, 1
    %s27 = scalar_select %p26, 0, %s25
    %s28 = sadd.s32 1, %s17
    %s29 = scalar_select %p26, %s28, %s17
    %p30 = scmp.ge.s32.totalorder %s29, 1
    %s31 = scalar_select %p30, 0, %s29
    %s32 = sadd.s32 1, %s16
    %s33 = scalar_select %p30, %s32, %s16
    %p34 = scmp.ge.s32.totalorder %s33, 4
    %s35 = scalar_select %p34, 0, %s33
    %s36 = ssub.s32 %s16, %s35
    %s37 = ssub.s32 %s17, %s31
    %s38 = sor.u32 %s36, %s37
    %p39 = scmp.eq.s32.totalorder %s38, 0
    %s41 = sadd.s32 %s40, 1
    %s42 = scalar_select %p39, %s40, %s41
    %p45 = pneg %p39
    %p46 = scmp.eq.s32.totalorder %s9, 3
    %p47 = por %p45, %p46
    %p48 = scmp.ne.s32.totalorder %s40, %s43
    %p49 = scmp.eq.s32.totalorder %s9, 0
    %p50 = por %p48, %p49
    %p51 = scmp.ne.s32.totalorder %s40, %s43
    %p52 = scmp.eq.s32.totalorder %s14, 3
    %p53 = por %p51, %p52
    %p54 = scmp.ne.s32.totalorder %s43, %s44
    %p55 = scmp.eq.s32.totalorder %s14, 0
    %p56 = por %p54, %p55
    %p57 = scmp.ne.s32.totalorder %s43, %s44
    %p58 = scmp.eq.s32.totalorder %s15, 3
    %p59 = por %p57, %p58
    %p61 = scmp.ne.s32.totalorder %s44, %s60
    %p62 = scmp.eq.s32.totalorder %s15, 0
    %p63 = por %p61, %p62
    %s64 = ssub.s32 %s16, %s35
    %p65 = scmp.eq.s32.totalorder %s64, 0
    %s67 = sadd.s32 %s66, 1
    %s68 = scalar_select %p65, %s66, %s67
    %p71 = pneg %p65
    %p72 = scmp.eq.s32.totalorder %s9, 3
    %p73 = por %p71, %p72
    %p74 = scmp.ne.s32.totalorder %s66, %s69
    %p75 = scmp.eq.s32.totalorder %s9, 0
    %p76 = por %p74, %p75
    %p77 = scmp.ne.s32.totalorder %s66, %s69
    %p78 = scmp.eq.s32.totalorder %s14, 3
    %p79 = por %p77, %p78
    %p80 = scmp.ne.s32.totalorder %s69, %s70
    %p81 = scmp.eq.s32.totalorder %s14, 0
    %p82 = por %p80, %p81
    %p83 = scmp.ne.s32.totalorder %s69, %s70
    %p84 = scmp.eq.s32.totalorder %s15, 3
    %p85 = por %p83, %p84
    %p87 = scmp.ne.s32.totalorder %s70, %s86
    %p88 = scmp.eq.s32.totalorder %s15, 0
    %p89 = por %p87, %p88
    %s90 = ssub.s32 %s16, %s35
    %p91 = scmp.eq.s32.totalorder %s90, 0
    %s93 = sadd.s32 %s92, 1
    %s94 = scalar_select %p91, %s92, %s93
    %p97 = pneg %p91
    %p98 = scmp.eq.s32.totalorder %s9, 3
    %p99 = por %p97, %p98
    %p100 = scmp.ne.s32.totalorder %s92, %s95
    %p101 = scmp.eq.s32.totalorder %s9, 0
    %p102 = por %p100, %p101
    %p103 = scmp.ne.s32.totalorder %s92, %s95
    %p104 = scmp.eq.s32.totalorder %s14, 3
    %p105 = por %p103, %p104
    %p106 = scmp.ne.s32.totalorder %s95, %s96
    %p107 = scmp.eq.s32.totalorder %s14, 0
    %p108 = por %p106, %p107
    %p109 = scmp.ne.s32.totalorder %s95, %s96
    %p110 = scmp.eq.s32.totalorder %s15, 3
    %p111 = por %p109, %p110
    %p113 = scmp.ne.s32.totalorder %s96, %s112
    %p114 = scmp.eq.s32.totalorder %s15, 0
    %p115 = por %p113, %p114
    %s116 = ssub.s32 %s18, 1
    %p117 = scmp.gt.s32.totalorder %s116, 0
    %s118 = scalar_select %p117, %s116, 0
    %s119 = ssub.s32 %s27, 1
    %p120 = scmp.gt.s32.totalorder %s119, 0
    %s121 = scalar_select %p120, %s119, 0
    %s122 = ssub.s32 %s16, %s35
    %s123 = ssub.s32 %s17, %s31
    %s124 = sor.u32 %s122, %s123
    %s125 = ssub.s32 %s118, %s121
    %s126 = sor.u32 %s124, %s125
    %p127 = scmp.eq.s32.totalorder %s126, 0
    %s129 = sadd.s32 %s128, 1
    %s130 = scalar_select %p127, %s128, %s129
    %p133 = pneg %p127
    %p134 = scmp.eq.s32.totalorder %s9, 3
    %p135 = por %p133, %p134
    %p136 = scmp.ne.s32.totalorder %s128, %s131
    %p137 = scmp.eq.s32.totalorder %s9, 0
    %p138 = por %p136, %p137
    %p139 = scmp.ne.s32.totalorder %s128, %s131
    %p140 = scmp.eq.s32.totalorder %s14, 3
    %p141 = por %p139, %p140
    %p142 = scmp.ne.s32.totalorder %s131, %s132
    %p143 = scmp.eq.s32.totalorder %s14, 0
    %p144 = por %p142, %p143
    %p145 = scmp.ne.s32.totalorder %s131, %s132
    %p146 = scmp.eq.s32.totalorder %s15, 3
    %p147 = por %p145, %p146
    %p149 = scmp.ne.s32.totalorder %s132, %s148
    %p150 = scmp.eq.s32.totalorder %s15, 0
    %p151 = por %p149, %p150
    %p152 = scmp.le.s32.totalorder 1, %s9
    %p153 = scmp.lt.s32.totalorder %s9, 5
    %p154 = pnand %p152, %p153
    %p155 = pneg %p154
    // Predicated region
    $region9: #{fused_cbam_pairs.1} parent=5 // pred_check
      _
    $region10: #{fused_cbam_pairs.1} parent=5 // pred_check_branch
      %157 = sbr.rel (%p154) target = $region12
    $region11: #{fused_cbam_pairs.1} parent=5 // pred_region
      %s158 = ssub.s32 %s9, 1
    $region12: #{fused_cbam_pairs.1} parent=5 // pred_fallthru
      _
    %p159 = scmp.lt.s32.totalorder %s9, 4
    // Predicated region
    $region13: #{fused_cbam_pairs.1} parent=5 // pred_check
      %p160 = pneg %p159
    $region14: #{fused_cbam_pairs.1} parent=5 // pred_check_branch
      %162 = sbr.rel (%p160) target = $region16
    $region15: #{fused_cbam_pairs.1} parent=5 // pred_region
      // Predicated region
      $region17: #{fused_cbam_pairs.1} parent=15 // pred_check
        %p163 = pneg %p50
      $region18: #{fused_cbam_pairs.1} parent=15 // pred_check_branch
        %165 = sbr.rel (%p163) target = $region20
      $region19: #{fused_cbam_pairs.1} parent=15 // pred_region
        %s166 = smul.u32 2, %s16
        %s167 = smul.u32 2, %s17
        %p168 = scmp.lt.s32.totalorder %s166, 7
        %s169 = scalar_select %p168, %s166, 7
        %p170 = scmp.lt.s32.totalorder %s167, 1
        %s171 = scalar_select %p170, %s167, 1
        %s172 = smul.addr %s171, 8
        %s173 = smul.addr %s169, 16
        %s174 = sadd.s32 %s172, %s173
        %s175 = smul.addr %s174, 8
        %s176 = scalar_lea.vmem %s0, %s175
        %s177 = smul.u32 2, %s16
        %s178 = smul.u32 2, %s17
      $region20: #{fused_cbam_pairs.1} parent=15 // pred_fallthru
        _
      // Predicated region
      $region21: #{fused_cbam_pairs.1} parent=15 // pred_check
        %p179 = pneg %p76
      $region22: #{fused_cbam_pairs.1} parent=15 // pred_check_branch
        %181 = sbr.rel (%p179) target = $region24
      $region23: #{fused_cbam_pairs.1} parent=15 // pred_region
        %s182 = smul.u32 2, %s16
        %p183 = scmp.lt.s32.totalorder %s182, 7
        %s184 = scalar_select %p183, %s182, 7
        %s185 = smul.addr %s184, 8
        %s186 = smul.addr %s185, 8
        %s187 = scalar_lea.vmem %s1, %s186
        %s188 = smul.u32 2, %s16
      $region24: #{fused_cbam_pairs.1} parent=15 // pred_fallthru
        _
      // Predicated region
      $region25: #{fused_cbam_pairs.1} parent=15 // pred_check
        %p189 = pneg %p102
      $region26: #{fused_cbam_pairs.1} parent=15 // pred_check_branch
        %191 = sbr.rel (%p189) target = $region28
      $region27: #{fused_cbam_pairs.1} parent=15 // pred_region
        %s192 = smul.u32 2, %s16
        %p193 = scmp.lt.s32.totalorder %s192, 7
        %s194 = scalar_select %p193, %s192, 7
        %s195 = smul.addr %s194, 4
        %s196 = scalar_lea.vmem %s2, %s195
        %s197 = smul.u32 2, %s16
      $region28: #{fused_cbam_pairs.1} parent=15 // pred_fallthru
        _
    $region16: #{fused_cbam_pairs.1} parent=5 // pred_fallthru
      _
    %p198 = scmp.le.s32.totalorder 1, %s9
    %p199 = scmp.lt.s32.totalorder %s9, 5
    %p200 = pnand %p198, %p199
    %p201 = pneg %p200
    // Predicated region
    $region29: #{fused_cbam_pairs.1} parent=5 // pred_check
      _
    $region30: #{fused_cbam_pairs.1} parent=5 // pred_check_branch
      %203 = sbr.rel (%p200) target = $region32
    $region31: #{fused_cbam_pairs.1} parent=5 // pred_region
      %s204 = ssub.s32 %s9, 1
      %s205 = smul.u32 2, %s19
      %s206 = smul.u32 2, %s20
      %p207 = scmp.lt.s32.totalorder %s205, 7
      %s208 = scalar_select %p207, %s205, 7
      %p209 = scmp.lt.s32.totalorder %s206, 1
      %s210 = scalar_select %p209, %s206, 1
      %s211 = smul.addr %s210, 8
      %s212 = smul.addr %s208, 16
      %s213 = sadd.s32 %s211, %s212
      %s214 = smul.addr %s213, 8
      %s215 = scalar_lea.vmem %s0, %s214
      %p216 = pneg %p56
      %p217 = pneg %p53
      %s218 = smul.u32 2, %s19
      %p219 = scmp.lt.s32.totalorder %s218, 7
      %s220 = scalar_select %p219, %s218, 7
      %s221 = smul.addr %s220, 8
      %s222 = smul.addr %s221, 8
      %s223 = scalar_lea.vmem %s1, %s222
      %p224 = pneg %p82
      %p225 = pneg %p79
      %s226 = smul.u32 2, %s19
      %p227 = scmp.lt.s32.totalorder %s226, 7
      %s228 = scalar_select %p227, %s226, 7
      %s229 = smul.addr %s228, 4
      %s230 = scalar_lea.vmem %s2, %s229
      %p231 = pneg %p108
      %p232 = pneg %p105
      %p233 = pneg %p144
      %p234 = pneg %p141
      %s235 = ssub.s32 %s21, 1
      %p236 = scmp.gt.s32.totalorder %s235, 0
      %s237 = scalar_select %p236, %s235, 0
      %s238 = smul.u32 2, %s19
      %s239 = smul.u32 2, %s20
      %p240 = scmp.lt.s32.totalorder %s238, 7
      %s241 = scalar_select %p240, %s238, 7
      %p242 = scmp.lt.s32.totalorder %s239, 1
      %s243 = scalar_select %p242, %s239, 1
      %p244 = scmp.lt.s32.totalorder %s237, 0
      %s245 = scalar_select %p244, %s237, 0
      %s246 = smul.addr %s243, 8
      %s247 = sadd.s32 %s245, %s246
      %s248 = smul.addr %s241, 16
      %s249 = sadd.s32 %s247, %s248
      %s250 = smul.addr %s249, 8
      %s251 = scalar_lea.vmem %s3, %s250
      %s252 = smul.u32 2, %s19
      %s253 = smul.u32 2, %s20
      %p254 = scmp.lt.s32.totalorder %s252, 7
      %s255 = scalar_select %p254, %s252, 7
      %p256 = scmp.lt.s32.totalorder %s253, 1
      %s257 = scalar_select %p256, %s253, 1
      %s258 = smul.addr %s257, 8
      %s259 = smul.addr %s255, 16
      %s260 = sadd.s32 %s258, %s259
      %s261 = smul.addr %s260, 8
      %s262 = scalar_lea.vmem %s0, %s261
      %s263 = smul.u32 2, %s19
      %s264 = smul.u32 2, %s20
      %s265 = smul.u32 2, %s19
      %p266 = scmp.lt.s32.totalorder %s265, 7
      %s267 = scalar_select %p266, %s265, 7
      %s268 = smul.addr %s267, 8
      %s269 = smul.addr %s268, 8
      %s270 = scalar_lea.vmem %s1, %s269
      %s271 = smul.u32 2, %s19
      %s272 = smul.u32 2, %s19
      %p273 = scmp.lt.s32.totalorder %s272, 7
      %s274 = scalar_select %p273, %s272, 7
      %s275 = smul.addr %s274, 4
      %s276 = scalar_lea.vmem %s2, %s275
      %s277 = smul.u32 2, %s19
      %s278 = ssub.s32 %s21, 1
      %p279 = scmp.gt.s32.totalorder %s278, 0
      %s280 = scalar_select %p279, %s278, 0
      %s281 = smul.u32 2, %s19
      %s282 = smul.u32 2, %s20
      %p283 = scmp.lt.s32.totalorder %s281, 7
      %s284 = scalar_select %p283, %s281, 7
      %p285 = scmp.lt.s32.totalorder %s282, 1
      %s286 = scalar_select %p285, %s282, 1
      %p287 = scmp.lt.s32.totalorder %s280, 0
      %s288 = scalar_select %p287, %s280, 0
      %s289 = smul.addr %s286, 8
      %s290 = sadd.s32 %s288, %s289
      %s291 = smul.addr %s284, 16
      %s292 = sadd.s32 %s290, %s291
      %s293 = smul.addr %s292, 8
      %s294 = scalar_lea.vmem %s3, %s293
      %s295 = ssub.s32 %s21, 1
      %p296 = scmp.gt.s32.totalorder %s295, 0
      %s297 = scalar_select %p296, %s295, 0
      %s298 = smul.u32 2, %s19
      %s299 = smul.u32 2, %s20
      %vm300 = vcmask 523264
      %301 = vst.msk [vmem:[#allocation2] sm:$0xff] %vm300, 0.0
      %302 = vst.msk [vmem:[#allocation2 + $0x8] sm:$0xff] %vm300, 0.0
      %303 = vst.msk [vmem:[#allocation2 + $0x10] sm:$0xff] %vm300, 0.0
      %304 = vst.msk [vmem:[#allocation2 + $0x18] sm:$0xff] %vm300, 0.0
      %305 = vst.msk [vmem:[#allocation2 + $0x20] sm:$0xff] %vm300, 0.0
      %306 = vst.msk [vmem:[#allocation2 + $0x28] sm:$0xff] %vm300, 0.0
      %307 = vst.msk [vmem:[#allocation2 + $0x30] sm:$0xff] %vm300, 0.0
      %308 = vst.msk [vmem:[#allocation2 + $0x38] sm:$0xff] %vm300, 0.0
      %309 = vst.msk [vmem:[#allocation2 + $0x40] sm:$0xff] %vm300, 0.0
      %310 = vst.msk [vmem:[#allocation2 + $0x48] sm:$0xff] %vm300, 0.0
      %311 = vst.msk [vmem:[#allocation2 + $0x50] sm:$0xff] %vm300, 0.0
      %312 = vst.msk [vmem:[#allocation2 + $0x58] sm:$0xff] %vm300, 0.0
      %313 = vst.msk [vmem:[#allocation2 + $0x60] sm:$0xff] %vm300, 0.0
      %314 = vst.msk [vmem:[#allocation2 + $0x68] sm:$0xff] %vm300, 0.0
      %315 = vst.msk [vmem:[#allocation2 + $0x70] sm:$0xff] %vm300, 0.0
      %316 = vst.msk [vmem:[#allocation2 + $0x78] sm:$0xff] %vm300, 0.0
      %317 = vst.msk [vmem:[#allocation2 + $0x80] sm:$0xff] %vm300, 0.0
      %318 = vst.msk [vmem:[#allocation2 + $0x88] sm:$0xff] %vm300, 0.0
      %319 = vst.msk [vmem:[#allocation2 + $0x90] sm:$0xff] %vm300, 0.0
      %320 = vst.msk [vmem:[#allocation2 + $0x98] sm:$0xff] %vm300, 0.0
      %321 = vst.msk [vmem:[#allocation2 + $0xa0] sm:$0xff] %vm300, 0.0
      %322 = vst.msk [vmem:[#allocation2 + $0xa8] sm:$0xff] %vm300, 0.0
      %323 = vst.msk [vmem:[#allocation2 + $0xb0] sm:$0xff] %vm300, 0.0
      %324 = vst.msk [vmem:[#allocation2 + $0xb8] sm:$0xff] %vm300, 0.0
      %325 = vst.msk [vmem:[#allocation2 + $0xc0] sm:$0xff] %vm300, 0.0
      %326 = vst.msk [vmem:[#allocation2 + $0xc8] sm:$0xff] %vm300, 0.0
      %327 = vst.msk [vmem:[#allocation2 + $0xd0] sm:$0xff] %vm300, 0.0
      %328 = vst.msk [vmem:[#allocation2 + $0xd8] sm:$0xff] %vm300, 0.0
      %329 = vst.msk [vmem:[#allocation2 + $0xe0] sm:$0xff] %vm300, 0.0
      %330 = vst.msk [vmem:[#allocation2 + $0xe8] sm:$0xff] %vm300, 0.0
      %331 = vst.msk [vmem:[#allocation2 + $0xf0] sm:$0xff] %vm300, 0.0
      %332 = vst.msk [vmem:[#allocation2 + $0xf8] sm:$0xff] %vm300, 0.0
      %333 = vst.msk [vmem:[#allocation3] sm:$0xff] %vm300, -inf
      %334 = vst.msk [vmem:[#allocation3 + $0x8] sm:$0xff] %vm300, -inf
      %335 = vst.msk [vmem:[#allocation3 + $0x10] sm:$0xff] %vm300, -inf
      %336 = vst.msk [vmem:[#allocation3 + $0x18] sm:$0xff] %vm300, -inf
      %337 = vst.msk [vmem:[#allocation3 + $0x20] sm:$0xff] %vm300, -inf
      %338 = vst.msk [vmem:[#allocation3 + $0x28] sm:$0xff] %vm300, -inf
      %339 = vst.msk [vmem:[#allocation3 + $0x30] sm:$0xff] %vm300, -inf
      %340 = vst.msk [vmem:[#allocation3 + $0x38] sm:$0xff] %vm300, -inf
      %341 = vst.msk [vmem:[#allocation3 + $0x40] sm:$0xff] %vm300, -inf
      %342 = vst.msk [vmem:[#allocation3 + $0x48] sm:$0xff] %vm300, -inf
      %343 = vst.msk [vmem:[#allocation3 + $0x50] sm:$0xff] %vm300, -inf
      %344 = vst.msk [vmem:[#allocation3 + $0x58] sm:$0xff] %vm300, -inf
      %345 = vst.msk [vmem:[#allocation3 + $0x60] sm:$0xff] %vm300, -inf
      %346 = vst.msk [vmem:[#allocation3 + $0x68] sm:$0xff] %vm300, -inf
      %347 = vst.msk [vmem:[#allocation3 + $0x70] sm:$0xff] %vm300, -inf
      %348 = vst.msk [vmem:[#allocation3 + $0x78] sm:$0xff] %vm300, -inf
      %349 = vst.msk [vmem:[#allocation3 + $0x80] sm:$0xff] %vm300, -inf
      %350 = vst.msk [vmem:[#allocation3 + $0x88] sm:$0xff] %vm300, -inf
      %351 = vst.msk [vmem:[#allocation3 + $0x90] sm:$0xff] %vm300, -inf
      %352 = vst.msk [vmem:[#allocation3 + $0x98] sm:$0xff] %vm300, -inf
      %353 = vst.msk [vmem:[#allocation3 + $0xa0] sm:$0xff] %vm300, -inf
      %354 = vst.msk [vmem:[#allocation3 + $0xa8] sm:$0xff] %vm300, -inf
      %355 = vst.msk [vmem:[#allocation3 + $0xb0] sm:$0xff] %vm300, -inf
      %356 = vst.msk [vmem:[#allocation3 + $0xb8] sm:$0xff] %vm300, -inf
      %357 = vst.msk [vmem:[#allocation3 + $0xc0] sm:$0xff] %vm300, -inf
      %358 = vst.msk [vmem:[#allocation3 + $0xc8] sm:$0xff] %vm300, -inf
      %359 = vst.msk [vmem:[#allocation3 + $0xd0] sm:$0xff] %vm300, -inf
      %360 = vst.msk [vmem:[#allocation3 + $0xd8] sm:$0xff] %vm300, -inf
      %361 = vst.msk [vmem:[#allocation3 + $0xe0] sm:$0xff] %vm300, -inf
      %362 = vst.msk [vmem:[#allocation3 + $0xe8] sm:$0xff] %vm300, -inf
      %363 = vst.msk [vmem:[#allocation3 + $0xf0] sm:$0xff] %vm300, -inf
      %364 = vst.msk [vmem:[#allocation3 + $0xf8] sm:$0xff] %vm300, -inf
      %v365 = vld [vmem:[#allocation2] sm:$0xff]
      %v366 = vld [vmem:[#allocation2 + $0x8] sm:$0xff]
      %v367 = vld [vmem:[#allocation2 + $0x10] sm:$0xff]
      %v368 = vld [vmem:[#allocation2 + $0x18] sm:$0xff]
      %v369 = vld [vmem:[#allocation3] sm:$0xff]
      %v370 = vld [vmem:[#allocation3 + $0x8] sm:$0xff]
      %v371 = vld [vmem:[#allocation3 + $0x10] sm:$0xff]
      %v372 = vld [vmem:[#allocation3 + $0x18] sm:$0xff]
      %v373 = vld [vmem:[%s262] sm:$0xff]
      %v374 = vld [vmem:[%s262 + $0x8] sm:$0xff]
      %v375 = vld [vmem:[%s262 + $0x10] sm:$0xff]
      %v376 = vld [vmem:[%s262 + $0x18] sm:$0xff]
      %v377 = vadd.f32 %v365, %v373
      %v378 = vadd.f32 %v366, %v374
      %v379 = vadd.f32 %v367, %v375
      %v380 = vadd.f32 %v368, %v376
      %v381 = vmax.f32 %v369, %v373
      %v382 = vmax.f32 %v370, %v374
      %v383 = vmax.f32 %v371, %v375
      %v384 = vmax.f32 %v372, %v376
      %385 = vst.msk [vmem:[#allocation2] sm:$0xff] %vm300, %v377
      %386 = vst.msk [vmem:[#allocation2 + $0x8] sm:$0xff] %vm300, %v378
      %387 = vst.msk [vmem:[#allocation2 + $0x10] sm:$0xff] %vm300, %v379
      %388 = vst.msk [vmem:[#allocation2 + $0x18] sm:$0xff] %vm300, %v380
      %389 = vst.msk [vmem:[#allocation3] sm:$0xff] %vm300, %v381
      %390 = vst.msk [vmem:[#allocation3 + $0x8] sm:$0xff] %vm300, %v382
      %391 = vst.msk [vmem:[#allocation3 + $0x10] sm:$0xff] %vm300, %v383
      %392 = vst.msk [vmem:[#allocation3 + $0x18] sm:$0xff] %vm300, %v384
      %v393 = vld [vmem:[#allocation2 + $0x20] sm:$0xff]
      %v394 = vld [vmem:[#allocation2 + $0x28] sm:$0xff]
      %v395 = vld [vmem:[#allocation2 + $0x30] sm:$0xff]
      %v396 = vld [vmem:[#allocation2 + $0x38] sm:$0xff]
      %v397 = vld [vmem:[#allocation3 + $0x20] sm:$0xff]
      %v398 = vld [vmem:[#allocation3 + $0x28] sm:$0xff]
      %v399 = vld [vmem:[#allocation3 + $0x30] sm:$0xff]
      %v400 = vld [vmem:[#allocation3 + $0x38] sm:$0xff]
      %v401 = vld [vmem:[%s262 + $0x20] sm:$0xff]
      %v402 = vld [vmem:[%s262 + $0x28] sm:$0xff]
      %v403 = vld [vmem:[%s262 + $0x30] sm:$0xff]
      %v404 = vld [vmem:[%s262 + $0x38] sm:$0xff]
      %v405 = vadd.f32 %v393, %v401
      %v406 = vadd.f32 %v394, %v402
      %v407 = vadd.f32 %v395, %v403
      %v408 = vadd.f32 %v396, %v404
      %v409 = vmax.f32 %v397, %v401
      %v410 = vmax.f32 %v398, %v402
      %v411 = vmax.f32 %v399, %v403
      %v412 = vmax.f32 %v400, %v404
      %413 = vst.msk [vmem:[#allocation2 + $0x20] sm:$0xff] %vm300, %v405
      %414 = vst.msk [vmem:[#allocation2 + $0x28] sm:$0xff] %vm300, %v406
      %415 = vst.msk [vmem:[#allocation2 + $0x30] sm:$0xff] %vm300, %v407
      %416 = vst.msk [vmem:[#allocation2 + $0x38] sm:$0xff] %vm300, %v408
      %417 = vst.msk [vmem:[#allocation3 + $0x20] sm:$0xff] %vm300, %v409
      %418 = vst.msk [vmem:[#allocation3 + $0x28] sm:$0xff] %vm300, %v410
      %419 = vst.msk [vmem:[#allocation3 + $0x30] sm:$0xff] %vm300, %v411
      %420 = vst.msk [vmem:[#allocation3 + $0x38] sm:$0xff] %vm300, %v412
      %s421 = scalar_lea.vmem [#allocation2], 64
      %v422 = vld [vmem:[%s421] sm:$0xff]
      %v423 = vld [vmem:[%s421 + $0x8] sm:$0xff]
      %v424 = vld [vmem:[%s421 + $0x10] sm:$0xff]
      %v425 = vld [vmem:[%s421 + $0x18] sm:$0xff]
      %s426 = scalar_lea.vmem [#allocation3], 64
      %v427 = vld [vmem:[%s426] sm:$0xff]
      %v428 = vld [vmem:[%s426 + $0x8] sm:$0xff]
      %v429 = vld [vmem:[%s426 + $0x10] sm:$0xff]
      %v430 = vld [vmem:[%s426 + $0x18] sm:$0xff]
      %s431 = scalar_lea.vmem %s262, 64
      %v432 = vld [vmem:[%s431] sm:$0xff]
      %v433 = vld [vmem:[%s431 + $0x8] sm:$0xff]
      %v434 = vld [vmem:[%s431 + $0x10] sm:$0xff]
      %v435 = vld [vmem:[%s431 + $0x18] sm:$0xff]
      %v436 = vadd.f32 %v422, %v432
      %v437 = vadd.f32 %v423, %v433
      %v438 = vadd.f32 %v424, %v434
      %v439 = vadd.f32 %v425, %v435
      %v440 = vmax.f32 %v427, %v432
      %v441 = vmax.f32 %v428, %v433
      %v442 = vmax.f32 %v429, %v434
      %v443 = vmax.f32 %v430, %v435
      %444 = vst.msk [vmem:[%s421] sm:$0xff] %vm300, %v436
      %445 = vst.msk [vmem:[%s421 + $0x8] sm:$0xff] %vm300, %v437
      %446 = vst.msk [vmem:[%s421 + $0x10] sm:$0xff] %vm300, %v438
      %447 = vst.msk [vmem:[%s421 + $0x18] sm:$0xff] %vm300, %v439
      %448 = vst.msk [vmem:[%s426] sm:$0xff] %vm300, %v440
      %449 = vst.msk [vmem:[%s426 + $0x8] sm:$0xff] %vm300, %v441
      %450 = vst.msk [vmem:[%s426 + $0x10] sm:$0xff] %vm300, %v442
      %451 = vst.msk [vmem:[%s426 + $0x18] sm:$0xff] %vm300, %v443
      %v452 = vld [vmem:[%s421 + $0x20] sm:$0xff]
      %v453 = vld [vmem:[%s421 + $0x28] sm:$0xff]
      %v454 = vld [vmem:[%s421 + $0x30] sm:$0xff]
      %v455 = vld [vmem:[%s421 + $0x38] sm:$0xff]
      %v456 = vld [vmem:[%s426 + $0x20] sm:$0xff]
      %v457 = vld [vmem:[%s426 + $0x28] sm:$0xff]
      %v458 = vld [vmem:[%s426 + $0x30] sm:$0xff]
      %v459 = vld [vmem:[%s426 + $0x38] sm:$0xff]
      %v460 = vld [vmem:[%s431 + $0x20] sm:$0xff]
      %v461 = vld [vmem:[%s431 + $0x28] sm:$0xff]
      %v462 = vld [vmem:[%s431 + $0x30] sm:$0xff]
      %v463 = vld [vmem:[%s431 + $0x38] sm:$0xff]
      %v464 = vadd.f32 %v452, %v460
      %v465 = vadd.f32 %v453, %v461
      %v466 = vadd.f32 %v454, %v462
      %v467 = vadd.f32 %v455, %v463
      %v468 = vmax.f32 %v456, %v460
      %v469 = vmax.f32 %v457, %v461
      %v470 = vmax.f32 %v458, %v462
      %v471 = vmax.f32 %v459, %v463
      %472 = vst.msk [vmem:[%s421 + $0x20] sm:$0xff] %vm300, %v464
      %473 = vst.msk [vmem:[%s421 + $0x28] sm:$0xff] %vm300, %v465
      %474 = vst.msk [vmem:[%s421 + $0x30] sm:$0xff] %vm300, %v466
      %475 = vst.msk [vmem:[%s421 + $0x38] sm:$0xff] %vm300, %v467
      %476 = vst.msk [vmem:[%s426 + $0x20] sm:$0xff] %vm300, %v468
      %477 = vst.msk [vmem:[%s426 + $0x28] sm:$0xff] %vm300, %v469
      %478 = vst.msk [vmem:[%s426 + $0x30] sm:$0xff] %vm300, %v470
      %479 = vst.msk [vmem:[%s426 + $0x38] sm:$0xff] %vm300, %v471
      %s480 = scalar_lea.vmem [#allocation2], 128
      %v481 = vld [vmem:[%s480] sm:$0xff]
      %v482 = vld [vmem:[%s480 + $0x8] sm:$0xff]
      %v483 = vld [vmem:[%s480 + $0x10] sm:$0xff]
      %v484 = vld [vmem:[%s480 + $0x18] sm:$0xff]
      %s485 = scalar_lea.vmem [#allocation3], 128
      %v486 = vld [vmem:[%s485] sm:$0xff]
      %v487 = vld [vmem:[%s485 + $0x8] sm:$0xff]
      %v488 = vld [vmem:[%s485 + $0x10] sm:$0xff]
      %v489 = vld [vmem:[%s485 + $0x18] sm:$0xff]
      %s490 = scalar_lea.vmem %s262, 128
      %v491 = vld [vmem:[%s490] sm:$0xff]
      %v492 = vld [vmem:[%s490 + $0x8] sm:$0xff]
      %v493 = vld [vmem:[%s490 + $0x10] sm:$0xff]
      %v494 = vld [vmem:[%s490 + $0x18] sm:$0xff]
      %v495 = vadd.f32 %v481, %v491
      %v496 = vadd.f32 %v482, %v492
      %v497 = vadd.f32 %v483, %v493
      %v498 = vadd.f32 %v484, %v494
      %v499 = vmax.f32 %v486, %v491
      %v500 = vmax.f32 %v487, %v492
      %v501 = vmax.f32 %v488, %v493
      %v502 = vmax.f32 %v489, %v494
      %503 = vst.msk [vmem:[%s480] sm:$0xff] %vm300, %v495
      %504 = vst.msk [vmem:[%s480 + $0x8] sm:$0xff] %vm300, %v496
      %505 = vst.msk [vmem:[%s480 + $0x10] sm:$0xff] %vm300, %v497
      %506 = vst.msk [vmem:[%s480 + $0x18] sm:$0xff] %vm300, %v498
      %507 = vst.msk [vmem:[%s485] sm:$0xff] %vm300, %v499
      %508 = vst.msk [vmem:[%s485 + $0x8] sm:$0xff] %vm300, %v500
      %509 = vst.msk [vmem:[%s485 + $0x10] sm:$0xff] %vm300, %v501
      %510 = vst.msk [vmem:[%s485 + $0x18] sm:$0xff] %vm300, %v502
      %v511 = vld [vmem:[%s480 + $0x20] sm:$0xff]
      %v512 = vld [vmem:[%s480 + $0x28] sm:$0xff]
      %v513 = vld [vmem:[%s480 + $0x30] sm:$0xff]
      %v514 = vld [vmem:[%s480 + $0x38] sm:$0xff]
      %v515 = vld [vmem:[%s485 + $0x20] sm:$0xff]
      %v516 = vld [vmem:[%s485 + $0x28] sm:$0xff]
      %v517 = vld [vmem:[%s485 + $0x30] sm:$0xff]
      %v518 = vld [vmem:[%s485 + $0x38] sm:$0xff]
      %v519 = vld [vmem:[%s490 + $0x20] sm:$0xff]
      %v520 = vld [vmem:[%s490 + $0x28] sm:$0xff]
      %v521 = vld [vmem:[%s490 + $0x30] sm:$0xff]
      %v522 = vld [vmem:[%s490 + $0x38] sm:$0xff]
      %v523 = vadd.f32 %v511, %v519
      %v524 = vadd.f32 %v512, %v520
      %v525 = vadd.f32 %v513, %v521
      %v526 = vadd.f32 %v514, %v522
      %v527 = vmax.f32 %v515, %v519
      %v528 = vmax.f32 %v516, %v520
      %v529 = vmax.f32 %v517, %v521
      %v530 = vmax.f32 %v518, %v522
      %531 = vst.msk [vmem:[%s480 + $0x20] sm:$0xff] %vm300, %v523
      %532 = vst.msk [vmem:[%s480 + $0x28] sm:$0xff] %vm300, %v524
      %533 = vst.msk [vmem:[%s480 + $0x30] sm:$0xff] %vm300, %v525
      %534 = vst.msk [vmem:[%s480 + $0x38] sm:$0xff] %vm300, %v526
      %535 = vst.msk [vmem:[%s485 + $0x20] sm:$0xff] %vm300, %v527
      %536 = vst.msk [vmem:[%s485 + $0x28] sm:$0xff] %vm300, %v528
      %537 = vst.msk [vmem:[%s485 + $0x30] sm:$0xff] %vm300, %v529
      %538 = vst.msk [vmem:[%s485 + $0x38] sm:$0xff] %vm300, %v530
      %s539 = scalar_lea.vmem [#allocation2], 192
      %v540 = vld [vmem:[%s539] sm:$0xff]
      %v541 = vld [vmem:[%s539 + $0x8] sm:$0xff]
      %v542 = vld [vmem:[%s539 + $0x10] sm:$0xff]
      %v543 = vld [vmem:[%s539 + $0x18] sm:$0xff]
      %s544 = scalar_lea.vmem [#allocation3], 192
      %v545 = vld [vmem:[%s544] sm:$0xff]
      %v546 = vld [vmem:[%s544 + $0x8] sm:$0xff]
      %v547 = vld [vmem:[%s544 + $0x10] sm:$0xff]
      %v548 = vld [vmem:[%s544 + $0x18] sm:$0xff]
      %s549 = scalar_lea.vmem %s262, 192
      %v550 = vld [vmem:[%s549] sm:$0xff]
      %v551 = vld [vmem:[%s549 + $0x8] sm:$0xff]
      %v552 = vld [vmem:[%s549 + $0x10] sm:$0xff]
      %v553 = vld [vmem:[%s549 + $0x18] sm:$0xff]
      %v554 = vadd.f32 %v540, %v550
      %v555 = vadd.f32 %v541, %v551
      %v556 = vadd.f32 %v542, %v552
      %v557 = vadd.f32 %v543, %v553
      %v558 = vmax.f32 %v545, %v550
      %v559 = vmax.f32 %v546, %v551
      %v560 = vmax.f32 %v547, %v552
      %v561 = vmax.f32 %v548, %v553
      %562 = vst.msk [vmem:[%s539] sm:$0xff] %vm300, %v554
      %563 = vst.msk [vmem:[%s539 + $0x8] sm:$0xff] %vm300, %v555
      %564 = vst.msk [vmem:[%s539 + $0x10] sm:$0xff] %vm300, %v556
      %565 = vst.msk [vmem:[%s539 + $0x18] sm:$0xff] %vm300, %v557
      %566 = vst.msk [vmem:[%s544] sm:$0xff] %vm300, %v558
      %567 = vst.msk [vmem:[%s544 + $0x8] sm:$0xff] %vm300, %v559
      %568 = vst.msk [vmem:[%s544 + $0x10] sm:$0xff] %vm300, %v560
      %569 = vst.msk [vmem:[%s544 + $0x18] sm:$0xff] %vm300, %v561
      %v570 = vld [vmem:[%s539 + $0x20] sm:$0xff]
      %v571 = vld [vmem:[%s539 + $0x28] sm:$0xff]
      %v572 = vld [vmem:[%s539 + $0x30] sm:$0xff]
      %v573 = vld [vmem:[%s539 + $0x38] sm:$0xff]
      %v574 = vld [vmem:[%s544 + $0x20] sm:$0xff]
      %v575 = vld [vmem:[%s544 + $0x28] sm:$0xff]
      %v576 = vld [vmem:[%s544 + $0x30] sm:$0xff]
      %v577 = vld [vmem:[%s544 + $0x38] sm:$0xff]
      %v578 = vld [vmem:[%s549 + $0x20] sm:$0xff]
      %v579 = vld [vmem:[%s549 + $0x28] sm:$0xff]
      %v580 = vld [vmem:[%s549 + $0x30] sm:$0xff]
      %v581 = vld [vmem:[%s549 + $0x38] sm:$0xff]
      %v582 = vadd.f32 %v570, %v578
      %v583 = vadd.f32 %v571, %v579
      %v584 = vadd.f32 %v572, %v580
      %v585 = vadd.f32 %v573, %v581
      %v586 = vmax.f32 %v574, %v578
      %v587 = vmax.f32 %v575, %v579
      %v588 = vmax.f32 %v576, %v580
      %v589 = vmax.f32 %v577, %v581
      %590 = vst.msk [vmem:[%s539 + $0x20] sm:$0xff] %vm300, %v582
      %591 = vst.msk [vmem:[%s539 + $0x28] sm:$0xff] %vm300, %v583
      %592 = vst.msk [vmem:[%s539 + $0x30] sm:$0xff] %vm300, %v584
      %593 = vst.msk [vmem:[%s539 + $0x38] sm:$0xff] %vm300, %v585
      %594 = vst.msk [vmem:[%s544 + $0x20] sm:$0xff] %vm300, %v586
      %595 = vst.msk [vmem:[%s544 + $0x28] sm:$0xff] %vm300, %v587
      %596 = vst.msk [vmem:[%s544 + $0x30] sm:$0xff] %vm300, %v588
      %597 = vst.msk [vmem:[%s544 + $0x38] sm:$0xff] %vm300, %v589
      %v598 = vld [vmem:[#allocation2] sm:$0xff]
      %v599 = vld [vmem:[#allocation2 + $0x8] sm:$0xff]
      %v600 = vld [vmem:[#allocation2 + $0x10] sm:$0xff]
      %v601 = vld [vmem:[#allocation2 + $0x18] sm:$0xff]
      %v602 = vld [vmem:[#allocation2 + $0x20] sm:$0xff]
      %v603 = vld [vmem:[#allocation2 + $0x28] sm:$0xff]
      %v604 = vld [vmem:[#allocation2 + $0x30] sm:$0xff]
      %v605 = vld [vmem:[#allocation2 + $0x38] sm:$0xff]
      %v606 = vld [vmem:[#allocation2 + $0x40] sm:$0xff]
      %v607 = vld [vmem:[#allocation2 + $0x48] sm:$0xff]
      %v608 = vld [vmem:[#allocation2 + $0x50] sm:$0xff]
      %v609 = vld [vmem:[#allocation2 + $0x58] sm:$0xff]
      %v610 = vld [vmem:[#allocation2 + $0x60] sm:$0xff]
      %v611 = vld [vmem:[#allocation2 + $0x68] sm:$0xff]
      %v612 = vld [vmem:[#allocation2 + $0x70] sm:$0xff]
      %v613 = vld [vmem:[#allocation2 + $0x78] sm:$0xff]
      %v614 = vsel %vm300, %v598, 0.0
      %615 = vadd.xlane.f32.xlu0 %v614
      %v616 = vpop.xlane.xlu0 %615
      %v617 = vsel %vm300, %v599, 0.0
      %618 = vadd.xlane.f32.xlu0 %v617
      %v619 = vpop.xlane.xlu0 %618
      %v620 = vsel %vm300, %v600, 0.0
      %621 = vadd.xlane.f32.xlu0 %v620
      %v622 = vpop.xlane.xlu0 %621
      %v623 = vsel %vm300, %v601, 0.0
      %624 = vadd.xlane.f32.xlu0 %v623
      %v625 = vpop.xlane.xlu0 %624
      %v626 = vsel %vm300, %v602, 0.0
      %627 = vadd.xlane.f32.xlu0 %v626
      %v628 = vpop.xlane.xlu0 %627
      %v629 = vsel %vm300, %v603, 0.0
      %630 = vadd.xlane.f32.xlu0 %v629
      %v631 = vpop.xlane.xlu0 %630
      %v632 = vsel %vm300, %v604, 0.0
      %633 = vadd.xlane.f32.xlu0 %v632
      %v634 = vpop.xlane.xlu0 %633
      %v635 = vsel %vm300, %v605, 0.0
      %636 = vadd.xlane.f32.xlu0 %v635
      %v637 = vpop.xlane.xlu0 %636
      %v638 = vsel %vm300, %v606, 0.0
      %639 = vadd.xlane.f32.xlu0 %v638
      %v640 = vpop.xlane.xlu0 %639
      %v641 = vsel %vm300, %v607, 0.0
      %642 = vadd.xlane.f32.xlu0 %v641
      %v643 = vpop.xlane.xlu0 %642
      %v644 = vsel %vm300, %v608, 0.0
      %645 = vadd.xlane.f32.xlu0 %v644
      %v646 = vpop.xlane.xlu0 %645
      %v647 = vsel %vm300, %v609, 0.0
      %648 = vadd.xlane.f32.xlu0 %v647
      %v649 = vpop.xlane.xlu0 %648
      %v650 = vsel %vm300, %v610, 0.0
      %651 = vadd.xlane.f32.xlu0 %v650
      %v652 = vpop.xlane.xlu0 %651
      %v653 = vsel %vm300, %v611, 0.0
      %654 = vadd.xlane.f32.xlu0 %v653
      %v655 = vpop.xlane.xlu0 %654
      %v656 = vsel %vm300, %v612, 0.0
      %657 = vadd.xlane.f32.xlu0 %v656
      %v658 = vpop.xlane.xlu0 %657
      %v659 = vsel %vm300, %v613, 0.0
      %660 = vadd.xlane.f32.xlu0 %v659
      %v661 = vpop.xlane.xlu0 %660
      %v662 = vmul.f32 %v616, 0.015625
      %v663 = vmul.f32 %v619, 0.015625
      %v664 = vmul.f32 %v622, 0.015625
      %v665 = vmul.f32 %v625, 0.015625
      %v666 = vmul.f32 %v628, 0.015625
      %v667 = vmul.f32 %v631, 0.015625
      %v668 = vmul.f32 %v634, 0.015625
      %v669 = vmul.f32 %v637, 0.015625
      %v670 = vmul.f32 %v640, 0.015625
      %v671 = vmul.f32 %v643, 0.015625
      %v672 = vmul.f32 %v646, 0.015625
      %v673 = vmul.f32 %v649, 0.015625
      %v674 = vmul.f32 %v652, 0.015625
      %v675 = vmul.f32 %v655, 0.015625
      %v676 = vmul.f32 %v658, 0.015625
      %v677 = vmul.f32 %v661, 0.015625
      %v678 = vld [vmem:[#allocation3] sm:$0xff]
      %v679 = vld [vmem:[#allocation3 + $0x8] sm:$0xff]
      %v680 = vld [vmem:[#allocation3 + $0x10] sm:$0xff]
      %v681 = vld [vmem:[#allocation3 + $0x18] sm:$0xff]
      %v682 = vld [vmem:[#allocation3 + $0x20] sm:$0xff]
      %v683 = vld [vmem:[#allocation3 + $0x28] sm:$0xff]
      %v684 = vld [vmem:[#allocation3 + $0x30] sm:$0xff]
      %v685 = vld [vmem:[#allocation3 + $0x38] sm:$0xff]
      %v686 = vld [vmem:[#allocation3 + $0x40] sm:$0xff]
      %v687 = vld [vmem:[#allocation3 + $0x48] sm:$0xff]
      %v688 = vld [vmem:[#allocation3 + $0x50] sm:$0xff]
      %v689 = vld [vmem:[#allocation3 + $0x58] sm:$0xff]
      %v690 = vld [vmem:[#allocation3 + $0x60] sm:$0xff]
      %v691 = vld [vmem:[#allocation3 + $0x68] sm:$0xff]
      %v692 = vld [vmem:[#allocation3 + $0x70] sm:$0xff]
      %v693 = vld [vmem:[#allocation3 + $0x78] sm:$0xff]
      %v694 = vsel %vm300, %v678, -inf
      %695 = vmax.xlane.f32.xlu0 %v694
      %v696 = vpop.xlane.xlu0 %695
      %v697 = vsel %vm300, %v679, -inf
      %698 = vmax.xlane.f32.xlu0 %v697
      %v699 = vpop.xlane.xlu0 %698
      %v700 = vsel %vm300, %v680, -inf
      %701 = vmax.xlane.f32.xlu0 %v700
      %v702 = vpop.xlane.xlu0 %701
      %v703 = vsel %vm300, %v681, -inf
      %704 = vmax.xlane.f32.xlu0 %v703
      %v705 = vpop.xlane.xlu0 %704
      %v706 = vsel %vm300, %v682, -inf
      %707 = vmax.xlane.f32.xlu0 %v706
      %v708 = vpop.xlane.xlu0 %707
      %v709 = vsel %vm300, %v683, -inf
      %710 = vmax.xlane.f32.xlu0 %v709
      %v711 = vpop.xlane.xlu0 %710
      %v712 = vsel %vm300, %v684, -inf
      %713 = vmax.xlane.f32.xlu0 %v712
      %v714 = vpop.xlane.xlu0 %713
      %v715 = vsel %vm300, %v685, -inf
      %716 = vmax.xlane.f32.xlu0 %v715
      %v717 = vpop.xlane.xlu0 %716
      %v718 = vsel %vm300, %v686, -inf
      %719 = vmax.xlane.f32.xlu0 %v718
      %v720 = vpop.xlane.xlu0 %719
      %v721 = vsel %vm300, %v687, -inf
      %722 = vmax.xlane.f32.xlu0 %v721
      %v723 = vpop.xlane.xlu0 %722
      %v724 = vsel %vm300, %v688, -inf
      %725 = vmax.xlane.f32.xlu0 %v724
      %v726 = vpop.xlane.xlu0 %725
      %v727 = vsel %vm300, %v689, -inf
      %728 = vmax.xlane.f32.xlu0 %v727
      %v729 = vpop.xlane.xlu0 %728
      %v730 = vsel %vm300, %v690, -inf
      %731 = vmax.xlane.f32.xlu0 %v730
      %v732 = vpop.xlane.xlu0 %731
      %v733 = vsel %vm300, %v691, -inf
      %734 = vmax.xlane.f32.xlu0 %v733
      %v735 = vpop.xlane.xlu0 %734
      %v736 = vsel %vm300, %v692, -inf
      %737 = vmax.xlane.f32.xlu0 %v736
      %v738 = vpop.xlane.xlu0 %737
      %v739 = vsel %vm300, %v693, -inf
      %740 = vmax.xlane.f32.xlu0 %v739
      %v741 = vpop.xlane.xlu0 %740
      %v742 = vld [vmem:[%s270] sm:$0xff]
      %v743 = vld [vmem:[%s270 + $0x8] sm:$0xff]
      %v744 = vld [vmem:[%s270 + $0x10] sm:$0xff]
      %v745 = vld [vmem:[%s270 + $0x18] sm:$0xff]
      %v746 = vld [vmem:[%s270 + $0x20] sm:$0xff]
      %v747 = vld [vmem:[%s270 + $0x28] sm:$0xff]
      %v748 = vld [vmem:[%s270 + $0x30] sm:$0xff]
      %v749 = vld [vmem:[%s270 + $0x38] sm:$0xff]
      %v750 = vld [vmem:[%s276] sm:$0xf]
      %v767 = vlaneseq
      %v768 = vand.u32 %v767, 127
      %v769 = vlaneseq
      %v770 = vshrl.u32 %v769, 7
      %v771 = vsub.s32 %v768, %v770
      %v772 = vrot.slane %v662, %v771
      %v773 = vadd.s32 %v768, 4294967288
      %v774 = vlaneseq
      %v775 = vshrl.u32 %v774, 7
      %v776 = vsub.s32 %v773, %v775
      %v777 = vrot.slane %v663, %v776
      %vm778 = vcmask 130112
      %v779 = vsel %vm778, %v777, %v772
      %v780 = vadd.s32 %v768, 4294967280
      %v781 = vlaneseq
      %v782 = vshrl.u32 %v781, 7
      %v783 = vsub.s32 %v780, %v782
      %v784 = vrot.slane %v664, %v783
      %vm785 = vcmask 195712
      %v786 = vsel %vm785, %v784, %v779
      %v787 = vadd.s32 %v768, 4294967272
      %v788 = vlaneseq
      %v789 = vshrl.u32 %v788, 7
      %v790 = vsub.s32 %v787, %v789
      %v791 = vrot.slane %v665, %v790
      %vm792 = vcmask 261312
      %v793 = vsel %vm792, %v791, %v786
      %v794 = vadd.s32 %v768, 4294967264
      %v795 = vlaneseq
      %v796 = vshrl.u32 %v795, 7
      %v797 = vsub.s32 %v794, %v796
      %v798 = vrot.slane %v666, %v797
      %vm799 = vcmask 326912
      %v800 = vsel %vm799, %v798, %v793
      %v801 = vadd.s32 %v768, 4294967256
      %v802 = vlaneseq
      %v803 = vshrl.u32 %v802, 7
      %v804 = vsub.s32 %v801, %v803
      %v805 = vrot.slane %v667, %v804
      %vm806 = vcmask 392512
      %v807 = vsel %vm806, %v805, %v800
      %v808 = vadd.s32 %v768, 4294967248
      %v809 = vlaneseq
      %v810 = vshrl.u32 %v809, 7
      %v811 = vsub.s32 %v808, %v810
      %v812 = vrot.slane %v668, %v811
      %vm813 = vcmask 458112
      %v814 = vsel %vm813, %v812, %v807
      %v815 = vadd.s32 %v768, 4294967240
      %v816 = vlaneseq
      %v817 = vshrl.u32 %v816, 7
      %v818 = vsub.s32 %v815, %v817
      %v819 = vrot.slane %v669, %v818
      %vm820 = vcmask 523712
      %v821 = vsel %vm820, %v819, %v814
      %v822 = vlaneseq
      %v823 = vshrl.u32 %v822, 7
      %v824 = vsub.s32 %v768, %v823
      %v825 = vrot.slane %v670, %v824
      %v826 = vlaneseq
      %v827 = vshrl.u32 %v826, 7
      %v828 = vsub.s32 %v773, %v827
      %v829 = vrot.slane %v671, %v828
      %v830 = vsel %vm778, %v829, %v825
      %v831 = vlaneseq
      %v832 = vshrl.u32 %v831, 7
      %v833 = vsub.s32 %v780, %v832
      %v834 = vrot.slane %v672, %v833
      %v835 = vsel %vm785, %v834, %v830
      %v836 = vlaneseq
      %v837 = vshrl.u32 %v836, 7
      %v838 = vsub.s32 %v787, %v837
      %v839 = vrot.slane %v673, %v838
      %v840 = vsel %vm792, %v839, %v835
      %v841 = vlaneseq
      %v842 = vshrl.u32 %v841, 7
      %v843 = vsub.s32 %v794, %v842
      %v844 = vrot.slane %v674, %v843
      %v845 = vsel %vm799, %v844, %v840
      %v846 = vlaneseq
      %v847 = vshrl.u32 %v846, 7
      %v848 = vsub.s32 %v801, %v847
      %v849 = vrot.slane %v675, %v848
      %v850 = vsel %vm806, %v849, %v845
      %v851 = vlaneseq
      %v852 = vshrl.u32 %v851, 7
      %v853 = vsub.s32 %v808, %v852
      %v854 = vrot.slane %v676, %v853
      %v855 = vsel %vm813, %v854, %v850
      %v856 = vlaneseq
      %v857 = vshrl.u32 %v856, 7
      %v858 = vsub.s32 %v815, %v857
      %v859 = vrot.slane %v677, %v858
      %v860 = vsel %vm820, %v859, %v855
      %vm861 = vcmask 1041409
      %v862 = vsel %vm861, %v860, %v821
      %v863 = vsel %vm300, %v862, 0
      %865 = vmatprep.subr.mxu0 0.0
      %866 = vmatpush1.msra.mxu0 %v742
      %867 = vmatprep.subr.mxu0 0.0
      %868 = vmatpush1.msra.mxu0 %v743
      %869 = vmatprep.subr.mxu0 0.0
      %870 = vmatpush1.msra.mxu0 %v744
      %871 = vmatprep.subr.mxu0 0.0
      %872 = vmatpush1.msra.mxu0 %v745
      %873 = vmatprep.subr.mxu0 0.0
      %874 = vmatpush1.msra.mxu0 %v746
      %875 = vmatprep.subr.mxu0 0.0
      %876 = vmatpush1.msra.mxu0 %v747
      %877 = vmatprep.subr.mxu0 0.0
      %878 = vmatpush1.msra.mxu0 %v748
      %879 = vmatprep.subr.mxu0 0.0
      %880 = vmatpush1.msra.mxu0 %v749
      %881 = vmatprep.subr.mxu0 0.0
      %882 = vmatpush1.msra.mxu0 0.0
      %883 = vmatprep.subr.mxu0 0.0
      %884 = vmatpush1.msra.mxu0 0.0
      %885 = vmatprep.subr.mxu0 0.0
      %886 = vmatpush1.msra.mxu0 0.0
      %887 = vmatprep.subr.mxu0 0.0
      %888 = vmatpush1.msra.mxu0 0.0
      %889 = vmatprep.subr.mxu0 0.0
      %890 = vmatpush1.msra.mxu0 0.0
      %891 = vmatprep.subr.mxu0 0.0
      %892 = vmatpush1.msra.mxu0 0.0
      %893 = vmatprep.subr.mxu0 0.0
      %894 = vmatpush1.msra.mxu0 0.0
      %895 = vmatprep.subr.mxu0 0.0
      %896 = vmatpush1.msra.mxu0 0.0
      %897 = vmatprep.subr.mxu0 0.0
      %898 = vmatpush1.msra.mxu0 0.0
      %899 = vmatprep.subr.mxu0 0.0
      %900 = vmatpush1.msra.mxu0 0.0
      %901 = vmatprep.subr.mxu0 0.0
      %902 = vmatpush1.msra.mxu0 0.0
      %903 = vmatprep.subr.mxu0 0.0
      %904 = vmatpush1.msra.mxu0 0.0
      %905 = vmatprep.subr.mxu0 0.0
      %906 = vmatpush1.msra.mxu0 0.0
      %907 = vmatprep.subr.mxu0 0.0
      %908 = vmatpush1.msra.mxu0 0.0
      %909 = vmatprep.subr.mxu0 0.0
      %910 = vmatpush1.msra.mxu0 0.0
      %911 = vmatprep.subr.mxu0 0.0
      %912 = vmatpush1.msra.mxu0 0.0
      %913 = vmatprep.subr.mxu0 0.0
      %914 = vmatpush1.msra.mxu0 0.0
      %915 = vmatprep.subr.mxu0 0.0
      %916 = vmatpush1.msra.mxu0 0.0
      %917 = vmatprep.subr.mxu0 0.0
      %918 = vmatpush1.msra.mxu0 0.0
      %919 = vmatprep.subr.mxu0 0.0
      %920 = vmatpush1.msra.mxu0 0.0
      %921 = vmatprep.subr.mxu0 0.0
      %922 = vmatpush1.msra.mxu0 0.0
      %923 = vmatprep.subr.mxu0 0.0
      %924 = vmatpush1.msra.mxu0 0.0
      %925 = vmatprep.subr.mxu0 0.0
      %926 = vmatpush1.msra.mxu0 0.0
      %927 = vmatprep.subr.mxu0 0.0
      %928 = vmatpush1.msra.mxu0 0.0
      %929 = vmatprep.mubr.f32.mxu0 0.0
      %930 = vmatmul.mubr.f32.gmra.mrb[0].mxu0 %v863
      %v931 = vpop.f32.mrb[0].mxu0
      %v932 = vadd.f32 0.0, %v931
      %v933 = vpop.f32.mrb[0].mxu0
      %934 = vdwg.mxu0
      %v935 = vmax.f32 %v932, 0.0
      %v952 = vlaneseq
      %v953 = vshrl.u32 %v952, 7
      %v954 = vsub.s32 %v768, %v953
      %v955 = vrot.slane %v696, %v954
      %v956 = vlaneseq
      %v957 = vshrl.u32 %v956, 7
      %v958 = vsub.s32 %v773, %v957
      %v959 = vrot.slane %v699, %v958
      %v960 = vsel %vm778, %v959, %v955
      %v961 = vlaneseq
      %v962 = vshrl.u32 %v961, 7
      %v963 = vsub.s32 %v780, %v962
      %v964 = vrot.slane %v702, %v963
      %v965 = vsel %vm785, %v964, %v960
      %v966 = vlaneseq
      %v967 = vshrl.u32 %v966, 7
      %v968 = vsub.s32 %v787, %v967
      %v969 = vrot.slane %v705, %v968
      %v970 = vsel %vm792, %v969, %v965
      %v971 = vlaneseq
      %v972 = vshrl.u32 %v971, 7
      %v973 = vsub.s32 %v794, %v972
      %v974 = vrot.slane %v708, %v973
      %v975 = vsel %vm799, %v974, %v970
      %v976 = vlaneseq
      %v977 = vshrl.u32 %v976, 7
      %v978 = vsub.s32 %v801, %v977
      %v979 = vrot.slane %v711, %v978
      %v980 = vsel %vm806, %v979, %v975
      %v981 = vlaneseq
      %v982 = vshrl.u32 %v981, 7
      %v983 = vsub.s32 %v808, %v982
      %v984 = vrot.slane %v714, %v983
      %v985 = vsel %vm813, %v984, %v980
      %v986 = vlaneseq
      %v987 = vshrl.u32 %v986, 7
      %v988 = vsub.s32 %v815, %v987
      %v989 = vrot.slane %v717, %v988
      %v990 = vsel %vm820, %v989, %v985
      %v991 = vlaneseq
      %v992 = vshrl.u32 %v991, 7
      %v993 = vsub.s32 %v768, %v992
      %v994 = vrot.slane %v720, %v993
      %v995 = vlaneseq
      %v996 = vshrl.u32 %v995, 7
      %v997 = vsub.s32 %v773, %v996
      %v998 = vrot.slane %v723, %v997
      %v999 = vsel %vm778, %v998, %v994
      %v1000 = vlaneseq
      %v1001 = vshrl.u32 %v1000, 7
      %v1002 = vsub.s32 %v780, %v1001
      %v1003 = vrot.slane %v726, %v1002
      %v1004 = vsel %vm785, %v1003, %v999
      %v1005 = vlaneseq
      %v1006 = vshrl.u32 %v1005, 7
      %v1007 = vsub.s32 %v787, %v1006
      %v1008 = vrot.slane %v729, %v1007
      %v1009 = vsel %vm792, %v1008, %v1004
      %v1010 = vlaneseq
      %v1011 = vshrl.u32 %v1010, 7
      %v1012 = vsub.s32 %v794, %v1011
      %v1013 = vrot.slane %v732, %v1012
      %v1014 = vsel %vm799, %v1013, %v1009
      %v1015 = vlaneseq
      %v1016 = vshrl.u32 %v1015, 7
      %v1017 = vsub.s32 %v801, %v1016
      %v1018 = vrot.slane %v735, %v1017
      %v1019 = vsel %vm806, %v1018, %v1014
      %v1020 = vlaneseq
      %v1021 = vshrl.u32 %v1020, 7
      %v1022 = vsub.s32 %v808, %v1021
      %v1023 = vrot.slane %v738, %v1022
      %v1024 = vsel %vm813, %v1023, %v1019
      %v1025 = vlaneseq
      %v1026 = vshrl.u32 %v1025, 7
      %v1027 = vsub.s32 %v815, %v1026
      %v1028 = vrot.slane %v741, %v1027
      %v1029 = vsel %vm820, %v1028, %v1024
      %v1030 = vsel %vm861, %v1029, %v990
      %v1031 = vsel %vm300, %v1030, 0
      %1033 = vmatprep.subr.mxu0 0.0
      %1034 = vmatpush1.msra.mxu0 %v742
      %1035 = vmatprep.subr.mxu0 0.0
      %1036 = vmatpush1.msra.mxu0 %v743
      %1037 = vmatprep.subr.mxu0 0.0
      %1038 = vmatpush1.msra.mxu0 %v744
      %1039 = vmatprep.subr.mxu0 0.0
      %1040 = vmatpush1.msra.mxu0 %v745
      %1041 = vmatprep.subr.mxu0 0.0
      %1042 = vmatpush1.msra.mxu0 %v746
      %1043 = vmatprep.subr.mxu0 0.0
      %1044 = vmatpush1.msra.mxu0 %v747
      %1045 = vmatprep.subr.mxu0 0.0
      %1046 = vmatpush1.msra.mxu0 %v748
      %1047 = vmatprep.subr.mxu0 0.0
      %1048 = vmatpush1.msra.mxu0 %v749
      %1049 = vmatprep.subr.mxu0 0.0
      %1050 = vmatpush1.msra.mxu0 0.0
      %1051 = vmatprep.subr.mxu0 0.0
      %1052 = vmatpush1.msra.mxu0 0.0
      %1053 = vmatprep.subr.mxu0 0.0
      %1054 = vmatpush1.msra.mxu0 0.0
      %1055 = vmatprep.subr.mxu0 0.0
      %1056 = vmatpush1.msra.mxu0 0.0
      %1057 = vmatprep.subr.mxu0 0.0
      %1058 = vmatpush1.msra.mxu0 0.0
      %1059 = vmatprep.subr.mxu0 0.0
      %1060 = vmatpush1.msra.mxu0 0.0
      %1061 = vmatprep.subr.mxu0 0.0
      %1062 = vmatpush1.msra.mxu0 0.0
      %1063 = vmatprep.subr.mxu0 0.0
      %1064 = vmatpush1.msra.mxu0 0.0
      %1065 = vmatprep.subr.mxu0 0.0
      %1066 = vmatpush1.msra.mxu0 0.0
      %1067 = vmatprep.subr.mxu0 0.0
      %1068 = vmatpush1.msra.mxu0 0.0
      %1069 = vmatprep.subr.mxu0 0.0
      %1070 = vmatpush1.msra.mxu0 0.0
      %1071 = vmatprep.subr.mxu0 0.0
      %1072 = vmatpush1.msra.mxu0 0.0
      %1073 = vmatprep.subr.mxu0 0.0
      %1074 = vmatpush1.msra.mxu0 0.0
      %1075 = vmatprep.subr.mxu0 0.0
      %1076 = vmatpush1.msra.mxu0 0.0
      %1077 = vmatprep.subr.mxu0 0.0
      %1078 = vmatpush1.msra.mxu0 0.0
      %1079 = vmatprep.subr.mxu0 0.0
      %1080 = vmatpush1.msra.mxu0 0.0
      %1081 = vmatprep.subr.mxu0 0.0
      %1082 = vmatpush1.msra.mxu0 0.0
      %1083 = vmatprep.subr.mxu0 0.0
      %1084 = vmatpush1.msra.mxu0 0.0
      %1085 = vmatprep.subr.mxu0 0.0
      %1086 = vmatpush1.msra.mxu0 0.0
      %1087 = vmatprep.subr.mxu0 0.0
      %1088 = vmatpush1.msra.mxu0 0.0
      %1089 = vmatprep.subr.mxu0 0.0
      %1090 = vmatpush1.msra.mxu0 0.0
      %1091 = vmatprep.subr.mxu0 0.0
      %1092 = vmatpush1.msra.mxu0 0.0
      %1093 = vmatprep.subr.mxu0 0.0
      %1094 = vmatpush1.msra.mxu0 0.0
      %1095 = vmatprep.subr.mxu0 0.0
      %1096 = vmatpush1.msra.mxu0 0.0
      %1097 = vmatprep.mubr.f32.mxu0 0.0
      %1098 = vmatmul.mubr.f32.gmra.mrb[0].mxu0 %v1031
      %v1099 = vpop.f32.mrb[0].mxu0
      %v1100 = vadd.f32 0.0, %v1099
      %v1101 = vpop.f32.mrb[0].mxu0
      %1102 = vdwg.mxu0
      %v1103 = vmax.f32 %v1100, 0.0
      %vm1104 = vcmask 31744
      %v1106 = vsel %vm1104, %v1103, 0
      %vm1108 = vcmask 1043456
      %v1110 = vsel %vm1108, %v750, 0
      %1112 = vmatprep.subr.mxu0 0.0
      %1113 = vmatpush1.msra.mxu0 %v1110
      %1114 = vmatprep.subr.mxu0 0.0
      %1115 = vmatpush1.msra.mxu0 0.0
      %1116 = vmatprep.subr.mxu0 0.0
      %1117 = vmatpush1.msra.mxu0 0.0
      %1118 = vmatprep.subr.mxu0 0.0
      %1119 = vmatpush1.msra.mxu0 0.0
      %1120 = vmatprep.subr.mxu0 0.0
      %1121 = vmatpush1.msra.mxu0 0.0
      %1122 = vmatprep.subr.mxu0 0.0
      %1123 = vmatpush1.msra.mxu0 0.0
      %1124 = vmatprep.subr.mxu0 0.0
      %1125 = vmatpush1.msra.mxu0 0.0
      %1126 = vmatprep.subr.mxu0 0.0
      %1127 = vmatpush1.msra.mxu0 0.0
      %1128 = vmatprep.subr.mxu0 0.0
      %1129 = vmatpush1.msra.mxu0 0.0
      %1130 = vmatprep.subr.mxu0 0.0
      %1131 = vmatpush1.msra.mxu0 0.0
      %1132 = vmatprep.subr.mxu0 0.0
      %1133 = vmatpush1.msra.mxu0 0.0
      %1134 = vmatprep.subr.mxu0 0.0
      %1135 = vmatpush1.msra.mxu0 0.0
      %1136 = vmatprep.subr.mxu0 0.0
      %1137 = vmatpush1.msra.mxu0 0.0
      %1138 = vmatprep.subr.mxu0 0.0
      %1139 = vmatpush1.msra.mxu0 0.0
      %1140 = vmatprep.subr.mxu0 0.0
      %1141 = vmatpush1.msra.mxu0 0.0
      %1142 = vmatprep.subr.mxu0 0.0
      %1143 = vmatpush1.msra.mxu0 0.0
      %1144 = vmatprep.subr.mxu0 0.0
      %1145 = vmatpush1.msra.mxu0 0.0
      %1146 = vmatprep.subr.mxu0 0.0
      %1147 = vmatpush1.msra.mxu0 0.0
      %1148 = vmatprep.subr.mxu0 0.0
      %1149 = vmatpush1.msra.mxu0 0.0
      %1150 = vmatprep.subr.mxu0 0.0
      %1151 = vmatpush1.msra.mxu0 0.0
      %1152 = vmatprep.subr.mxu0 0.0
      %1153 = vmatpush1.msra.mxu0 0.0
      %1154 = vmatprep.subr.mxu0 0.0
      %1155 = vmatpush1.msra.mxu0 0.0
      %1156 = vmatprep.subr.mxu0 0.0
      %1157 = vmatpush1.msra.mxu0 0.0
      %1158 = vmatprep.subr.mxu0 0.0
      %1159 = vmatpush1.msra.mxu0 0.0
      %1160 = vmatprep.subr.mxu0 0.0
      %1161 = vmatpush1.msra.mxu0 0.0
      %1162 = vmatprep.subr.mxu0 0.0
      %1163 = vmatpush1.msra.mxu0 0.0
      %1164 = vmatprep.subr.mxu0 0.0
      %1165 = vmatpush1.msra.mxu0 0.0
      %1166 = vmatprep.subr.mxu0 0.0
      %1167 = vmatpush1.msra.mxu0 0.0
      %1168 = vmatprep.subr.mxu0 0.0
      %1169 = vmatpush1.msra.mxu0 0.0
      %1170 = vmatprep.subr.mxu0 0.0
      %1171 = vmatpush1.msra.mxu0 0.0
      %1172 = vmatprep.subr.mxu0 0.0
      %1173 = vmatpush1.msra.mxu0 0.0
      %1174 = vmatprep.subr.mxu0 0.0
      %1175 = vmatpush1.msra.mxu0 0.0
      %1176 = vmatprep.mubr.f32.mxu0 0.0
      %1177 = vmatmul.mubr.f32.gmra.mrb[0].mxu0 %v1106
      %v1178 = vpop.f32.mrb[0].mxu0
      %v1179 = vadd.f32 0.0, %v1178
      %v1180 = vpop.f32.mrb[0].mxu0
      %1181 = vdwg.mxu0
      %v1183 = vsel %vm1104, %v935, 0
      %1185 = vmatprep.subr.mxu0 0.0
      %1186 = vmatpush1.msra.mxu0 %v1110
      %1187 = vmatprep.subr.mxu0 0.0
      %1188 = vmatpush1.msra.mxu0 0.0
      %1189 = vmatprep.subr.mxu0 0.0
      %1190 = vmatpush1.msra.mxu0 0.0
      %1191 = vmatprep.subr.mxu0 0.0
      %1192 = vmatpush1.msra.mxu0 0.0
      %1193 = vmatprep.subr.mxu0 0.0
      %1194 = vmatpush1.msra.mxu0 0.0
      %1195 = vmatprep.subr.mxu0 0.0
      %1196 = vmatpush1.msra.mxu0 0.0
      %1197 = vmatprep.subr.mxu0 0.0
      %1198 = vmatpush1.msra.mxu0 0.0
      %1199 = vmatprep.subr.mxu0 0.0
      %1200 = vmatpush1.msra.mxu0 0.0
      %1201 = vmatprep.subr.mxu0 0.0
      %1202 = vmatpush1.msra.mxu0 0.0
      %1203 = vmatprep.subr.mxu0 0.0
      %1204 = vmatpush1.msra.mxu0 0.0
      %1205 = vmatprep.subr.mxu0 0.0
      %1206 = vmatpush1.msra.mxu0 0.0
      %1207 = vmatprep.subr.mxu0 0.0
      %1208 = vmatpush1.msra.mxu0 0.0
      %1209 = vmatprep.subr.mxu0 0.0
      %1210 = vmatpush1.msra.mxu0 0.0
      %1211 = vmatprep.subr.mxu0 0.0
      %1212 = vmatpush1.msra.mxu0 0.0
      %1213 = vmatprep.subr.mxu0 0.0
      %1214 = vmatpush1.msra.mxu0 0.0
      %1215 = vmatprep.subr.mxu0 0.0
      %1216 = vmatpush1.msra.mxu0 0.0
      %1217 = vmatprep.subr.mxu0 0.0
      %1218 = vmatpush1.msra.mxu0 0.0
      %1219 = vmatprep.subr.mxu0 0.0
      %1220 = vmatpush1.msra.mxu0 0.0
      %1221 = vmatprep.subr.mxu0 0.0
      %1222 = vmatpush1.msra.mxu0 0.0
      %1223 = vmatprep.subr.mxu0 0.0
      %1224 = vmatpush1.msra.mxu0 0.0
      %1225 = vmatprep.subr.mxu0 0.0
      %1226 = vmatpush1.msra.mxu0 0.0
      %1227 = vmatprep.subr.mxu0 0.0
      %1228 = vmatpush1.msra.mxu0 0.0
      %1229 = vmatprep.subr.mxu0 0.0
      %1230 = vmatpush1.msra.mxu0 0.0
      %1231 = vmatprep.subr.mxu0 0.0
      %1232 = vmatpush1.msra.mxu0 0.0
      %1233 = vmatprep.subr.mxu0 0.0
      %1234 = vmatpush1.msra.mxu0 0.0
      %1235 = vmatprep.subr.mxu0 0.0
      %1236 = vmatpush1.msra.mxu0 0.0
      %1237 = vmatprep.subr.mxu0 0.0
      %1238 = vmatpush1.msra.mxu0 0.0
      %1239 = vmatprep.subr.mxu0 0.0
      %1240 = vmatpush1.msra.mxu0 0.0
      %1241 = vmatprep.subr.mxu0 0.0
      %1242 = vmatpush1.msra.mxu0 0.0
      %1243 = vmatprep.subr.mxu0 0.0
      %1244 = vmatpush1.msra.mxu0 0.0
      %1245 = vmatprep.subr.mxu0 0.0
      %1246 = vmatpush1.msra.mxu0 0.0
      %1247 = vmatprep.subr.mxu0 0.0
      %1248 = vmatpush1.msra.mxu0 0.0
      %1249 = vmatprep.mubr.f32.mxu0 0.0
      %1250 = vmatmul.mubr.f32.gmra.mrb[0].mxu0 %v1183
      %v1251 = vpop.f32.mrb[0].mxu0
      %v1252 = vadd.f32 %v1179, %v1251
      %v1253 = vpop.f32.mrb[0].mxu0
      %1254 = vdwg.mxu0
      %v1255 = vxor.u32 %v1252, 2147483648
      %v1256 = vmul.f32 %v1255, 1.442695
      %v1257 = vpow.pop %v1256
      %v1258 = vadd.f32 %v1257, 1.0
      %v1259 = vrcp.pop %v1258
      %v1260 = vmul.f32 1.0, %v1259
      %v1261 = vlaneseq
      %v1262 = vshrl.u32 %v1261, 7
      %v1263 = vsub.s32 0, %v1262
      %v1264 = vrot.slane %v1260, %v1263
      %1266 = vbcast.lane.b32.xlu0 %v1264, 256
      %v1267 = vpop.permute.xlu0 %1266
      %s1269 = sor.u32 256, 8
      %1270 = vbcast.lane.b32.xlu0 %v1264, %s1269
      %v1271 = vpop.permute.xlu0 %1270
      %s1273 = sor.u32 256, 16
      %1274 = vbcast.lane.b32.xlu0 %v1264, %s1273
      %v1275 = vpop.permute.xlu0 %1274
      %s1277 = sor.u32 256, 24
      %1278 = vbcast.lane.b32.xlu0 %v1264, %s1277
      %v1279 = vpop.permute.xlu0 %1278
      %s1281 = sor.u32 256, 32
      %1282 = vbcast.lane.b32.xlu0 %v1264, %s1281
      %v1283 = vpop.permute.xlu0 %1282
      %s1285 = sor.u32 256, 40
      %1286 = vbcast.lane.b32.xlu0 %v1264, %s1285
      %v1287 = vpop.permute.xlu0 %1286
      %s1289 = sor.u32 256, 48
      %1290 = vbcast.lane.b32.xlu0 %v1264, %s1289
      %v1291 = vpop.permute.xlu0 %1290
      %s1293 = sor.u32 256, 56
      %1294 = vbcast.lane.b32.xlu0 %v1264, %s1293
      %v1295 = vpop.permute.xlu0 %1294
      %v1296 = vlaneseq
      %v1297 = vshrl.u32 %v1296, 7
      %v1298 = vsub.s32 1, %v1297
      %v1299 = vrot.slane %v1260, %v1298
      %1301 = vbcast.lane.b32.xlu0 %v1299, 256
      %v1302 = vpop.permute.xlu0 %1301
      %s1304 = sor.u32 256, 8
      %1305 = vbcast.lane.b32.xlu0 %v1299, %s1304
      %v1306 = vpop.permute.xlu0 %1305
      %s1308 = sor.u32 256, 16
      %1309 = vbcast.lane.b32.xlu0 %v1299, %s1308
      %v1310 = vpop.permute.xlu0 %1309
      %s1312 = sor.u32 256, 24
      %1313 = vbcast.lane.b32.xlu0 %v1299, %s1312
      %v1314 = vpop.permute.xlu0 %1313
      %s1316 = sor.u32 256, 32
      %1317 = vbcast.lane.b32.xlu0 %v1299, %s1316
      %v1318 = vpop.permute.xlu0 %1317
      %s1320 = sor.u32 256, 40
      %1321 = vbcast.lane.b32.xlu0 %v1299, %s1320
      %v1322 = vpop.permute.xlu0 %1321
      %s1324 = sor.u32 256, 48
      %1325 = vbcast.lane.b32.xlu0 %v1299, %s1324
      %v1326 = vpop.permute.xlu0 %1325
      %s1328 = sor.u32 256, 56
      %1329 = vbcast.lane.b32.xlu0 %v1299, %s1328
      %v1330 = vpop.permute.xlu0 %1329
      %s1331 = scalar_lea.vmem [#allocation4], 128
      %1332 = vst.msk [vmem:[%s1331] sm:$0xff] %vm300, %v1267
      %1333 = vst.msk [vmem:[%s1331 + $0x8] sm:$0xff] %vm300, %v1271
      %1334 = vst.msk [vmem:[%s1331 + $0x10] sm:$0xff] %vm300, %v1275
      %1335 = vst.msk [vmem:[%s1331 + $0x18] sm:$0xff] %vm300, %v1279
      %1336 = vst.msk [vmem:[%s1331 + $0x20] sm:$0xff] %vm300, %v1283
      %1337 = vst.msk [vmem:[%s1331 + $0x28] sm:$0xff] %vm300, %v1287
      %1338 = vst.msk [vmem:[%s1331 + $0x30] sm:$0xff] %vm300, %v1291
      %1339 = vst.msk [vmem:[%s1331 + $0x38] sm:$0xff] %vm300, %v1295
      %1340 = vst.msk [vmem:[%s1331 + $0x40] sm:$0xff] %vm300, %v1302
      %1341 = vst.msk [vmem:[%s1331 + $0x48] sm:$0xff] %vm300, %v1306
      %1342 = vst.msk [vmem:[%s1331 + $0x50] sm:$0xff] %vm300, %v1310
      %1343 = vst.msk [vmem:[%s1331 + $0x58] sm:$0xff] %vm300, %v1314
      %1344 = vst.msk [vmem:[%s1331 + $0x60] sm:$0xff] %vm300, %v1318
      %1345 = vst.msk [vmem:[%s1331 + $0x68] sm:$0xff] %vm300, %v1322
      %1346 = vst.msk [vmem:[%s1331 + $0x70] sm:$0xff] %vm300, %v1326
      %1347 = vst.msk [vmem:[%s1331 + $0x78] sm:$0xff] %vm300, %v1330
      %v1348 = vld [vmem:[%s480] sm:$0xff]
      %v1349 = vld [vmem:[%s480 + $0x8] sm:$0xff]
      %v1350 = vld [vmem:[%s480 + $0x10] sm:$0xff]
      %v1351 = vld [vmem:[%s480 + $0x18] sm:$0xff]
      %v1352 = vld [vmem:[%s480 + $0x20] sm:$0xff]
      %v1353 = vld [vmem:[%s480 + $0x28] sm:$0xff]
      %v1354 = vld [vmem:[%s480 + $0x30] sm:$0xff]
      %v1355 = vld [vmem:[%s480 + $0x38] sm:$0xff]
      %v1356 = vld [vmem:[%s480 + $0x40] sm:$0xff]
      %v1357 = vld [vmem:[%s480 + $0x48] sm:$0xff]
      %v1358 = vld [vmem:[%s480 + $0x50] sm:$0xff]
      %v1359 = vld [vmem:[%s480 + $0x58] sm:$0xff]
      %v1360 = vld [vmem:[%s480 + $0x60] sm:$0xff]
      %v1361 = vld [vmem:[%s480 + $0x68] sm:$0xff]
      %v1362 = vld [vmem:[%s480 + $0x70] sm:$0xff]
      %v1363 = vld [vmem:[%s480 + $0x78] sm:$0xff]
      %v1364 = vsel %vm300, %v1348, 0.0
      %1365 = vadd.xlane.f32.xlu0 %v1364
      %v1366 = vpop.xlane.xlu0 %1365
      %v1367 = vsel %vm300, %v1349, 0.0
      %1368 = vadd.xlane.f32.xlu0 %v1367
      %v1369 = vpop.xlane.xlu0 %1368
      %v1370 = vsel %vm300, %v1350, 0.0
      %1371 = vadd.xlane.f32.xlu0 %v1370
      %v1372 = vpop.xlane.xlu0 %1371
      %v1373 = vsel %vm300, %v1351, 0.0
      %1374 = vadd.xlane.f32.xlu0 %v1373
      %v1375 = vpop.xlane.xlu0 %1374
      %v1376 = vsel %vm300, %v1352, 0.0
      %1377 = vadd.xlane.f32.xlu0 %v1376
      %v1378 = vpop.xlane.xlu0 %1377
      %v1379 = vsel %vm300, %v1353, 0.0
      %1380 = vadd.xlane.f32.xlu0 %v1379
      %v1381 = vpop.xlane.xlu0 %1380
      %v1382 = vsel %vm300, %v1354, 0.0
      %1383 = vadd.xlane.f32.xlu0 %v1382
      %v1384 = vpop.xlane.xlu0 %1383
      %v1385 = vsel %vm300, %v1355, 0.0
      %1386 = vadd.xlane.f32.xlu0 %v1385
      %v1387 = vpop.xlane.xlu0 %1386
      %v1388 = vsel %vm300, %v1356, 0.0
      %1389 = vadd.xlane.f32.xlu0 %v1388
      %v1390 = vpop.xlane.xlu0 %1389
      %v1391 = vsel %vm300, %v1357, 0.0
      %1392 = vadd.xlane.f32.xlu0 %v1391
      %v1393 = vpop.xlane.xlu0 %1392
      %v1394 = vsel %vm300, %v1358, 0.0
      %1395 = vadd.xlane.f32.xlu0 %v1394
      %v1396 = vpop.xlane.xlu0 %1395
      %v1397 = vsel %vm300, %v1359, 0.0
      %1398 = vadd.xlane.f32.xlu0 %v1397
      %v1399 = vpop.xlane.xlu0 %1398
      %v1400 = vsel %vm300, %v1360, 0.0
      %1401 = vadd.xlane.f32.xlu0 %v1400
      %v1402 = vpop.xlane.xlu0 %1401
      %v1403 = vsel %vm300, %v1361, 0.0
      %1404 = vadd.xlane.f32.xlu0 %v1403
      %v1405 = vpop.xlane.xlu0 %1404
      %v1406 = vsel %vm300, %v1362, 0.0
      %1407 = vadd.xlane.f32.xlu0 %v1406
      %v1408 = vpop.xlane.xlu0 %1407
      %v1409 = vsel %vm300, %v1363, 0.0
      %1410 = vadd.xlane.f32.xlu0 %v1409
      %v1411 = vpop.xlane.xlu0 %1410
      %v1412 = vmul.f32 %v1366, 0.015625
      %v1413 = vmul.f32 %v1369, 0.015625
      %v1414 = vmul.f32 %v1372, 0.015625
      %v1415 = vmul.f32 %v1375, 0.015625
      %v1416 = vmul.f32 %v1378, 0.015625
      %v1417 = vmul.f32 %v1381, 0.015625
      %v1418 = vmul.f32 %v1384, 0.015625
      %v1419 = vmul.f32 %v1387, 0.015625
      %v1420 = vmul.f32 %v1390, 0.015625
      %v1421 = vmul.f32 %v1393, 0.015625
      %v1422 = vmul.f32 %v1396, 0.015625
      %v1423 = vmul.f32 %v1399, 0.015625
      %v1424 = vmul.f32 %v1402, 0.015625
      %v1425 = vmul.f32 %v1405, 0.015625
      %v1426 = vmul.f32 %v1408, 0.015625
      %v1427 = vmul.f32 %v1411, 0.015625
      %v1428 = vld [vmem:[%s485] sm:$0xff]
      %v1429 = vld [vmem:[%s485 + $0x8] sm:$0xff]
      %v1430 = vld [vmem:[%s485 + $0x10] sm:$0xff]
      %v1431 = vld [vmem:[%s485 + $0x18] sm:$0xff]
      %v1432 = vld [vmem:[%s485 + $0x20] sm:$0xff]
      %v1433 = vld [vmem:[%s485 + $0x28] sm:$0xff]
      %v1434 = vld [vmem:[%s485 + $0x30] sm:$0xff]
      %v1435 = vld [vmem:[%s485 + $0x38] sm:$0xff]
      %v1436 = vld [vmem:[%s485 + $0x40] sm:$0xff]
      %v1437 = vld [vmem:[%s485 + $0x48] sm:$0xff]
      %v1438 = vld [vmem:[%s485 + $0x50] sm:$0xff]
      %v1439 = vld [vmem:[%s485 + $0x58] sm:$0xff]
      %v1440 = vld [vmem:[%s485 + $0x60] sm:$0xff]
      %v1441 = vld [vmem:[%s485 + $0x68] sm:$0xff]
      %v1442 = vld [vmem:[%s485 + $0x70] sm:$0xff]
      %v1443 = vld [vmem:[%s485 + $0x78] sm:$0xff]
      %v1444 = vsel %vm300, %v1428, -inf
      %1445 = vmax.xlane.f32.xlu0 %v1444
      %v1446 = vpop.xlane.xlu0 %1445
      %v1447 = vsel %vm300, %v1429, -inf
      %1448 = vmax.xlane.f32.xlu0 %v1447
      %v1449 = vpop.xlane.xlu0 %1448
      %v1450 = vsel %vm300, %v1430, -inf
      %1451 = vmax.xlane.f32.xlu0 %v1450
      %v1452 = vpop.xlane.xlu0 %1451
      %v1453 = vsel %vm300, %v1431, -inf
      %1454 = vmax.xlane.f32.xlu0 %v1453
      %v1455 = vpop.xlane.xlu0 %1454
      %v1456 = vsel %vm300, %v1432, -inf
      %1457 = vmax.xlane.f32.xlu0 %v1456
      %v1458 = vpop.xlane.xlu0 %1457
      %v1459 = vsel %vm300, %v1433, -inf
      %1460 = vmax.xlane.f32.xlu0 %v1459
      %v1461 = vpop.xlane.xlu0 %1460
      %v1462 = vsel %vm300, %v1434, -inf
      %1463 = vmax.xlane.f32.xlu0 %v1462
      %v1464 = vpop.xlane.xlu0 %1463
      %v1465 = vsel %vm300, %v1435, -inf
      %1466 = vmax.xlane.f32.xlu0 %v1465
      %v1467 = vpop.xlane.xlu0 %1466
      %v1468 = vsel %vm300, %v1436, -inf
      %1469 = vmax.xlane.f32.xlu0 %v1468
      %v1470 = vpop.xlane.xlu0 %1469
      %v1471 = vsel %vm300, %v1437, -inf
      %1472 = vmax.xlane.f32.xlu0 %v1471
      %v1473 = vpop.xlane.xlu0 %1472
      %v1474 = vsel %vm300, %v1438, -inf
      %1475 = vmax.xlane.f32.xlu0 %v1474
      %v1476 = vpop.xlane.xlu0 %1475
      %v1477 = vsel %vm300, %v1439, -inf
      %1478 = vmax.xlane.f32.xlu0 %v1477
      %v1479 = vpop.xlane.xlu0 %1478
      %v1480 = vsel %vm300, %v1440, -inf
      %1481 = vmax.xlane.f32.xlu0 %v1480
      %v1482 = vpop.xlane.xlu0 %1481
      %v1483 = vsel %vm300, %v1441, -inf
      %1484 = vmax.xlane.f32.xlu0 %v1483
      %v1485 = vpop.xlane.xlu0 %1484
      %v1486 = vsel %vm300, %v1442, -inf
      %1487 = vmax.xlane.f32.xlu0 %v1486
      %v1488 = vpop.xlane.xlu0 %1487
      %v1489 = vsel %vm300, %v1443, -inf
      %1490 = vmax.xlane.f32.xlu0 %v1489
      %v1491 = vpop.xlane.xlu0 %1490
      %s1492 = scalar_lea.vmem %s270, 64
      %v1493 = vld [vmem:[%s1492] sm:$0xff]
      %v1494 = vld [vmem:[%s1492 + $0x8] sm:$0xff]
      %v1495 = vld [vmem:[%s1492 + $0x10] sm:$0xff]
      %v1496 = vld [vmem:[%s1492 + $0x18] sm:$0xff]
      %v1497 = vld [vmem:[%s1492 + $0x20] sm:$0xff]
      %v1498 = vld [vmem:[%s1492 + $0x28] sm:$0xff]
      %v1499 = vld [vmem:[%s1492 + $0x30] sm:$0xff]
      %v1500 = vld [vmem:[%s1492 + $0x38] sm:$0xff]
      %s1501 = scalar_lea.vmem %s276, 4
      %v1502 = vld [vmem:[%s1501] sm:$0xf]
      %v1519 = vlaneseq
      %v1520 = vshrl.u32 %v1519, 7
      %v1521 = vsub.s32 %v768, %v1520
      %v1522 = vrot.slane %v1412, %v1521
      %v1523 = vlaneseq
      %v1524 = vshrl.u32 %v1523, 7
      %v1525 = vsub.s32 %v773, %v1524
      %v1526 = vrot.slane %v1413, %v1525
      %v1527 = vsel %vm778, %v1526, %v1522
      %v1528 = vlaneseq
      %v1529 = vshrl.u32 %v1528, 7
      %v1530 = vsub.s32 %v780, %v1529
      %v1531 = vrot.slane %v1414, %v1530
      %v1532 = vsel %vm785, %v1531, %v1527
      %v1533 = vlaneseq
      %v1534 = vshrl.u32 %v1533, 7
      %v1535 = vsub.s32 %v787, %v1534
      %v1536 = vrot.slane %v1415, %v1535
      %v1537 = vsel %vm792, %v1536, %v1532
      %v1538 = vlaneseq
      %v1539 = vshrl.u32 %v1538, 7
      %v1540 = vsub.s32 %v794, %v1539
      %v1541 = vrot.slane %v1416, %v1540
      %v1542 = vsel %vm799, %v1541, %v1537
      %v1543 = vlaneseq
      %v1544 = vshrl.u32 %v1543, 7
      %v1545 = vsub.s32 %v801, %v1544
      %v1546 = vrot.slane %v1417, %v1545
      %v1547 = vsel %vm806, %v1546, %v1542
      %v1548 = vlaneseq
      %v1549 = vshrl.u32 %v1548, 7
      %v1550 = vsub.s32 %v808, %v1549
      %v1551 = vrot.slane %v1418, %v1550
      %v1552 = vsel %vm813, %v1551, %v1547
      %v1553 = vlaneseq
      %v1554 = vshrl.u32 %v1553, 7
      %v1555 = vsub.s32 %v815, %v1554
      %v1556 = vrot.slane %v1419, %v1555
      %v1557 = vsel %vm820, %v1556, %v1552
      %v1558 = vlaneseq
      %v1559 = vshrl.u32 %v1558, 7
      %v1560 = vsub.s32 %v768, %v1559
      %v1561 = vrot.slane %v1420, %v1560
      %v1562 = vlaneseq
      %v1563 = vshrl.u32 %v1562, 7
      %v1564 = vsub.s32 %v773, %v1563
      %v1565 = vrot.slane %v1421, %v1564
      %v1566 = vsel %vm778, %v1565, %v1561
      %v1567 = vlaneseq
      %v1568 = vshrl.u32 %v1567, 7
      %v1569 = vsub.s32 %v780, %v1568
      %v1570 = vrot.slane %v1422, %v1569
      %v1571 = vsel %vm785, %v1570, %v1566
      %v1572 = vlaneseq
      %v1573 = vshrl.u32 %v1572, 7
      %v1574 = vsub.s32 %v787, %v1573
      %v1575 = vrot.slane %v1423, %v1574
      %v1576 = vsel %vm792, %v1575, %v1571
      %v1577 = vlaneseq
      %v1578 = vshrl.u32 %v1577, 7
      %v1579 = vsub.s32 %v794, %v1578
      %v1580 = vrot.slane %v1424, %v1579
      %v1581 = vsel %vm799, %v1580, %v1576
      %v1582 = vlaneseq
      %v1583 = vshrl.u32 %v1582, 7
      %v1584 = vsub.s32 %v801, %v1583
      %v1585 = vrot.slane %v1425, %v1584
      %v1586 = vsel %vm806, %v1585, %v1581
      %v1587 = vlaneseq
      %v1588 = vshrl.u32 %v1587, 7
      %v1589 = vsub.s32 %v808, %v1588
      %v1590 = vrot.slane %v1426, %v1589
      %v1591 = vsel %vm813, %v1590, %v1586
      %v1592 = vlaneseq
      %v1593 = vshrl.u32 %v1592, 7
      %v1594 = vsub.s32 %v815, %v1593
      %v1595 = vrot.slane %v1427, %v1594
      %v1596 = vsel %vm820, %v1595, %v1591
      %v1597 = vsel %vm861, %v1596, %v1557
      %v1598 = vsel %vm300, %v1597, 0
      %1600 = vmatprep.subr.mxu0 0.0
      %1601 = vmatpush1.msra.mxu0 %v1493
      %1602 = vmatprep.subr.mxu0 0.0
      %1603 = vmatpush1.msra.mxu0 %v1494
      %1604 = vmatprep.subr.mxu0 0.0
      %1605 = vmatpush1.msra.mxu0 %v1495
      %1606 = vmatprep.subr.mxu0 0.0
      %1607 = vmatpush1.msra.mxu0 %v1496
      %1608 = vmatprep.subr.mxu0 0.0
      %1609 = vmatpush1.msra.mxu0 %v1497
      %1610 = vmatprep.subr.mxu0 0.0
      %1611 = vmatpush1.msra.mxu0 %v1498
      %1612 = vmatprep.subr.mxu0 0.0
      %1613 = vmatpush1.msra.mxu0 %v1499
      %1614 = vmatprep.subr.mxu0 0.0
      %1615 = vmatpush1.msra.mxu0 %v1500
      %1616 = vmatprep.subr.mxu0 0.0
      %1617 = vmatpush1.msra.mxu0 0.0
      %1618 = vmatprep.subr.mxu0 0.0
      %1619 = vmatpush1.msra.mxu0 0.0
      %1620 = vmatprep.subr.mxu0 0.0
      %1621 = vmatpush1.msra.mxu0 0.0
      %1622 = vmatprep.subr.mxu0 0.0
      %1623 = vmatpush1.msra.mxu0 0.0
      %1624 = vmatprep.subr.mxu0 0.0
      %1625 = vmatpush1.msra.mxu0 0.0
      %1626 = vmatprep.subr.mxu0 0.0
      %1627 = vmatpush1.msra.mxu0 0.0
      %1628 = vmatprep.subr.mxu0 0.0
      %1629 = vmatpush1.msra.mxu0 0.0
      %1630 = vmatprep.subr.mxu0 0.0
      %1631 = vmatpush1.msra.mxu0 0.0
      %1632 = vmatprep.subr.mxu0 0.0
      %1633 = vmatpush1.msra.mxu0 0.0
      %1634 = vmatprep.subr.mxu0 0.0
      %1635 = vmatpush1.msra.mxu0 0.0
      %1636 = vmatprep.subr.mxu0 0.0
      %1637 = vmatpush1.msra.mxu0 0.0
      %1638 = vmatprep.subr.mxu0 0.0
      %1639 = vmatpush1.msra.mxu0 0.0
      %1640 = vmatprep.subr.mxu0 0.0
      %1641 = vmatpush1.msra.mxu0 0.0
      %1642 = vmatprep.subr.mxu0 0.0
      %1643 = vmatpush1.msra.mxu0 0.0
      %1644 = vmatprep.subr.mxu0 0.0
      %1645 = vmatpush1.msra.mxu0 0.0
      %1646 = vmatprep.subr.mxu0 0.0
      %1647 = vmatpush1.msra.mxu0 0.0
      %1648 = vmatprep.subr.mxu0 0.0
      %1649 = vmatpush1.msra.mxu0 0.0
      %1650 = vmatprep.subr.mxu0 0.0
      %1651 = vmatpush1.msra.mxu0 0.0
      %1652 = vmatprep.subr.mxu0 0.0
      %1653 = vmatpush1.msra.mxu0 0.0
      %1654 = vmatprep.subr.mxu0 0.0
      %1655 = vmatpush1.msra.mxu0 0.0
      %1656 = vmatprep.subr.mxu0 0.0
      %1657 = vmatpush1.msra.mxu0 0.0
      %1658 = vmatprep.subr.mxu0 0.0
      %1659 = vmatpush1.msra.mxu0 0.0
      %1660 = vmatprep.subr.mxu0 0.0
      %1661 = vmatpush1.msra.mxu0 0.0
      %1662 = vmatprep.subr.mxu0 0.0
      %1663 = vmatpush1.msra.mxu0 0.0
      %1664 = vmatprep.mubr.f32.mxu0 0.0
      %1665 = vmatmul.mubr.f32.gmra.mrb[0].mxu0 %v1598
      %v1666 = vpop.f32.mrb[0].mxu0
      %v1667 = vadd.f32 0.0, %v1666
      %v1668 = vpop.f32.mrb[0].mxu0
      %1669 = vdwg.mxu0
      %v1670 = vmax.f32 %v1667, 0.0
      %v1687 = vlaneseq
      %v1688 = vshrl.u32 %v1687, 7
      %v1689 = vsub.s32 %v768, %v1688
      %v1690 = vrot.slane %v1446, %v1689
      %v1691 = vlaneseq
      %v1692 = vshrl.u32 %v1691, 7
      %v1693 = vsub.s32 %v773, %v1692
      %v1694 = vrot.slane %v1449, %v1693
      %v1695 = vsel %vm778, %v1694, %v1690
      %v1696 = vlaneseq
      %v1697 = vshrl.u32 %v1696, 7
      %v1698 = vsub.s32 %v780, %v1697
      %v1699 = vrot.slane %v1452, %v1698
      %v1700 = vsel %vm785, %v1699, %v1695
      %v1701 = vlaneseq
      %v1702 = vshrl.u32 %v1701, 7
      %v1703 = vsub.s32 %v787, %v1702
      %v1704 = vrot.slane %v1455, %v1703
      %v1705 = vsel %vm792, %v1704, %v1700
      %v1706 = vlaneseq
      %v1707 = vshrl.u32 %v1706, 7
      %v1708 = vsub.s32 %v794, %v1707
      %v1709 = vrot.slane %v1458, %v1708
      %v1710 = vsel %vm799, %v1709, %v1705
      %v1711 = vlaneseq
      %v1712 = vshrl.u32 %v1711, 7
      %v1713 = vsub.s32 %v801, %v1712
      %v1714 = vrot.slane %v1461, %v1713
      %v1715 = vsel %vm806, %v1714, %v1710
      %v1716 = vlaneseq
      %v1717 = vshrl.u32 %v1716, 7
      %v1718 = vsub.s32 %v808, %v1717
      %v1719 = vrot.slane %v1464, %v1718
      %v1720 = vsel %vm813, %v1719, %v1715
      %v1721 = vlaneseq
      %v1722 = vshrl.u32 %v1721, 7
      %v1723 = vsub.s32 %v815, %v1722
      %v1724 = vrot.slane %v1467, %v1723
      %v1725 = vsel %vm820, %v1724, %v1720
      %v1726 = vlaneseq
      %v1727 = vshrl.u32 %v1726, 7
      %v1728 = vsub.s32 %v768, %v1727
      %v1729 = vrot.slane %v1470, %v1728
      %v1730 = vlaneseq
      %v1731 = vshrl.u32 %v1730, 7
      %v1732 = vsub.s32 %v773, %v1731
      %v1733 = vrot.slane %v1473, %v1732
      %v1734 = vsel %vm778, %v1733, %v1729
      %v1735 = vlaneseq
      %v1736 = vshrl.u32 %v1735, 7
      %v1737 = vsub.s32 %v780, %v1736
      %v1738 = vrot.slane %v1476, %v1737
      %v1739 = vsel %vm785, %v1738, %v1734
      %v1740 = vlaneseq
      %v1741 = vshrl.u32 %v1740, 7
      %v1742 = vsub.s32 %v787, %v1741
      %v1743 = vrot.slane %v1479, %v1742
      %v1744 = vsel %vm792, %v1743, %v1739
      %v1745 = vlaneseq
      %v1746 = vshrl.u32 %v1745, 7
      %v1747 = vsub.s32 %v794, %v1746
      %v1748 = vrot.slane %v1482, %v1747
      %v1749 = vsel %vm799, %v1748, %v1744
      %v1750 = vlaneseq
      %v1751 = vshrl.u32 %v1750, 7
      %v1752 = vsub.s32 %v801, %v1751
      %v1753 = vrot.slane %v1485, %v1752
      %v1754 = vsel %vm806, %v1753, %v1749
      %v1755 = vlaneseq
      %v1756 = vshrl.u32 %v1755, 7
      %v1757 = vsub.s32 %v808, %v1756
      %v1758 = vrot.slane %v1488, %v1757
      %v1759 = vsel %vm813, %v1758, %v1754
      %v1760 = vlaneseq
      %v1761 = vshrl.u32 %v1760, 7
      %v1762 = vsub.s32 %v815, %v1761
      %v1763 = vrot.slane %v1491, %v1762
      %v1764 = vsel %vm820, %v1763, %v1759
      %v1765 = vsel %vm861, %v1764, %v1725
      %v1766 = vsel %vm300, %v1765, 0
      %1768 = vmatprep.subr.mxu0 0.0
      %1769 = vmatpush1.msra.mxu0 %v1493
      %1770 = vmatprep.subr.mxu0 0.0
      %1771 = vmatpush1.msra.mxu0 %v1494
      %1772 = vmatprep.subr.mxu0 0.0
      %1773 = vmatpush1.msra.mxu0 %v1495
      %1774 = vmatprep.subr.mxu0 0.0
      %1775 = vmatpush1.msra.mxu0 %v1496
      %1776 = vmatprep.subr.mxu0 0.0
      %1777 = vmatpush1.msra.mxu0 %v1497
      %1778 = vmatprep.subr.mxu0 0.0
      %1779 = vmatpush1.msra.mxu0 %v1498
      %1780 = vmatprep.subr.mxu0 0.0
      %1781 = vmatpush1.msra.mxu0 %v1499
      %1782 = vmatprep.subr.mxu0 0.0
      %1783 = vmatpush1.msra.mxu0 %v1500
      %1784 = vmatprep.subr.mxu0 0.0
      %1785 = vmatpush1.msra.mxu0 0.0
      %1786 = vmatprep.subr.mxu0 0.0
      %1787 = vmatpush1.msra.mxu0 0.0
      %1788 = vmatprep.subr.mxu0 0.0
      %1789 = vmatpush1.msra.mxu0 0.0
      %1790 = vmatprep.subr.mxu0 0.0
      %1791 = vmatpush1.msra.mxu0 0.0
      %1792 = vmatprep.subr.mxu0 0.0
      %1793 = vmatpush1.msra.mxu0 0.0
      %1794 = vmatprep.subr.mxu0 0.0
      %1795 = vmatpush1.msra.mxu0 0.0
      %1796 = vmatprep.subr.mxu0 0.0
      %1797 = vmatpush1.msra.mxu0 0.0
      %1798 = vmatprep.subr.mxu0 0.0
      %1799 = vmatpush1.msra.mxu0 0.0
      %1800 = vmatprep.subr.mxu0 0.0
      %1801 = vmatpush1.msra.mxu0 0.0
      %1802 = vmatprep.subr.mxu0 0.0
      %1803 = vmatpush1.msra.mxu0 0.0
      %1804 = vmatprep.subr.mxu0 0.0
      %1805 = vmatpush1.msra.mxu0 0.0
      %1806 = vmatprep.subr.mxu0 0.0
      %1807 = vmatpush1.msra.mxu0 0.0
      %1808 = vmatprep.subr.mxu0 0.0
      %1809 = vmatpush1.msra.mxu0 0.0
      %1810 = vmatprep.subr.mxu0 0.0
      %1811 = vmatpush1.msra.mxu0 0.0
      %1812 = vmatprep.subr.mxu0 0.0
      %1813 = vmatpush1.msra.mxu0 0.0
      %1814 = vmatprep.subr.mxu0 0.0
      %1815 = vmatpush1.msra.mxu0 0.0
      %1816 = vmatprep.subr.mxu0 0.0
      %1817 = vmatpush1.msra.mxu0 0.0
      %1818 = vmatprep.subr.mxu0 0.0
      %1819 = vmatpush1.msra.mxu0 0.0
      %1820 = vmatprep.subr.mxu0 0.0
      %1821 = vmatpush1.msra.mxu0 0.0
      %1822 = vmatprep.subr.mxu0 0.0
      %1823 = vmatpush1.msra.mxu0 0.0
      %1824 = vmatprep.subr.mxu0 0.0
      %1825 = vmatpush1.msra.mxu0 0.0
      %1826 = vmatprep.subr.mxu0 0.0
      %1827 = vmatpush1.msra.mxu0 0.0
      %1828 = vmatprep.subr.mxu0 0.0
      %1829 = vmatpush1.msra.mxu0 0.0
      %1830 = vmatprep.subr.mxu0 0.0
      %1831 = vmatpush1.msra.mxu0 0.0
      %1832 = vmatprep.mubr.f32.mxu0 0.0
      %1833 = vmatmul.mubr.f32.gmra.mrb[0].mxu0 %v1766
      %v1834 = vpop.f32.mrb[0].mxu0
      %v1835 = vadd.f32 0.0, %v1834
      %v1836 = vpop.f32.mrb[0].mxu0
      %1837 = vdwg.mxu0
      %v1838 = vmax.f32 %v1835, 0.0
      %v1840 = vsel %vm1104, %v1838, 0
      %v1843 = vsel %vm1108, %v1502, 0
      %1845 = vmatprep.subr.mxu0 0.0
      %1846 = vmatpush1.msra.mxu0 %v1843
      %1847 = vmatprep.subr.mxu0 0.0
      %1848 = vmatpush1.msra.mxu0 0.0
      %1849 = vmatprep.subr.mxu0 0.0
      %1850 = vmatpush1.msra.mxu0 0.0
      %1851 = vmatprep.subr.mxu0 0.0
      %1852 = vmatpush1.msra.mxu0 0.0
      %1853 = vmatprep.subr.mxu0 0.0
      %1854 = vmatpush1.msra.mxu0 0.0
      %1855 = vmatprep.subr.mxu0 0.0
      %1856 = vmatpush1.msra.mxu0 0.0
      %1857 = vmatprep.subr.mxu0 0.0
      %1858 = vmatpush1.msra.mxu0 0.0
      %1859 = vmatprep.subr.mxu0 0.0
      %1860 = vmatpush1.msra.mxu0 0.0
      %1861 = vmatprep.subr.mxu0 0.0
      %1862 = vmatpush1.msra.mxu0 0.0
      %1863 = vmatprep.subr.mxu0 0.0
      %1864 = vmatpush1.msra.mxu0 0.0
      %1865 = vmatprep.subr.mxu0 0.0
      %1866 = vmatpush1.msra.mxu0 0.0
      %1867 = vmatprep.subr.mxu0 0.0
      %1868 = vmatpush1.msra.mxu0 0.0
      %1869 = vmatprep.subr.mxu0 0.0
      %1870 = vmatpush1.msra.mxu0 0.0
      %1871 = vmatprep.subr.mxu0 0.0
      %1872 = vmatpush1.msra.mxu0 0.0
      %1873 = vmatprep.subr.mxu0 0.0
      %1874 = vmatpush1.msra.mxu0 0.0
      %1875 = vmatprep.subr.mxu0 0.0
      %1876 = vmatpush1.msra.mxu0 0.0
      %1877 = vmatprep.subr.mxu0 0.0
      %1878 = vmatpush1.msra.mxu0 0.0
      %1879 = vmatprep.subr.mxu0 0.0
      %1880 = vmatpush1.msra.mxu0 0.0
      %1881 = vmatprep.subr.mxu0 0.0
      %1882 = vmatpush1.msra.mxu0 0.0
      %1883 = vmatprep.subr.mxu0 0.0
      %1884 = vmatpush1.msra.mxu0 0.0
      %1885 = vmatprep.subr.mxu0 0.0
      %1886 = vmatpush1.msra.mxu0 0.0
      %1887 = vmatprep.subr.mxu0 0.0
      %1888 = vmatpush1.msra.mxu0 0.0
      %1889 = vmatprep.subr.mxu0 0.0
      %1890 = vmatpush1.msra.mxu0 0.0
      %1891 = vmatprep.subr.mxu0 0.0
      %1892 = vmatpush1.msra.mxu0 0.0
      %1893 = vmatprep.subr.mxu0 0.0
      %1894 = vmatpush1.msra.mxu0 0.0
      %1895 = vmatprep.subr.mxu0 0.0
      %1896 = vmatpush1.msra.mxu0 0.0
      %1897 = vmatprep.subr.mxu0 0.0
      %1898 = vmatpush1.msra.mxu0 0.0
      %1899 = vmatprep.subr.mxu0 0.0
      %1900 = vmatpush1.msra.mxu0 0.0
      %1901 = vmatprep.subr.mxu0 0.0
      %1902 = vmatpush1.msra.mxu0 0.0
      %1903 = vmatprep.subr.mxu0 0.0
      %1904 = vmatpush1.msra.mxu0 0.0
      %1905 = vmatprep.subr.mxu0 0.0
      %1906 = vmatpush1.msra.mxu0 0.0
      %1907 = vmatprep.subr.mxu0 0.0
      %1908 = vmatpush1.msra.mxu0 0.0
      %1909 = vmatprep.mubr.f32.mxu0 0.0
      %1910 = vmatmul.mubr.f32.gmra.mrb[0].mxu0 %v1840
      %v1911 = vpop.f32.mrb[0].mxu0
      %v1912 = vadd.f32 0.0, %v1911
      %v1913 = vpop.f32.mrb[0].mxu0
      %1914 = vdwg.mxu0
      %v1916 = vsel %vm1104, %v1670, 0
      %1918 = vmatprep.subr.mxu0 0.0
      %1919 = vmatpush1.msra.mxu0 %v1843
      %1920 = vmatprep.subr.mxu0 0.0
      %1921 = vmatpush1.msra.mxu0 0.0
      %1922 = vmatprep.subr.mxu0 0.0
      %1923 = vmatpush1.msra.mxu0 0.0
      %1924 = vmatprep.subr.mxu0 0.0
      %1925 = vmatpush1.msra.mxu0 0.0
      %1926 = vmatprep.subr.mxu0 0.0
      %1927 = vmatpush1.msra.mxu0 0.0
      %1928 = vmatprep.subr.mxu0 0.0
      %1929 = vmatpush1.msra.mxu0 0.0
      %1930 = vmatprep.subr.mxu0 0.0
      %1931 = vmatpush1.msra.mxu0 0.0
      %1932 = vmatprep.subr.mxu0 0.0
      %1933 = vmatpush1.msra.mxu0 0.0
      %1934 = vmatprep.subr.mxu0 0.0
      %1935 = vmatpush1.msra.mxu0 0.0
      %1936 = vmatprep.subr.mxu0 0.0
      %1937 = vmatpush1.msra.mxu0 0.0
      %1938 = vmatprep.subr.mxu0 0.0
      %1939 = vmatpush1.msra.mxu0 0.0
      %1940 = vmatprep.subr.mxu0 0.0
      %1941 = vmatpush1.msra.mxu0 0.0
      %1942 = vmatprep.subr.mxu0 0.0
      %1943 = vmatpush1.msra.mxu0 0.0
      %1944 = vmatprep.subr.mxu0 0.0
      %1945 = vmatpush1.msra.mxu0 0.0
      %1946 = vmatprep.subr.mxu0 0.0
      %1947 = vmatpush1.msra.mxu0 0.0
      %1948 = vmatprep.subr.mxu0 0.0
      %1949 = vmatpush1.msra.mxu0 0.0
      %1950 = vmatprep.subr.mxu0 0.0
      %1951 = vmatpush1.msra.mxu0 0.0
      %1952 = vmatprep.subr.mxu0 0.0
      %1953 = vmatpush1.msra.mxu0 0.0
      %1954 = vmatprep.subr.mxu0 0.0
      %1955 = vmatpush1.msra.mxu0 0.0
      %1956 = vmatprep.subr.mxu0 0.0
      %1957 = vmatpush1.msra.mxu0 0.0
      %1958 = vmatprep.subr.mxu0 0.0
      %1959 = vmatpush1.msra.mxu0 0.0
      %1960 = vmatprep.subr.mxu0 0.0
      %1961 = vmatpush1.msra.mxu0 0.0
      %1962 = vmatprep.subr.mxu0 0.0
      %1963 = vmatpush1.msra.mxu0 0.0
      %1964 = vmatprep.subr.mxu0 0.0
      %1965 = vmatpush1.msra.mxu0 0.0
      %1966 = vmatprep.subr.mxu0 0.0
      %1967 = vmatpush1.msra.mxu0 0.0
      %1968 = vmatprep.subr.mxu0 0.0
      %1969 = vmatpush1.msra.mxu0 0.0
      %1970 = vmatprep.subr.mxu0 0.0
      %1971 = vmatpush1.msra.mxu0 0.0
      %1972 = vmatprep.subr.mxu0 0.0
      %1973 = vmatpush1.msra.mxu0 0.0
      %1974 = vmatprep.subr.mxu0 0.0
      %1975 = vmatpush1.msra.mxu0 0.0
      %1976 = vmatprep.subr.mxu0 0.0
      %1977 = vmatpush1.msra.mxu0 0.0
      %1978 = vmatprep.subr.mxu0 0.0
      %1979 = vmatpush1.msra.mxu0 0.0
      %1980 = vmatprep.subr.mxu0 0.0
      %1981 = vmatpush1.msra.mxu0 0.0
      %1982 = vmatprep.mubr.f32.mxu0 0.0
      %1983 = vmatmul.mubr.f32.gmra.mrb[0].mxu0 %v1916
      %v1984 = vpop.f32.mrb[0].mxu0
      %v1985 = vadd.f32 %v1912, %v1984
      %v1986 = vpop.f32.mrb[0].mxu0
      %1987 = vdwg.mxu0
      %v1988 = vxor.u32 %v1985, 2147483648
      %v1989 = vmul.f32 %v1988, 1.442695
      %v1990 = vpow.pop %v1989
      %v1991 = vadd.f32 %v1990, 1.0
      %v1992 = vrcp.pop %v1991
      %v1993 = vmul.f32 1.0, %v1992
      %v1994 = vlaneseq
      %v1995 = vshrl.u32 %v1994, 7
      %v1996 = vsub.s32 0, %v1995
      %v1997 = vrot.slane %v1993, %v1996
      %1999 = vbcast.lane.b32.xlu0 %v1997, 256
      %v2000 = vpop.permute.xlu0 %1999
      %s2002 = sor.u32 256, 8
      %2003 = vbcast.lane.b32.xlu0 %v1997, %s2002
      %v2004 = vpop.permute.xlu0 %2003
      %s2006 = sor.u32 256, 16
      %2007 = vbcast.lane.b32.xlu0 %v1997, %s2006
      %v2008 = vpop.permute.xlu0 %2007
      %s2010 = sor.u32 256, 24
      %2011 = vbcast.lane.b32.xlu0 %v1997, %s2010
      %v2012 = vpop.permute.xlu0 %2011
      %s2014 = sor.u32 256, 32
      %2015 = vbcast.lane.b32.xlu0 %v1997, %s2014
      %v2016 = vpop.permute.xlu0 %2015
      %s2018 = sor.u32 256, 40
      %2019 = vbcast.lane.b32.xlu0 %v1997, %s2018
      %v2020 = vpop.permute.xlu0 %2019
      %s2022 = sor.u32 256, 48
      %2023 = vbcast.lane.b32.xlu0 %v1997, %s2022
      %v2024 = vpop.permute.xlu0 %2023
      %s2026 = sor.u32 256, 56
      %2027 = vbcast.lane.b32.xlu0 %v1997, %s2026
      %v2028 = vpop.permute.xlu0 %2027
      %v2029 = vlaneseq
      %v2030 = vshrl.u32 %v2029, 7
      %v2031 = vsub.s32 1, %v2030
      %v2032 = vrot.slane %v1993, %v2031
      %2034 = vbcast.lane.b32.xlu0 %v2032, 256
      %v2035 = vpop.permute.xlu0 %2034
      %s2037 = sor.u32 256, 8
      %2038 = vbcast.lane.b32.xlu0 %v2032, %s2037
      %v2039 = vpop.permute.xlu0 %2038
      %s2041 = sor.u32 256, 16
      %2042 = vbcast.lane.b32.xlu0 %v2032, %s2041
      %v2043 = vpop.permute.xlu0 %2042
      %s2045 = sor.u32 256, 24
      %2046 = vbcast.lane.b32.xlu0 %v2032, %s2045
      %v2047 = vpop.permute.xlu0 %2046
      %s2049 = sor.u32 256, 32
      %2050 = vbcast.lane.b32.xlu0 %v2032, %s2049
      %v2051 = vpop.permute.xlu0 %2050
      %s2053 = sor.u32 256, 40
      %2054 = vbcast.lane.b32.xlu0 %v2032, %s2053
      %v2055 = vpop.permute.xlu0 %2054
      %s2057 = sor.u32 256, 48
      %2058 = vbcast.lane.b32.xlu0 %v2032, %s2057
      %v2059 = vpop.permute.xlu0 %2058
      %s2061 = sor.u32 256, 56
      %2062 = vbcast.lane.b32.xlu0 %v2032, %s2061
      %v2063 = vpop.permute.xlu0 %2062
      %2064 = vst.msk [vmem:[#allocation4] sm:$0xff] %vm300, %v2000
      %2065 = vst.msk [vmem:[#allocation4 + $0x8] sm:$0xff] %vm300, %v2004
      %2066 = vst.msk [vmem:[#allocation4 + $0x10] sm:$0xff] %vm300, %v2008
      %2067 = vst.msk [vmem:[#allocation4 + $0x18] sm:$0xff] %vm300, %v2012
      %2068 = vst.msk [vmem:[#allocation4 + $0x20] sm:$0xff] %vm300, %v2016
      %2069 = vst.msk [vmem:[#allocation4 + $0x28] sm:$0xff] %vm300, %v2020
      %2070 = vst.msk [vmem:[#allocation4 + $0x30] sm:$0xff] %vm300, %v2024
      %2071 = vst.msk [vmem:[#allocation4 + $0x38] sm:$0xff] %vm300, %v2028
      %2072 = vst.msk [vmem:[#allocation4 + $0x40] sm:$0xff] %vm300, %v2035
      %2073 = vst.msk [vmem:[#allocation4 + $0x48] sm:$0xff] %vm300, %v2039
      %2074 = vst.msk [vmem:[#allocation4 + $0x50] sm:$0xff] %vm300, %v2043
      %2075 = vst.msk [vmem:[#allocation4 + $0x58] sm:$0xff] %vm300, %v2047
      %2076 = vst.msk [vmem:[#allocation4 + $0x60] sm:$0xff] %vm300, %v2051
      %2077 = vst.msk [vmem:[#allocation4 + $0x68] sm:$0xff] %vm300, %v2055
      %2078 = vst.msk [vmem:[#allocation4 + $0x70] sm:$0xff] %vm300, %v2059
      %2079 = vst.msk [vmem:[#allocation4 + $0x78] sm:$0xff] %vm300, %v2063
      %v2080 = vld [vmem:[#allocation4] sm:$0xff]
      %v2081 = vld [vmem:[#allocation4 + $0x8] sm:$0xff]
      %v2082 = vld [vmem:[#allocation4 + $0x10] sm:$0xff]
      %v2083 = vld [vmem:[#allocation4 + $0x18] sm:$0xff]
      %v2084 = vld [vmem:[%s262] sm:$0xff]
      %v2085 = vld [vmem:[%s262 + $0x8] sm:$0xff]
      %v2086 = vld [vmem:[%s262 + $0x10] sm:$0xff]
      %v2087 = vld [vmem:[%s262 + $0x18] sm:$0xff]
      %v2088 = vmul.f32 %v2084, %v2080
      %v2089 = vmul.f32 %v2085, %v2081
      %v2090 = vmul.f32 %v2086, %v2082
      %v2091 = vmul.f32 %v2087, %v2083
      %2092 = vst.msk [vmem:[%s294] sm:$0xff] %vm300, %v2088
      %2093 = vst.msk [vmem:[%s294 + $0x8] sm:$0xff] %vm300, %v2089
      %2094 = vst.msk [vmem:[%s294 + $0x10] sm:$0xff] %vm300, %v2090
      %2095 = vst.msk [vmem:[%s294 + $0x18] sm:$0xff] %vm300, %v2091
      %v2096 = vld [vmem:[#allocation4 + $0x20] sm:$0xff]
      %v2097 = vld [vmem:[#allocation4 + $0x28] sm:$0xff]
      %v2098 = vld [vmem:[#allocation4 + $0x30] sm:$0xff]
      %v2099 = vld [vmem:[#allocation4 + $0x38] sm:$0xff]
      %v2100 = vld [vmem:[%s262 + $0x20] sm:$0xff]
      %v2101 = vld [vmem:[%s262 + $0x28] sm:$0xff]
      %v2102 = vld [vmem:[%s262 + $0x30] sm:$0xff]
      %v2103 = vld [vmem:[%s262 + $0x38] sm:$0xff]
      %v2104 = vmul.f32 %v2100, %v2096
      %v2105 = vmul.f32 %v2101, %v2097
      %v2106 = vmul.f32 %v2102, %v2098
      %v2107 = vmul.f32 %v2103, %v2099
      %2108 = vst.msk [vmem:[%s294 + $0x20] sm:$0xff] %vm300, %v2104
      %2109 = vst.msk [vmem:[%s294 + $0x28] sm:$0xff] %vm300, %v2105
      %2110 = vst.msk [vmem:[%s294 + $0x30] sm:$0xff] %vm300, %v2106
      %2111 = vst.msk [vmem:[%s294 + $0x38] sm:$0xff] %vm300, %v2107
      %s2112 = scalar_lea.vmem [#allocation4], 64
      %v2113 = vld [vmem:[%s2112] sm:$0xff]
      %v2114 = vld [vmem:[%s2112 + $0x8] sm:$0xff]
      %v2115 = vld [vmem:[%s2112 + $0x10] sm:$0xff]
      %v2116 = vld [vmem:[%s2112 + $0x18] sm:$0xff]
      %v2117 = vld [vmem:[%s431] sm:$0xff]
      %v2118 = vld [vmem:[%s431 + $0x8] sm:$0xff]
      %v2119 = vld [vmem:[%s431 + $0x10] sm:$0xff]
      %v2120 = vld [vmem:[%s431 + $0x18] sm:$0xff]
      %v2121 = vmul.f32 %v2117, %v2113
      %v2122 = vmul.f32 %v2118, %v2114
      %v2123 = vmul.f32 %v2119, %v2115
      %v2124 = vmul.f32 %v2120, %v2116
      %s2125 = scalar_lea.vmem %s294, 64
      %2126 = vst.msk [vmem:[%s2125] sm:$0xff] %vm300, %v2121
      %2127 = vst.msk [vmem:[%s2125 + $0x8] sm:$0xff] %vm300, %v2122
      %2128 = vst.msk [vmem:[%s2125 + $0x10] sm:$0xff] %vm300, %v2123
      %2129 = vst.msk [vmem:[%s2125 + $0x18] sm:$0xff] %vm300, %v2124
      %v2130 = vld [vmem:[%s2112 + $0x20] sm:$0xff]
      %v2131 = vld [vmem:[%s2112 + $0x28] sm:$0xff]
      %v2132 = vld [vmem:[%s2112 + $0x30] sm:$0xff]
      %v2133 = vld [vmem:[%s2112 + $0x38] sm:$0xff]
      %v2134 = vld [vmem:[%s431 + $0x20] sm:$0xff]
      %v2135 = vld [vmem:[%s431 + $0x28] sm:$0xff]
      %v2136 = vld [vmem:[%s431 + $0x30] sm:$0xff]
      %v2137 = vld [vmem:[%s431 + $0x38] sm:$0xff]
      %v2138 = vmul.f32 %v2134, %v2130
      %v2139 = vmul.f32 %v2135, %v2131
      %v2140 = vmul.f32 %v2136, %v2132
      %v2141 = vmul.f32 %v2137, %v2133
      %2142 = vst.msk [vmem:[%s2125 + $0x20] sm:$0xff] %vm300, %v2138
      %2143 = vst.msk [vmem:[%s2125 + $0x28] sm:$0xff] %vm300, %v2139
      %2144 = vst.msk [vmem:[%s2125 + $0x30] sm:$0xff] %vm300, %v2140
      %2145 = vst.msk [vmem:[%s2125 + $0x38] sm:$0xff] %vm300, %v2141
      %v2146 = vld [vmem:[%s1331] sm:$0xff]
      %v2147 = vld [vmem:[%s1331 + $0x8] sm:$0xff]
      %v2148 = vld [vmem:[%s1331 + $0x10] sm:$0xff]
      %v2149 = vld [vmem:[%s1331 + $0x18] sm:$0xff]
      %v2150 = vld [vmem:[%s490] sm:$0xff]
      %v2151 = vld [vmem:[%s490 + $0x8] sm:$0xff]
      %v2152 = vld [vmem:[%s490 + $0x10] sm:$0xff]
      %v2153 = vld [vmem:[%s490 + $0x18] sm:$0xff]
      %v2154 = vmul.f32 %v2150, %v2146
      %v2155 = vmul.f32 %v2151, %v2147
      %v2156 = vmul.f32 %v2152, %v2148
      %v2157 = vmul.f32 %v2153, %v2149
      %s2158 = scalar_lea.vmem %s294, 128
      %2159 = vst.msk [vmem:[%s2158] sm:$0xff] %vm300, %v2154
      %2160 = vst.msk [vmem:[%s2158 + $0x8] sm:$0xff] %vm300, %v2155
      %2161 = vst.msk [vmem:[%s2158 + $0x10] sm:$0xff] %vm300, %v2156
      %2162 = vst.msk [vmem:[%s2158 + $0x18] sm:$0xff] %vm300, %v2157
      %v2163 = vld [vmem:[%s1331 + $0x20] sm:$0xff]
      %v2164 = vld [vmem:[%s1331 + $0x28] sm:$0xff]
      %v2165 = vld [vmem:[%s1331 + $0x30] sm:$0xff]
      %v2166 = vld [vmem:[%s1331 + $0x38] sm:$0xff]
      %v2167 = vld [vmem:[%s490 + $0x20] sm:$0xff]
      %v2168 = vld [vmem:[%s490 + $0x28] sm:$0xff]
      %v2169 = vld [vmem:[%s490 + $0x30] sm:$0xff]
      %v2170 = vld [vmem:[%s490 + $0x38] sm:$0xff]
      %v2171 = vmul.f32 %v2167, %v2163
      %v2172 = vmul.f32 %v2168, %v2164
      %v2173 = vmul.f32 %v2169, %v2165
      %v2174 = vmul.f32 %v2170, %v2166
      %2175 = vst.msk [vmem:[%s2158 + $0x20] sm:$0xff] %vm300, %v2171
      %2176 = vst.msk [vmem:[%s2158 + $0x28] sm:$0xff] %vm300, %v2172
      %2177 = vst.msk [vmem:[%s2158 + $0x30] sm:$0xff] %vm300, %v2173
      %2178 = vst.msk [vmem:[%s2158 + $0x38] sm:$0xff] %vm300, %v2174
      %s2179 = scalar_lea.vmem [#allocation4], 192
      %v2180 = vld [vmem:[%s2179] sm:$0xff]
      %v2181 = vld [vmem:[%s2179 + $0x8] sm:$0xff]
      %v2182 = vld [vmem:[%s2179 + $0x10] sm:$0xff]
      %v2183 = vld [vmem:[%s2179 + $0x18] sm:$0xff]
      %v2184 = vld [vmem:[%s549] sm:$0xff]
      %v2185 = vld [vmem:[%s549 + $0x8] sm:$0xff]
      %v2186 = vld [vmem:[%s549 + $0x10] sm:$0xff]
      %v2187 = vld [vmem:[%s549 + $0x18] sm:$0xff]
      %v2188 = vmul.f32 %v2184, %v2180
      %v2189 = vmul.f32 %v2185, %v2181
      %v2190 = vmul.f32 %v2186, %v2182
      %v2191 = vmul.f32 %v2187, %v2183
      %s2192 = scalar_lea.vmem %s294, 192
      %2193 = vst.msk [vmem:[%s2192] sm:$0xff] %vm300, %v2188
      %2194 = vst.msk [vmem:[%s2192 + $0x8] sm:$0xff] %vm300, %v2189
      %2195 = vst.msk [vmem:[%s2192 + $0x10] sm:$0xff] %vm300, %v2190
      %2196 = vst.msk [vmem:[%s2192 + $0x18] sm:$0xff] %vm300, %v2191
      %v2197 = vld [vmem:[%s2179 + $0x20] sm:$0xff]
      %v2198 = vld [vmem:[%s2179 + $0x28] sm:$0xff]
      %v2199 = vld [vmem:[%s2179 + $0x30] sm:$0xff]
      %v2200 = vld [vmem:[%s2179 + $0x38] sm:$0xff]
      %v2201 = vld [vmem:[%s549 + $0x20] sm:$0xff]
      %v2202 = vld [vmem:[%s549 + $0x28] sm:$0xff]
      %v2203 = vld [vmem:[%s549 + $0x30] sm:$0xff]
      %v2204 = vld [vmem:[%s549 + $0x38] sm:$0xff]
      %v2205 = vmul.f32 %v2201, %v2197
      %v2206 = vmul.f32 %v2202, %v2198
      %v2207 = vmul.f32 %v2203, %v2199
      %v2208 = vmul.f32 %v2204, %v2200
      %2209 = vst.msk [vmem:[%s2192 + $0x20] sm:$0xff] %vm300, %v2205
      %2210 = vst.msk [vmem:[%s2192 + $0x28] sm:$0xff] %vm300, %v2206
      %2211 = vst.msk [vmem:[%s2192 + $0x30] sm:$0xff] %vm300, %v2207
      %2212 = vst.msk [vmem:[%s2192 + $0x38] sm:$0xff] %vm300, %v2208
      %s2213 = ssub.s32 %s21, 1
      %p2214 = scmp.gt.s32.totalorder %s2213, 0
      %s2215 = scalar_select %p2214, %s2213, 0
      %s2216 = smul.u32 2, %s19
      %s2217 = smul.u32 2, %s20
      %p2218 = scmp.lt.s32.totalorder %s2216, 7
      %s2219 = scalar_select %p2218, %s2216, 7
      %p2220 = scmp.lt.s32.totalorder %s2217, 1
      %s2221 = scalar_select %p2220, %s2217, 1
      %p2222 = scmp.lt.s32.totalorder %s2215, 0
      %s2223 = scalar_select %p2222, %s2215, 0
      %s2224 = smul.addr %s2221, 8
      %s2225 = sadd.s32 %s2223, %s2224
      %s2226 = smul.addr %s2219, 16
      %s2227 = sadd.s32 %s2225, %s2226
      %s2228 = smul.addr %s2227, 8
      %s2229 = scalar_lea.vmem %s3, %s2228
      // Predicated region
      $region33: #{fused_cbam_pairs.1} parent=31 // pred_check
        %p2230 = pneg %p141
      $region34: #{fused_cbam_pairs.1} parent=31 // pred_check_branch
        %2232 = sbr.rel (%p2230) target = $region36
      $region35: #{fused_cbam_pairs.1} parent=31 // pred_region
        %s2233 = ssub.s32 %s21, 1
        %p2234 = scmp.gt.s32.totalorder %s2233, 0
        %s2235 = scalar_select %p2234, %s2233, 0
        %s2236 = smul.u32 2, %s19
        %s2237 = smul.u32 2, %s20
      $region36: #{fused_cbam_pairs.1} parent=31 // pred_fallthru
        _
    $region32: #{fused_cbam_pairs.1} parent=5 // pred_fallthru
      _
    %p2238 = scmp.le.s32.totalorder 2, %s9
    // Predicated region
    $region37: #{fused_cbam_pairs.1} parent=5 // pred_check
      %p2239 = pneg %p2238
    $region38: #{fused_cbam_pairs.1} parent=5 // pred_check_branch
      %2241 = sbr.rel (%p2239) target = $region40
    $region39: #{fused_cbam_pairs.1} parent=5 // pred_region
      %s2242 = ssub.s32 %s9, 2
      // Predicated region
      $region41: #{fused_cbam_pairs.1} parent=39 // pred_check
        %p2243 = pneg %p147
      $region42: #{fused_cbam_pairs.1} parent=39 // pred_check_branch
        %2245 = sbr.rel (%p2243) target = $region44
      $region43: #{fused_cbam_pairs.1} parent=39 // pred_region
        %s2246 = ssub.s32 %s24, 1
        %p2247 = scmp.gt.s32.totalorder %s2246, 0
        %s2248 = scalar_select %p2247, %s2246, 0
        %s2249 = smul.u32 2, %s22
        %s2250 = smul.u32 2, %s23
        %p2251 = scmp.lt.s32.totalorder %s2249, 7
        %s2252 = scalar_select %p2251, %s2249, 7
        %p2253 = scmp.lt.s32.totalorder %s2250, 1
        %s2254 = scalar_select %p2253, %s2250, 1
        %p2255 = scmp.lt.s32.totalorder %s2248, 0
        %s2256 = scalar_select %p2255, %s2248, 0
        %s2257 = smul.addr %s2254, 8
        %s2258 = sadd.s32 %s2256, %s2257
        %s2259 = smul.addr %s2252, 16
        %s2260 = sadd.s32 %s2258, %s2259
        %s2261 = smul.addr %s2260, 8
        %s2262 = scalar_lea.vmem %s3, %s2261
      $region44: #{fused_cbam_pairs.1} parent=39 // pred_fallthru
        _
    $region40: #{fused_cbam_pairs.1} parent=5 // pred_fallthru
      _
  $region6: #{fused_cbam_pairs.1} parent=0 // loop_footer
    %s13 = sadd.s32 1, %s9
  $region7: #{fused_cbam_pairs.1} parent=0 // loop_footer_branch
    %8 = sbr.rel target = $region3
  $region8: #{fused_cbam_pairs.1} parent=0 // loop_exit
    _

</llo_original>
